<compile_context>
chip_gen: v6e
topology: v6e:2x2x1
jax: 0.10.0
libtpu: 0.0.40
codegen_flags: <defaults>
</compile_context>

<pallas_src>
import functools

import jax
import jax.numpy as jnp
from jax.experimental import pallas as pl
from jax.experimental.pallas import tpu as pltpu

_NEG_INF = -1e30


def cross_attention_kernel(x_ref, ctx_ref, wq_ref, wk_ref, wv_ref, wo_ref,
                           bo_ref, o_ref, kh_ref, vh_ref, *,
                           n_heads, d_head, m_valid):
    """One (batch, query-tile) grid step.

    x_ref   : (1, bn, d_model)        query tile
    ctx_ref : (1, Mp, d_cond)         lane-padded context (resident per batch)
    wq_ref  : (d_model, H*Dh)         softmax scale already folded in
    wk_ref  : (d_cond, H*Dh)
    wv_ref  : (d_cond, H*Dh)
    wo_ref  : (H, Dh, d_model)        head-major reshape of to_out weight
    bo_ref  : (1, d_model)
    o_ref   : (1, bn, d_model)
    kh_ref  : (H, Mp, Dh) VMEM scratch — K heads, cached across query tiles
    vh_ref  : (H, Mp, Dh) VMEM scratch — V heads, cached across query tiles
    """
    h, dh = n_heads, d_head
    op_dtype = x_ref.dtype   # MXU operand dtype (bf16 in -> bf16 ops, f32 -> f32)

    # --- K/V projection + head split: once per batch, cached in scratch ----
    @pl.when(pl.program_id(1) == 0)
    def _():
        ctx = ctx_ref[0]                                  # (Mp, d_cond)
        mp = ctx.shape[0]
        k = jnp.dot(ctx, wk_ref[...], preferred_element_type=jnp.float32)
        v = jnp.dot(ctx, wv_ref[...], preferred_element_type=jnp.float32)
        kh_ref[...] = pltpu.einshape("nhd->hnd",
                                     k.astype(op_dtype).reshape(mp, h, dh))
        vh_ref[...] = pltpu.einshape("nhd->hnd",
                                     v.astype(op_dtype).reshape(mp, h, dh))

    x = x_ref[0]              # (bn, d_model)
    bn = x.shape[0]
    mp = kh_ref.shape[1]

    # --- q projection: full-width MXU matmul, f32 accumulation -------------
    q = jnp.dot(x, wq_ref[...], preferred_element_type=jnp.float32)     # (bn, H*Dh)
    qh = pltpu.einshape("nhd->hnd", q.astype(op_dtype).reshape(bn, h, dh))

    # --- scores: head-batched, contracting Dh on both sides (no k.T) -------
    s = jnp.einsum("hqd,hkd->hqk", qh, kh_ref[...],
                   preferred_element_type=jnp.float32)                  # (H, bn, Mp)

    if m_valid < mp:
        # Mask the lane padding of the context so softmax stays correct.
        col = jax.lax.broadcasted_iota(jnp.int32, s.shape, 2)
        s = jnp.where(col < m_valid, s, _NEG_INF)
    # TODO(synk): the optional boolean `mask` argument of the PyTorch module
    # (masked_fill_ with -10000.0) is not plumbed through (forward uses mask=None).

    # --- softmax in f32; EUP approximate reciprocal for the denominator ----
    s = s - jnp.max(s, axis=-1, keepdims=True)
    p = jnp.exp(s)
    inv = pl.reciprocal(jnp.sum(p, axis=-1, keepdims=True), approx=True)
    p = (p * inv).astype(op_dtype)

    # --- PV: head-batched ---------------------------------------------------
    oh = jnp.einsum("hqk,hkd->hqd", p, vh_ref[...],
                    preferred_element_type=jnp.float32)                 # (H, bn, Dh)

    # --- output projection fused over heads (no concatenate) ---------------
    oproj = jnp.einsum("hqd,hdo->hqo", oh.astype(op_dtype), wo_ref[...],
                       preferred_element_type=jnp.float32)              # (H, bn, dm)
    out = jnp.sum(oproj, axis=0) + bo_ref[...].astype(jnp.float32)      # (bn, dm)

    o_ref[0] = out.astype(o_ref.dtype)


def _pick_block_n(n, target=512):
    """Largest multiple of 8 that divides n and is <= target (else n itself)."""
    if n <= target:
        return n
    for bn in range((target // 8) * 8, 0, -8):
        if n % bn == 0:
            return bn
    return n


def cross_attention(x, context, params, *, n_heads, d_head, block_n=None):
    B, N, d_model = x.shape
    Bc, M, d_cond = context.shape
    assert Bc == B
    inner = n_heads * d_head
    scale = float(d_head) ** -0.5

    # Fold the softmax scale into Wq (tiny wrapper-side op; removes the
    # per-score VALU multiply from the hot path).
    wq = (params["wq"] * scale).astype(params["wq"].dtype)
    wk = params["wk"]
    wv = params["wv"]
    # Head-major reshape of the output projection weight: (H*Dh, dm) -> (H, Dh, dm).
    wo_r = params["wo"].reshape(n_heads, d_head, d_model)
    bo = params["bo"].reshape(1, d_model)

    # Lane-pad the context length to a multiple of 128 (dense score tiles);
    # padded keys are masked inside the kernel.
    m_pad = ((M + 127) // 128) * 128
    if m_pad != M:
        context = jnp.pad(context, ((0, 0), (0, m_pad - M), (0, 0)))

    if block_n is None:
        block_n = _pick_block_n(N)
    assert N % block_n == 0, "block_n must divide the query length"
    # TODO(synk): very long contexts (e.g. self-attention with context=x at
    # N=4096) would additionally need K/V tiling (flash-style); this kernel
    # keeps the full (padded) context resident, which is the cross-attention
    # use case (M <= a few hundred).

    kernel = functools.partial(cross_attention_kernel, n_heads=n_heads,
                               d_head=d_head, m_valid=M)

    return pl.pallas_call(
        kernel,
        out_shape=jax.ShapeDtypeStruct((B, N, d_model), x.dtype),
        grid_spec=pltpu.PrefetchScalarGridSpec(
            num_scalar_prefetch=0,
            grid=(B, N // block_n),
            in_specs=[
                pl.BlockSpec((1, block_n, d_model), lambda b, n: (b, n, 0)),   # x tile
                pl.BlockSpec((1, m_pad, d_cond), lambda b, n: (b, 0, 0)),      # context
                pl.BlockSpec((d_model, inner), lambda b, n: (0, 0)),           # Wq (resident)
                pl.BlockSpec((d_cond, inner), lambda b, n: (0, 0)),            # Wk (resident)
                pl.BlockSpec((d_cond, inner), lambda b, n: (0, 0)),            # Wv (resident)
                pl.BlockSpec((n_heads, d_head, d_model),
                             lambda b, n: (0, 0, 0)),                          # Wo head-major
                pl.BlockSpec((1, d_model), lambda b, n: (0, 0)),               # bias
            ],
            out_specs=pl.BlockSpec((1, block_n, d_model), lambda b, n: (b, n, 0)),
            scratch_shapes=[
                pltpu.VMEM((n_heads, m_pad, d_head), x.dtype),   # cached K heads
                pltpu.VMEM((n_heads, m_pad, d_head), x.dtype),   # cached V heads
            ],
        ),
        compiler_params=pltpu.CompilerParams(
            # Query-tile axis is "arbitrary": the K/V scratch written at tile 0
            # carries across tiles of the same batch. Batch axis stays parallel.
            dimension_semantics=("parallel", "arbitrary"),
            vmem_limit_bytes=48 * 1024 * 1024,   # explicit, fits v7x's 64 MiB VMEM
        ),
    )(x, context, wq, wk, wv, wo_r, bo)


def ref_cross_attention(x, context, params, *, n_heads, d_head):
    """Pure-JAX reference matching the PyTorch normal_attention path."""
    q = x @ params["wq"]
    k = context @ params["wk"]
    v = context @ params["wv"]
    B, N, _ = q.shape
    M = k.shape[1]
    qh = q.reshape(B, N, n_heads, d_head).transpose(0, 2, 1, 3)
    kh = k.reshape(B, M, n_heads, d_head).transpose(0, 2, 1, 3)
    vh = v.reshape(B, M, n_heads, d_head).transpose(0, 2, 1, 3)
    s = jnp.einsum("bhid,bhjd->bhij", qh, kh) * (float(d_head) ** -0.5)
    a = jax.nn.softmax(s, axis=-1)
    o = jnp.einsum("bhij,bhjd->bhid", a, vh)
    o = o.transpose(0, 2, 1, 3).reshape(B, N, n_heads * d_head)
    return o @ params["wo"] + params["bo"][0]


if __name__ == "__main__":
    # Small shapes consistent with the module.
    B, N, M = 2, 16, 8          # batch, query seq len, context seq len
    d_model, d_cond = 32, 32    # feature dims
    n_heads, d_head = 4, 16     # attention heads
    inner = n_heads * d_head

    key = jax.random.PRNGKey(0)
    kx, kc, k1, k2, k3, k4, k5 = jax.random.split(key, 7)

    x = jax.random.normal(kx, (B, N, d_model), dtype=jnp.float32)
    context = jax.random.normal(kc, (B, M, d_cond), dtype=jnp.float32)

    # Deterministic parameter init (uniform(-1/sqrt(fan_in), 1/sqrt(fan_in)),
    # like PyTorch nn.Linear default), stored as (in, out).
    def linear_init(k, fan_in, fan_out):
        bound = 1.0 / (fan_in ** 0.5)
        return jax.random.uniform(k, (fan_in, fan_out), jnp.float32, -bound, bound)

    params = {
        "wq": linear_init(k1, d_model, inner),
        "wk": linear_init(k2, d_cond, inner),
        "wv": linear_init(k3, d_cond, inner),
        "wo": linear_init(k4, inner, d_model),
        "bo": jax.random.uniform(
            k5, (1, d_model), jnp.float32,
            -1.0 / (inner ** 0.5), 1.0 / (inner ** 0.5)),
    }

    out = cross_attention(x, context, params, n_heads=n_heads, d_head=d_head)
    out = jax.block_until_ready(out)

    ref = ref_cross_attention(x, context, params, n_heads=n_heads, d_head=d_head)
    assert out.shape == (B, N, d_model)
    # Tolerance covers the EUP approximate reciprocal in the softmax denominator.
    err = jnp.max(jnp.abs(out - ref))
    assert jnp.allclose(out, ref, atol=5e-3, rtol=5e-3), (
        f"mismatch vs reference, max abs err = {err}")

    print("KERNEL_OK")
</pallas_src>

<mosaic_0001>
module attributes {stable_mosaic.version = 11 : i64} {
  func.func @cross_attention_kernel(%arg0: i32, %arg1: i32, %arg2: memref<1x16x32xf32, #tpu.memory_space<vmem>>, %arg3: memref<1x128x32xf32, #tpu.memory_space<vmem>>, %arg4: memref<32x64xf32, #tpu.memory_space<vmem>>, %arg5: memref<32x64xf32, #tpu.memory_space<vmem>>, %arg6: memref<32x64xf32, #tpu.memory_space<vmem>>, %arg7: memref<4x16x32xf32, #tpu.memory_space<vmem>>, %arg8: memref<1x32xf32, #tpu.memory_space<vmem>>, %arg9: memref<1x16x32xf32, #tpu.memory_space<vmem>>, %arg10: memref<4x128x16xf32, #tpu.memory_space<vmem>>, %arg11: memref<4x128x16xf32, #tpu.memory_space<vmem>>) attributes {dimension_semantics = [#tpu.dimension_semantics<parallel>, #tpu.dimension_semantics<arbitrary>], iteration_bounds = array<i64: 2, 1>, scalar_prefetch = 0 : i64, scratch_operands = 2 : i64, tpu.core_type = #tpu.core_type<tc>, window_params = [{transform_indices = @transform_0, window_bounds = array<i64: 1, 16, 32>}, {transform_indices = @transform_1, window_bounds = array<i64: 1, 128, 32>}, {pipeline_mode = #tpu.pipeline_mode<synchronous>, transform_indices = @transform_2, window_bounds = array<i64: 32, 64>}, {pipeline_mode = #tpu.pipeline_mode<synchronous>, transform_indices = @transform_3, window_bounds = array<i64: 32, 64>}, {pipeline_mode = #tpu.pipeline_mode<synchronous>, transform_indices = @transform_4, window_bounds = array<i64: 32, 64>}, {pipeline_mode = #tpu.pipeline_mode<synchronous>, transform_indices = @transform_5, window_bounds = array<i64: 4, 16, 32>}, {pipeline_mode = #tpu.pipeline_mode<synchronous>, transform_indices = @transform_6, window_bounds = array<i64: 1, 32>}, {transform_indices = @transform_7, window_bounds = array<i64: 1, 16, 32>}]} {
    %c0_i32 = arith.constant 0 : i32
    %0 = arith.cmpi eq, %arg1, %c0_i32 : i32
    %1 = arith.extui %0 : i1 to i32
    %c0_i32_0 = arith.constant 0 : i32
    %2 = arith.cmpi ne, %1, %c0_i32_0 : i32
    scf.if %2 {
      %c0_26 = arith.constant 0 : index
      %c0_27 = arith.constant 0 : index
      %c0_28 = arith.constant 0 : index
      %37 = vector.load %arg3[%c0_26, %c0_27, %c0_28] : memref<1x128x32xf32, #tpu.memory_space<vmem>>, vector<1x128x32xf32>
      %38 = vector.shape_cast %37 : vector<1x128x32xf32> to vector<128x32xf32>
      %c0_29 = arith.constant 0 : index
      %c0_30 = arith.constant 0 : index
      %39 = vector.load %arg5[%c0_29, %c0_30] : memref<32x64xf32, #tpu.memory_space<vmem>>, vector<32x64xf32>
      %cst_31 = arith.constant dense<0.000000e+00> : vector<128x64xf32>
      %40 = tpu.matmul %38, %39, %cst_31 {dimension_numbers = #tpu.dot_dimension_numbers<[1], [0], [0], [1], [0, 0, 1, 1], [], []>} : vector<128x32xf32>, vector<32x64xf32>, vector<128x64xf32> -> vector<128x64xf32>
      %c0_32 = arith.constant 0 : index
      %c0_33 = arith.constant 0 : index
      %41 = vector.load %arg6[%c0_32, %c0_33] : memref<32x64xf32, #tpu.memory_space<vmem>>, vector<32x64xf32>
      %cst_34 = arith.constant dense<0.000000e+00> : vector<128x64xf32>
      %42 = tpu.matmul %38, %41, %cst_34 {dimension_numbers = #tpu.dot_dimension_numbers<[1], [0], [0], [1], [0, 0, 1, 1], [], []>} : vector<128x32xf32>, vector<32x64xf32>, vector<128x64xf32> -> vector<128x64xf32>
      %43 = vector.shape_cast %40 : vector<128x64xf32> to vector<128x4x16xf32>
      %44 = tpu.transpose %43, [1, 0, 2] : vector<128x4x16xf32> -> vector<4x128x16xf32>
      %c0_35 = arith.constant 0 : index
      %c0_36 = arith.constant 0 : index
      %c0_37 = arith.constant 0 : index
      %45 = vector.load %arg10[%c0_35, %c0_36, %c0_37] : memref<4x128x16xf32, #tpu.memory_space<vmem>>, vector<4x128x16xf32>
      tpu.vector_store %arg10[%c0_35, %c0_36, %c0_37], %44 {strides = array<i32>} : memref<4x128x16xf32, #tpu.memory_space<vmem>>, vector<4x128x16xf32>,
      %46 = vector.shape_cast %42 : vector<128x64xf32> to vector<128x4x16xf32>
      %47 = tpu.transpose %46, [1, 0, 2] : vector<128x4x16xf32> -> vector<4x128x16xf32>
      %c0_38 = arith.constant 0 : index
      %c0_39 = arith.constant 0 : index
      %c0_40 = arith.constant 0 : index
      %48 = vector.load %arg11[%c0_38, %c0_39, %c0_40] : memref<4x128x16xf32, #tpu.memory_space<vmem>>, vector<4x128x16xf32>
      tpu.vector_store %arg11[%c0_38, %c0_39, %c0_40], %47 {strides = array<i32>} : memref<4x128x16xf32, #tpu.memory_space<vmem>>, vector<4x128x16xf32>,
    } else {
    }
    %c0 = arith.constant 0 : index
    %c0_1 = arith.constant 0 : index
    %c0_2 = arith.constant 0 : index
    %3 = vector.load %arg2[%c0, %c0_1, %c0_2] : memref<1x16x32xf32, #tpu.memory_space<vmem>>, vector<1x16x32xf32>
    %4 = vector.shape_cast %3 : vector<1x16x32xf32> to vector<16x32xf32>
    %c0_3 = arith.constant 0 : index
    %c0_4 = arith.constant 0 : index
    %5 = vector.load %arg4[%c0_3, %c0_4] : memref<32x64xf32, #tpu.memory_space<vmem>>, vector<32x64xf32>
    %cst = arith.constant dense<0.000000e+00> : vector<16x64xf32>
    %6 = tpu.matmul %4, %5, %cst {dimension_numbers = #tpu.dot_dimension_numbers<[1], [0], [0], [1], [0, 0, 1, 1], [], []>} : vector<16x32xf32>, vector<32x64xf32>, vector<16x64xf32> -> vector<16x64xf32>
    %7 = vector.shape_cast %6 : vector<16x64xf32> to vector<16x4x16xf32>
    %8 = tpu.transpose %7, [1, 0, 2] : vector<16x4x16xf32> -> vector<4x16x16xf32>
    %c0_5 = arith.constant 0 : index
    %c0_6 = arith.constant 0 : index
    %c0_7 = arith.constant 0 : index
    %9 = vector.load %arg10[%c0_5, %c0_6, %c0_7] : memref<4x128x16xf32, #tpu.memory_space<vmem>>, vector<4x128x16xf32>
    "tpu.trace_start"() <{level = 10 : i32, message = "hqd,hkd->hqk"}> : () -> ()
    %cst_8 = arith.constant dense<0.000000e+00> : vector<4x16x128xf32>
    %10 = tpu.matmul %8, %9, %cst_8 {dimension_numbers = #tpu.dot_dimension_numbers<[2], [2], [1], [1], [0, 0, 0, 1, 1, 1], [0], [0]>} : vector<4x16x16xf32>, vector<4x128x16xf32>, vector<4x16x128xf32> -> vector<4x16x128xf32>
    "tpu.trace_stop"() : () -> ()
    %11 = tpu.iota {dimensions = array<i32: 2>} : vector<4x16x128xi32>
    %c8_i32 = arith.constant 8 : i32
    %12 = vector.broadcast %c8_i32 : i32 to vector<4x16x128xi32>
    %13 = arith.cmpi slt, %11, %12 : vector<4x16x128xi32>
    %cst_9 = arith.constant -1.000000e+30 : f32
    %14 = vector.broadcast %cst_9 : f32 to vector<4x16x128xf32>
    %15 = arith.select %13, %10, %14 : vector<4x16x128xi1>, vector<4x16x128xf32>
    %cst_10 = arith.constant dense<0xFF800000> : vector<4x16xf32>
    %16 = vector.multi_reduction <maximumf>, %15, %cst_10 [2] : vector<4x16x128xf32> to vector<4x16xf32>
    %17 = vector.shape_cast %16 : vector<4x16xf32> to vector<4x16x1xf32>
    %18 = vector.broadcast %17 : vector<4x16x1xf32> to vector<4x16x128xf32>
    %19 = arith.subf %15, %18 : vector<4x16x128xf32>
    %20 = math.exp %19 : vector<4x16x128xf32>
    %cst_11 = arith.constant dense<0.000000e+00> : vector<4x16xf32>
    %21 = vector.multi_reduction <add>, %20, %cst_11 [2] : vector<4x16x128xf32> to vector<4x16xf32>
    %22 = vector.shape_cast %21 : vector<4x16xf32> to vector<4x16x1xf32>
    %23 = tpu.reciprocal %22 {approx = true} : vector<4x16x1xf32> -> vector<4x16x1xf32>
    %24 = vector.broadcast %23 : vector<4x16x1xf32> to vector<4x16x128xf32>
    %25 = arith.mulf %20, %24 : vector<4x16x128xf32>
    %c0_12 = arith.constant 0 : index
    %c0_13 = arith.constant 0 : index
    %c0_14 = arith.constant 0 : index
    %26 = vector.load %arg11[%c0_12, %c0_13, %c0_14] : memref<4x128x16xf32, #tpu.memory_space<vmem>>, vector<4x128x16xf32>
    "tpu.trace_start"() <{level = 10 : i32, message = "hqk,hkd->hqd"}> : () -> ()
    %cst_15 = arith.constant dense<0.000000e+00> : vector<4x16x16xf32>
    %27 = tpu.matmul %25, %26, %cst_15 {dimension_numbers = #tpu.dot_dimension_numbers<[2], [1], [1], [2], [0, 0, 0, 1, 1, 2], [0], [0]>} : vector<4x16x128xf32>, vector<4x128x16xf32>, vector<4x16x16xf32> -> vector<4x16x16xf32>
    "tpu.trace_stop"() : () -> ()
    %c0_16 = arith.constant 0 : index
    %c0_17 = arith.constant 0 : index
    %c0_18 = arith.constant 0 : index
    %28 = vector.load %arg7[%c0_16, %c0_17, %c0_18] : memref<4x16x32xf32, #tpu.memory_space<vmem>>, vector<4x16x32xf32>
    "tpu.trace_start"() <{level = 10 : i32, message = "hqd,hdo->hqo"}> : () -> ()
    %cst_19 = arith.constant dense<0.000000e+00> : vector<4x16x32xf32>
    %29 = tpu.matmul %27, %28, %cst_19 {dimension_numbers = #tpu.dot_dimension_numbers<[2], [1], [1], [2], [0, 0, 0, 1, 1, 2], [0], [0]>} : vector<4x16x16xf32>, vector<4x16x32xf32>, vector<4x16x32xf32> -> vector<4x16x32xf32>
    "tpu.trace_stop"() : () -> ()
    %cst_20 = arith.constant dense<0.000000e+00> : vector<16x32xf32>
    %30 = vector.multi_reduction <add>, %29, %cst_20 [0] : vector<4x16x32xf32> to vector<16x32xf32>
    %c0_21 = arith.constant 0 : index
    %c0_22 = arith.constant 0 : index
    %31 = vector.load %arg8[%c0_21, %c0_22] : memref<1x32xf32, #tpu.memory_space<vmem>>, vector<1x32xf32>
    %32 = vector.broadcast %31 : vector<1x32xf32> to vector<16x32xf32>
    %33 = arith.addf %30, %32 : vector<16x32xf32>
    %c0_23 = arith.constant 0 : index
    %c0_24 = arith.constant 0 : index
    %c0_25 = arith.constant 0 : index
    %34 = vector.load %arg9[%c0_23, %c0_24, %c0_25] : memref<1x16x32xf32, #tpu.memory_space<vmem>>, vector<1x16x32xf32>
    %35 = vector.shape_cast %34 : vector<1x16x32xf32> to vector<16x32xf32>
    %36 = vector.shape_cast %33 : vector<16x32xf32> to vector<1x16x32xf32>
    tpu.vector_store %arg9[%c0_23, %c0_24, %c0_25], %36 {strides = array<i32>} : memref<1x16x32xf32, #tpu.memory_space<vmem>>, vector<1x16x32xf32>,
    return
  }
  func.func @transform_0(%arg0: i32, %arg1: i32) -> (i32, i32, i32) {
    %c0_i32 = arith.constant 0 : i32
    %c0_i32_0 = arith.constant 0 : i32
    return %arg0, %arg1, %c0_i32 : i32, i32, i32
  }
  func.func @transform_1(%arg0: i32, %arg1: i32) -> (i32, i32, i32) {
    %c0_i32 = arith.constant 0 : i32
    %c0_i32_0 = arith.constant 0 : i32
    %c0_i32_1 = arith.constant 0 : i32
    return %arg0, %c0_i32, %c0_i32_0 : i32, i32, i32
  }
  func.func @transform_2(%arg0: i32, %arg1: i32) -> (i32, i32) {
    %c0_i32 = arith.constant 0 : i32
    %c0_i32_0 = arith.constant 0 : i32
    %c0_i32_1 = arith.constant 0 : i32
    return %c0_i32, %c0_i32_0 : i32, i32
  }
  func.func @transform_3(%arg0: i32, %arg1: i32) -> (i32, i32) {
    %c0_i32 = arith.constant 0 : i32
    %c0_i32_0 = arith.constant 0 : i32
    %c0_i32_1 = arith.constant 0 : i32
    return %c0_i32, %c0_i32_0 : i32, i32
  }
  func.func @transform_4(%arg0: i32, %arg1: i32) -> (i32, i32) {
    %c0_i32 = arith.constant 0 : i32
    %c0_i32_0 = arith.constant 0 : i32
    %c0_i32_1 = arith.constant 0 : i32
    return %c0_i32, %c0_i32_0 : i32, i32
  }
  func.func @transform_5(%arg0: i32, %arg1: i32) -> (i32, i32, i32) {
    %c0_i32 = arith.constant 0 : i32
    %c0_i32_0 = arith.constant 0 : i32
    %c0_i32_1 = arith.constant 0 : i32
    %c0_i32_2 = arith.constant 0 : i32
    return %c0_i32, %c0_i32_0, %c0_i32_1 : i32, i32, i32
  }
  func.func @transform_6(%arg0: i32, %arg1: i32) -> (i32, i32) {
    %c0_i32 = arith.constant 0 : i32
    %c0_i32_0 = arith.constant 0 : i32
    %c0_i32_1 = arith.constant 0 : i32
    return %c0_i32, %c0_i32_0 : i32, i32
  }
  func.func @transform_7(%arg0: i32, %arg1: i32) -> (i32, i32, i32) {
    %c0_i32 = arith.constant 0 : i32
    %c0_i32_0 = arith.constant 0 : i32
    return %arg0, %arg1, %c0_i32 : i32, i32, i32
  }
}

</mosaic_0001>

<llo_original>
// kernel: tpu_custom_call.1
$region0: #{tpu_custom_call.1}
  #allocation0 [shape = 'u32[]', space=smem, size = 0x4, offset = 0x4, fixed_abs, tag = 'smem constant byte address 0x4 - core index']
  #allocation1 [shape = 'u32[144,128]{1,0:T(1,128)}', space=vmem, size = 0x12000, scoped, tag = 'internal scratch']
  #allocation2 [shape = 'f32[4,128,16]{2,1,0:T(8,128)}', space=vmem, size = 0x40000, scoped, tag = 'scratch operand']
  #allocation3 [shape = 'f32[4,128,16]{2,1,0:T(8,128)}', space=vmem, size = 0x40000, scoped, tag = 'scratch operand']
  %s0 = inlined_call_operand.vmem [shape: f32[2,16,32], index: 0, kind: input, shape index: {}]
  %s1 = inlined_call_operand.vmem [shape: f32[2,128,32], index: 1, kind: input, shape index: {}]
  %s2 = inlined_call_operand.vmem [shape: f32[32,64], index: 2, kind: input, shape index: {}]
  %s3 = inlined_call_operand.vmem [shape: f32[32,64], index: 3, kind: input, shape index: {}]
  %s4 = inlined_call_operand.vmem [shape: f32[32,64], index: 4, kind: input, shape index: {}]
  %s5 = inlined_call_operand.vmem [shape: f32[4,16,32], index: 5, kind: input, shape index: {}]
  %s6 = inlined_call_operand.vmem [shape: f32[1,32], index: 6, kind: input, shape index: {}]
  %s7 = inlined_call_operand.hbm [shape: f32[2,16,32], index: 7, kind: output, shape index: {}]
  %s8 = sld [smem:[#allocation0]]
  $region65: #{tpu_custom_call.1} parent=0
    _
  %s10 = ssub.s32 1, %s8
  %s11 = scalar_select 0, %s10, %s8
  $region1: #{tpu_custom_call.1} parent=0
    #allocation4 [shape = 'u8[16384]{0}', space=vmem, size = 0x4000, scoped, tag = 'output window, operand 0']
    #allocation5 [shape = 's32[2]{0}', space=sflag, size = 0x8, scoped, tag = 'scoped memory for tpu_custom_call.1']
    %12 = vsyncpa [#allocation5], 0
    %s13 = scalar_lea.sflag [#allocation5], 1
    %14 = vsyncpa %s13, 0
    loop: start=0, step=1, limit=4
    $region2: #{tpu_custom_call.1} parent=1 // loop_pre_header
      _
    $region3: #{tpu_custom_call.1} parent=1 // loop_header
      %s16 = sphi 0, %s20
      %p17 = scmp.ge.s32.totalorder %s16, 4
      %s23 = sphi 0, %s35
      %s24 = sphi 0, %s31
      %s25 = sphi 0, %s23
      %s26 = sphi 0, %s24
      %s27 = sphi 0, %s25
      %s28 = sphi 0, %s26
      %s40 = sphi 0, %s42
      %s43 = sphi 0, %s40
      %s44 = sphi 0, %s43
      %s60 = sphi 0, %s44
      %s66 = sphi 0, %s68
      %s69 = sphi 0, %s66
      %s70 = sphi 0, %s69
      %s86 = sphi 0, %s70
      %s90 = sphi 0, %s90
      %s92 = sphi 0, %s90
      %s93 = sphi 0, %s92
      %s107 = sphi 0, %s93
      %s111 = sphi 0, %s111
      %s113 = sphi 0, %s111
      %s114 = sphi 0, %s113
      %s128 = sphi 0, %s114
      %s132 = sphi 0, %s132
      %s134 = sphi 0, %s132
      %s135 = sphi 0, %s134
      %s149 = sphi 0, %s135
      %s153 = sphi 0, %s153
      %s155 = sphi 0, %s153
      %s156 = sphi 0, %s155
      %s170 = sphi 0, %s156
      %s174 = sphi 0, %s174
      %s176 = sphi 0, %s174
      %s177 = sphi 0, %s176
      %s191 = sphi 0, %s177
      %s199 = sphi 0, %s201
      %s202 = sphi 0, %s199
      %s203 = sphi 0, %s202
      %s219 = sphi 0, %s203
    $region4: #{tpu_custom_call.1} parent=1 // loop_header_branch
      %19 = sbr.rel (%p17) target = $region8
    $region5: #{tpu_custom_call.1} parent=1 // loop_body
      %s21 = ssub.s32 %s16, 1
      %s22 = ssub.s32 %s16, 2
      %s29 = sadd.s32 1, %s24
      %p30 = scmp.ge.s32.totalorder %s29, 1
      %s31 = scalar_select %p30, 0, %s29
      %s32 = sadd.s32 1, %s23
      %s33 = scalar_select %p30, %s32, %s23
      %p34 = scmp.ge.s32.totalorder %s33, 2
      %s35 = scalar_select %p34, 0, %s33
      %s36 = ssub.s32 %s23, %s35
      %s37 = ssub.s32 %s24, %s31
      %s38 = sor.u32 %s36, %s37
      %p39 = scmp.eq.s32.totalorder %s38, 0
      %s41 = sadd.s32 %s40, 1
      %s42 = scalar_select %p39, %s40, %s41
      %p45 = pneg %p39
      %p46 = scmp.eq.s32.totalorder %s16, 1
      %p47 = por %p45, %p46
      %p48 = scmp.ne.s32.totalorder %s40, %s43
      %p49 = scmp.eq.s32.totalorder %s16, 0
      %p50 = por %p48, %p49
      %p51 = scmp.ne.s32.totalorder %s40, %s43
      %p52 = scmp.eq.s32.totalorder %s21, 1
      %p53 = por %p51, %p52
      %p54 = scmp.ne.s32.totalorder %s43, %s44
      %p55 = scmp.eq.s32.totalorder %s21, 0
      %p56 = por %p54, %p55
      %p57 = scmp.ne.s32.totalorder %s43, %s44
      %p58 = scmp.eq.s32.totalorder %s22, 1
      %p59 = por %p57, %p58
      %p61 = scmp.ne.s32.totalorder %s44, %s60
      %p62 = scmp.eq.s32.totalorder %s22, 0
      %p63 = por %p61, %p62
      %s64 = ssub.s32 %s23, %s35
      %p65 = scmp.eq.s32.totalorder %s64, 0
      %s67 = sadd.s32 %s66, 1
      %s68 = scalar_select %p65, %s66, %s67
      %p71 = pneg %p65
      %p72 = scmp.eq.s32.totalorder %s16, 1
      %p73 = por %p71, %p72
      %p74 = scmp.ne.s32.totalorder %s66, %s69
      %p75 = scmp.eq.s32.totalorder %s16, 0
      %p76 = por %p74, %p75
      %p77 = scmp.ne.s32.totalorder %s66, %s69
      %p78 = scmp.eq.s32.totalorder %s21, 1
      %p79 = por %p77, %p78
      %p80 = scmp.ne.s32.totalorder %s69, %s70
      %p81 = scmp.eq.s32.totalorder %s21, 0
      %p82 = por %p80, %p81
      %p83 = scmp.ne.s32.totalorder %s69, %s70
      %p84 = scmp.eq.s32.totalorder %s22, 1
      %p85 = por %p83, %p84
      %p87 = scmp.ne.s32.totalorder %s70, %s86
      %p88 = scmp.eq.s32.totalorder %s22, 0
      %p89 = por %p87, %p88
      %s91 = sadd.s32 %s90, 1
      %p94 = scmp.eq.s32.totalorder %s16, 1
      %p95 = scmp.ne.s32.totalorder %s90, %s92
      %p96 = scmp.eq.s32.totalorder %s16, 0
      %p97 = por %p95, %p96
      %p98 = scmp.ne.s32.totalorder %s90, %s92
      %p99 = scmp.eq.s32.totalorder %s21, 1
      %p100 = por %p98, %p99
      %p101 = scmp.ne.s32.totalorder %s92, %s93
      %p102 = scmp.eq.s32.totalorder %s21, 0
      %p103 = por %p101, %p102
      %p104 = scmp.ne.s32.totalorder %s92, %s93
      %p105 = scmp.eq.s32.totalorder %s22, 1
      %p106 = por %p104, %p105
      %p108 = scmp.ne.s32.totalorder %s93, %s107
      %p109 = scmp.eq.s32.totalorder %s22, 0
      %p110 = por %p108, %p109
      %s112 = sadd.s32 %s111, 1
      %p115 = scmp.eq.s32.totalorder %s16, 1
      %p116 = scmp.ne.s32.totalorder %s111, %s113
      %p117 = scmp.eq.s32.totalorder %s16, 0
      %p118 = por %p116, %p117
      %p119 = scmp.ne.s32.totalorder %s111, %s113
      %p120 = scmp.eq.s32.totalorder %s21, 1
      %p121 = por %p119, %p120
      %p122 = scmp.ne.s32.totalorder %s113, %s114
      %p123 = scmp.eq.s32.totalorder %s21, 0
      %p124 = por %p122, %p123
      %p125 = scmp.ne.s32.totalorder %s113, %s114
      %p126 = scmp.eq.s32.totalorder %s22, 1
      %p127 = por %p125, %p126
      %p129 = scmp.ne.s32.totalorder %s114, %s128
      %p130 = scmp.eq.s32.totalorder %s22, 0
      %p131 = por %p129, %p130
      %s133 = sadd.s32 %s132, 1
      %p136 = scmp.eq.s32.totalorder %s16, 1
      %p137 = scmp.ne.s32.totalorder %s132, %s134
      %p138 = scmp.eq.s32.totalorder %s16, 0
      %p139 = por %p137, %p138
      %p140 = scmp.ne.s32.totalorder %s132, %s134
      %p141 = scmp.eq.s32.totalorder %s21, 1
      %p142 = por %p140, %p141
      %p143 = scmp.ne.s32.totalorder %s134, %s135
      %p144 = scmp.eq.s32.totalorder %s21, 0
      %p145 = por %p143, %p144
      %p146 = scmp.ne.s32.totalorder %s134, %s135
      %p147 = scmp.eq.s32.totalorder %s22, 1
      %p148 = por %p146, %p147
      %p150 = scmp.ne.s32.totalorder %s135, %s149
      %p151 = scmp.eq.s32.totalorder %s22, 0
      %p152 = por %p150, %p151
      %s154 = sadd.s32 %s153, 1
      %p157 = scmp.eq.s32.totalorder %s16, 1
      %p158 = scmp.ne.s32.totalorder %s153, %s155
      %p159 = scmp.eq.s32.totalorder %s16, 0
      %p160 = por %p158, %p159
      %p161 = scmp.ne.s32.totalorder %s153, %s155
      %p162 = scmp.eq.s32.totalorder %s21, 1
      %p163 = por %p161, %p162
      %p164 = scmp.ne.s32.totalorder %s155, %s156
      %p165 = scmp.eq.s32.totalorder %s21, 0
      %p166 = por %p164, %p165
      %p167 = scmp.ne.s32.totalorder %s155, %s156
      %p168 = scmp.eq.s32.totalorder %s22, 1
      %p169 = por %p167, %p168
      %p171 = scmp.ne.s32.totalorder %s156, %s170
      %p172 = scmp.eq.s32.totalorder %s22, 0
      %p173 = por %p171, %p172
      %s175 = sadd.s32 %s174, 1
      %p178 = scmp.eq.s32.totalorder %s16, 1
      %p179 = scmp.ne.s32.totalorder %s174, %s176
      %p180 = scmp.eq.s32.totalorder %s16, 0
      %p181 = por %p179, %p180
      %p182 = scmp.ne.s32.totalorder %s174, %s176
      %p183 = scmp.eq.s32.totalorder %s21, 1
      %p184 = por %p182, %p183
      %p185 = scmp.ne.s32.totalorder %s176, %s177
      %p186 = scmp.eq.s32.totalorder %s21, 0
      %p187 = por %p185, %p186
      %p188 = scmp.ne.s32.totalorder %s176, %s177
      %p189 = scmp.eq.s32.totalorder %s22, 1
      %p190 = por %p188, %p189
      %p192 = scmp.ne.s32.totalorder %s177, %s191
      %p193 = scmp.eq.s32.totalorder %s22, 0
      %p194 = por %p192, %p193
      %s195 = ssub.s32 %s23, %s35
      %s196 = ssub.s32 %s24, %s31
      %s197 = sor.u32 %s195, %s196
      %p198 = scmp.eq.s32.totalorder %s197, 0
      %s200 = sadd.s32 %s199, 1
      %s201 = scalar_select %p198, %s199, %s200
      %p204 = pneg %p198
      %p205 = scmp.eq.s32.totalorder %s16, 1
      %p206 = por %p204, %p205
      %p207 = scmp.ne.s32.totalorder %s199, %s202
      %p208 = scmp.eq.s32.totalorder %s16, 0
      %p209 = por %p207, %p208
      %p210 = scmp.ne.s32.totalorder %s199, %s202
      %p211 = scmp.eq.s32.totalorder %s21, 1
      %p212 = por %p210, %p211
      %p213 = scmp.ne.s32.totalorder %s202, %s203
      %p214 = scmp.eq.s32.totalorder %s21, 0
      %p215 = por %p213, %p214
      %p216 = scmp.ne.s32.totalorder %s202, %s203
      %p217 = scmp.eq.s32.totalorder %s22, 1
      %p218 = por %p216, %p217
      %p220 = scmp.ne.s32.totalorder %s203, %s219
      %p221 = scmp.eq.s32.totalorder %s22, 0
      %p222 = por %p220, %p221
      %p223 = scmp.le.s32.totalorder 1, %s16
      %p224 = scmp.lt.s32.totalorder %s16, 3
      %p225 = pnand %p223, %p224
      %p226 = pneg %p225
      // Predicated region
      $region9: #{tpu_custom_call.1} parent=5 // pred_check
        _
      $region10: #{tpu_custom_call.1} parent=5 // pred_check_branch
        %228 = sbr.rel (%p225) target = $region12
      $region11: #{tpu_custom_call.1} parent=5 // pred_region
        %s229 = ssub.s32 %s16, 1
        // Predicated region
        $region13: #{tpu_custom_call.1} parent=11 // pred_check
          %p230 = pneg %p103
        $region14: #{tpu_custom_call.1} parent=11 // pred_check_branch
          %232 = sbr.rel (%p230) target = $region16
        $region15: #{tpu_custom_call.1} parent=11 // pred_region
          _
        $region16: #{tpu_custom_call.1} parent=11 // pred_fallthru
          _
        // Predicated region
        $region17: #{tpu_custom_call.1} parent=11 // pred_check
          %p233 = pneg %p124
        $region18: #{tpu_custom_call.1} parent=11 // pred_check_branch
          %235 = sbr.rel (%p233) target = $region20
        $region19: #{tpu_custom_call.1} parent=11 // pred_region
          _
        $region20: #{tpu_custom_call.1} parent=11 // pred_fallthru
          _
        // Predicated region
        $region21: #{tpu_custom_call.1} parent=11 // pred_check
          %p236 = pneg %p145
        $region22: #{tpu_custom_call.1} parent=11 // pred_check_branch
          %238 = sbr.rel (%p236) target = $region24
        $region23: #{tpu_custom_call.1} parent=11 // pred_region
          _
        $region24: #{tpu_custom_call.1} parent=11 // pred_fallthru
          _
        // Predicated region
        $region25: #{tpu_custom_call.1} parent=11 // pred_check
          %p239 = pneg %p166
        $region26: #{tpu_custom_call.1} parent=11 // pred_check_branch
          %241 = sbr.rel (%p239) target = $region28
        $region27: #{tpu_custom_call.1} parent=11 // pred_region
          _
        $region28: #{tpu_custom_call.1} parent=11 // pred_fallthru
          _
        // Predicated region
        $region29: #{tpu_custom_call.1} parent=11 // pred_check
          %p242 = pneg %p187
        $region30: #{tpu_custom_call.1} parent=11 // pred_check_branch
          %244 = sbr.rel (%p242) target = $region32
        $region31: #{tpu_custom_call.1} parent=11 // pred_region
          _
        $region32: #{tpu_custom_call.1} parent=11 // pred_fallthru
          _
      $region12: #{tpu_custom_call.1} parent=5 // pred_fallthru
        _
      %p245 = scmp.lt.s32.totalorder %s16, 2
      // Predicated region
      $region33: #{tpu_custom_call.1} parent=5 // pred_check
        %p246 = pneg %p245
      $region34: #{tpu_custom_call.1} parent=5 // pred_check_branch
        %248 = sbr.rel (%p246) target = $region36
      $region35: #{tpu_custom_call.1} parent=5 // pred_region
        // Predicated region
        $region37: #{tpu_custom_call.1} parent=35 // pred_check
          %p249 = pneg %p50
        $region38: #{tpu_custom_call.1} parent=35 // pred_check_branch
          %251 = sbr.rel (%p249) target = $region40
        $region39: #{tpu_custom_call.1} parent=35 // pred_region
          %s252 = smul.u32 2, %s24
          %p253 = scmp.lt.s32.totalorder %s23, 1
          %s254 = scalar_select %p253, %s23, 1
          %p255 = scmp.lt.s32.totalorder %s252, 1
          %s256 = scalar_select %p255, %s252, 1
          %s257 = smul.addr %s254, 2
          %s258 = sadd.s32 %s256, %s257
          %s259 = smul.addr %s258, 8
          %s260 = scalar_lea.vmem %s0, %s259
          %s261 = smul.u32 2, %s24
        $region40: #{tpu_custom_call.1} parent=35 // pred_fallthru
          _
        // Predicated region
        $region41: #{tpu_custom_call.1} parent=35 // pred_check
          %p262 = pneg %p76
        $region42: #{tpu_custom_call.1} parent=35 // pred_check_branch
          %264 = sbr.rel (%p262) target = $region44
        $region43: #{tpu_custom_call.1} parent=35 // pred_region
          %p265 = scmp.lt.s32.totalorder %s23, 1
          %s266 = scalar_select %p265, %s23, 1
          %s267 = smul.addr %s266, 16
          %s268 = smul.addr %s267, 8
          %s269 = scalar_lea.vmem %s1, %s268
        $region44: #{tpu_custom_call.1} parent=35 // pred_fallthru
          _
      $region36: #{tpu_custom_call.1} parent=5 // pred_fallthru
        _
      %p270 = scmp.le.s32.totalorder 1, %s16
      %p271 = scmp.lt.s32.totalorder %s16, 3
      %p272 = pnand %p270, %p271
      %p273 = pneg %p272
      // Predicated region
      $region45: #{tpu_custom_call.1} parent=5 // pred_check
        _
      $region46: #{tpu_custom_call.1} parent=5 // pred_check_branch
        %275 = sbr.rel (%p272) target = $region48
      $region47: #{tpu_custom_call.1} parent=5 // pred_region
        %s276 = ssub.s32 %s16, 1
        %s277 = smul.u32 2, %s26
        %p278 = scmp.lt.s32.totalorder %s25, 1
        %s279 = scalar_select %p278, %s25, 1
        %p280 = scmp.lt.s32.totalorder %s277, 1
        %s281 = scalar_select %p280, %s277, 1
        %s282 = smul.addr %s279, 2
        %s283 = sadd.s32 %s281, %s282
        %s284 = smul.addr %s283, 8
        %s285 = scalar_lea.vmem %s0, %s284
        %p286 = pneg %p56
        %p287 = pneg %p53
        %p288 = scmp.lt.s32.totalorder %s25, 1
        %s289 = scalar_select %p288, %s25, 1
        %s290 = smul.addr %s289, 16
        %s291 = smul.addr %s290, 8
        %s292 = scalar_lea.vmem %s1, %s291
        %p293 = pneg %p82
        %p294 = pneg %p79
        %p295 = pneg %p103
        %p296 = pneg %p100
        %p297 = pneg %p124
        %p298 = pneg %p121
        %p299 = pneg %p145
        %p300 = pneg %p142
        %p301 = pneg %p166
        %p302 = pneg %p163
        %p303 = pneg %p187
        %p304 = pneg %p184
        %p305 = pneg %p215
        %p306 = pneg %p212
        %s307 = sand.u32 %s202, 1
        %s308 = scalar_lea.sflag [#allocation5], %s307
        %s309 = sand.u32 %s202, 1
        %s310 = smul.addr %s309, 16
        %s311 = scalar_lea.vmem [#allocation4], %s310
        %s312 = smul.u32 2, %s26
        %p313 = scmp.lt.s32.totalorder %s25, 1
        %s314 = scalar_select %p313, %s25, 1
        %p315 = scmp.lt.s32.totalorder %s312, 1
        %s316 = scalar_select %p315, %s312, 1
        %s317 = smul.addr %s314, 2
        %s318 = sadd.s32 %s316, %s317
        %s319 = smul.addr %s318, 8
        %s320 = scalar_lea.vmem %s0, %s319
        %s321 = smul.u32 2, %s26
        %p322 = scmp.lt.s32.totalorder %s25, 1
        %s323 = scalar_select %p322, %s25, 1
        %s324 = smul.addr %s323, 16
        %s325 = smul.addr %s324, 8
        %s326 = scalar_lea.vmem %s1, %s325
        %s327 = smul.u32 2, %s26
        %p328 = scmp.eq.s32.totalorder %s26, 0
        // Predicated region
        $region49: #{tpu_custom_call.1} parent=47 // pred_check
          %p329 = pneg %p328
        $region50: #{tpu_custom_call.1} parent=47 // pred_check_branch
          %331 = sbr.rel (%p329) target = $region52
        $region51: #{tpu_custom_call.1} parent=47 // pred_region
          %v332 = vld [vmem:[%s326] sm:$0xff]
          %v333 = vld [vmem:[%s326 + $0x8] sm:$0xff]
          %v334 = vld [vmem:[%s326 + $0x10] sm:$0xff]
          %v335 = vld [vmem:[%s326 + $0x18] sm:$0xff]
          %v336 = vld [vmem:[%s326 + $0x20] sm:$0xff]
          %v337 = vld [vmem:[%s326 + $0x28] sm:$0xff]
          %v338 = vld [vmem:[%s326 + $0x30] sm:$0xff]
          %v339 = vld [vmem:[%s326 + $0x38] sm:$0xff]
          %v340 = vld [vmem:[%s326 + $0x40] sm:$0xff]
          %v341 = vld [vmem:[%s326 + $0x48] sm:$0xff]
          %v342 = vld [vmem:[%s326 + $0x50] sm:$0xff]
          %v343 = vld [vmem:[%s326 + $0x58] sm:$0xff]
          %v344 = vld [vmem:[%s326 + $0x60] sm:$0xff]
          %v345 = vld [vmem:[%s326 + $0x68] sm:$0xff]
          %v346 = vld [vmem:[%s326 + $0x70] sm:$0xff]
          %v347 = vld [vmem:[%s326 + $0x78] sm:$0xff]
          %v348 = vld [vmem:[%s3] sm:$0xff]
          %v349 = vld [vmem:[%s3 + $0x8] sm:$0xff]
          %v350 = vld [vmem:[%s3 + $0x10] sm:$0xff]
          %v351 = vld [vmem:[%s3 + $0x18] sm:$0xff]
          %vm352 = vcmask 261120
          %v354 = vsel %vm352, %v332, 0
          %v357 = vsel %vm352, %v333, 0
          %v360 = vsel %vm352, %v334, 0
          %v363 = vsel %vm352, %v335, 0
          %v366 = vsel %vm352, %v336, 0
          %v369 = vsel %vm352, %v337, 0
          %v372 = vsel %vm352, %v338, 0
          %v375 = vsel %vm352, %v339, 0
          %v378 = vsel %vm352, %v340, 0
          %v381 = vsel %vm352, %v341, 0
          %v384 = vsel %vm352, %v342, 0
          %v387 = vsel %vm352, %v343, 0
          %v390 = vsel %vm352, %v344, 0
          %v393 = vsel %vm352, %v345, 0
          %v396 = vsel %vm352, %v346, 0
          %v399 = vsel %vm352, %v347, 0
          %401 = vmatprep.subr.mxu0 0.0
          %402 = vmatpush1.msra.mxu0 0.0
          %403 = vmatprep.subr.mxu0 0.0
          %404 = vmatpush1.msra.mxu0 0.0
          %405 = vmatprep.subr.mxu0 0.0
          %406 = vmatpush1.msra.mxu0 0.0
          %407 = vmatprep.subr.mxu0 0.0
          %408 = vmatpush1.msra.mxu0 0.0
          %409 = vmatprep.subr.mxu0 0.0
          %410 = vmatpush1.msra.mxu0 0.0
          %411 = vmatprep.subr.mxu0 0.0
          %412 = vmatpush1.msra.mxu0 0.0
          %413 = vmatprep.subr.mxu0 0.0
          %414 = vmatpush1.msra.mxu0 0.0
          %415 = vmatprep.subr.mxu0 0.0
          %416 = vmatpush1.msra.mxu0 0.0
          %417 = vmatprep.subr.mxu0 0.0
          %418 = vmatpush1.msra.mxu0 0.0
          %419 = vmatprep.subr.mxu0 0.0
          %420 = vmatpush1.msra.mxu0 0.0
          %421 = vmatprep.subr.mxu0 0.0
          %422 = vmatpush1.msra.mxu0 0.0
          %423 = vmatprep.subr.mxu0 0.0
          %424 = vmatpush1.msra.mxu0 0.0
          %425 = vmatprep.subr.mxu0 0.0
          %426 = vmatpush1.msra.mxu0 %v351
          %427 = vmatprep.subr.mxu0 0.0
          %428 = vmatpush1.msra.mxu0 %v350
          %429 = vmatprep.subr.mxu0 0.0
          %430 = vmatpush1.msra.mxu0 %v349
          %431 = vmatprep.subr.mxu0 0.0
          %432 = vmatpush1.msra.mxu0 %v348
          %433 = vmatprep.subr.mxu0 0.0
          %434 = vmatpush2.msra.mxu0 0.0
          %435 = vmatprep.subr.mxu0 0.0
          %436 = vmatpush2.msra.mxu0 0.0
          %437 = vmatprep.subr.mxu0 0.0
          %438 = vmatpush2.msra.mxu0 0.0
          %439 = vmatprep.subr.mxu0 0.0
          %440 = vmatpush2.msra.mxu0 0.0
          %441 = vmatprep.subr.mxu0 0.0
          %442 = vmatpush2.msra.mxu0 0.0
          %443 = vmatprep.subr.mxu0 0.0
          %444 = vmatpush2.msra.mxu0 0.0
          %445 = vmatprep.subr.mxu0 0.0
          %446 = vmatpush2.msra.mxu0 0.0
          %447 = vmatprep.subr.mxu0 0.0
          %448 = vmatpush2.msra.mxu0 0.0
          %449 = vmatprep.subr.mxu0 0.0
          %450 = vmatpush2.msra.mxu0 0.0
          %451 = vmatprep.subr.mxu0 0.0
          %452 = vmatpush2.msra.mxu0 0.0
          %453 = vmatprep.subr.mxu0 0.0
          %454 = vmatpush2.msra.mxu0 0.0
          %455 = vmatprep.subr.mxu0 0.0
          %456 = vmatpush2.msra.mxu0 0.0
          %457 = vmatprep.subr.mxu0 0.0
          %458 = vmatpush2.msra.mxu0 0.0
          %459 = vmatprep.subr.mxu0 0.0
          %460 = vmatpush2.msra.mxu0 0.0
          %461 = vmatprep.subr.mxu0 0.0
          %462 = vmatpush2.msra.mxu0 0.0
          %463 = vmatprep.subr.mxu0 0.0
          %464 = vmatpush2.msra.mxu0 0.0
          %465 = vmatprep.mubr.f32.mxu0 0.0
          %466 = vmatmul.mubr.f32.gmra.mxu0 %v354
          %v467 = vpop.f32.mrf.mxu0
          %v468 = vadd.f32 0.0, %v467
          %v469 = vpop.f32.mrf.mxu0
          %470 = vmatprep.mubr.f32.mxu0 0.0
          %471 = vmatmul.mubr.f32.gmra.mxu0 %v357
          %v472 = vpop.f32.mrf.mxu0
          %v473 = vadd.f32 0.0, %v472
          %v474 = vpop.f32.mrf.mxu0
          %475 = vmatprep.mubr.f32.mxu0 0.0
          %476 = vmatmul.mubr.f32.gmra.mxu0 %v360
          %v477 = vpop.f32.mrf.mxu0
          %v478 = vadd.f32 0.0, %v477
          %v479 = vpop.f32.mrf.mxu0
          %480 = vmatprep.mubr.f32.mxu0 0.0
          %481 = vmatmul.mubr.f32.gmra.mxu0 %v363
          %v482 = vpop.f32.mrf.mxu0
          %v483 = vadd.f32 0.0, %v482
          %v484 = vpop.f32.mrf.mxu0
          %485 = vmatprep.mubr.f32.mxu0 0.0
          %486 = vmatmul.mubr.f32.gmra.mxu0 %v366
          %v487 = vpop.f32.mrf.mxu0
          %v488 = vadd.f32 0.0, %v487
          %v489 = vpop.f32.mrf.mxu0
          %490 = vmatprep.mubr.f32.mxu0 0.0
          %491 = vmatmul.mubr.f32.gmra.mxu0 %v369
          %v492 = vpop.f32.mrf.mxu0
          %v493 = vadd.f32 0.0, %v492
          %v494 = vpop.f32.mrf.mxu0
          %495 = vmatprep.mubr.f32.mxu0 0.0
          %496 = vmatmul.mubr.f32.gmra.mxu0 %v372
          %v497 = vpop.f32.mrf.mxu0
          %v498 = vadd.f32 0.0, %v497
          %v499 = vpop.f32.mrf.mxu0
          %500 = vmatprep.mubr.f32.mxu0 0.0
          %501 = vmatmul.mubr.f32.gmra.mxu0 %v375
          %v502 = vpop.f32.mrf.mxu0
          %v503 = vadd.f32 0.0, %v502
          %v504 = vpop.f32.mrf.mxu0
          %505 = vmatprep.mubr.f32.mxu0 0.0
          %506 = vmatmul.mubr.f32.gmra.mxu0 %v378
          %v507 = vpop.f32.mrf.mxu0
          %v508 = vadd.f32 0.0, %v507
          %v509 = vpop.f32.mrf.mxu0
          %510 = vmatprep.mubr.f32.mxu0 0.0
          %511 = vmatmul.mubr.f32.gmra.mxu0 %v381
          %v512 = vpop.f32.mrf.mxu0
          %v513 = vadd.f32 0.0, %v512
          %v514 = vpop.f32.mrf.mxu0
          %515 = vmatprep.mubr.f32.mxu0 0.0
          %516 = vmatmul.mubr.f32.gmra.mxu0 %v384
          %v517 = vpop.f32.mrf.mxu0
          %v518 = vadd.f32 0.0, %v517
          %v519 = vpop.f32.mrf.mxu0
          %520 = vmatprep.mubr.f32.mxu0 0.0
          %521 = vmatmul.mubr.f32.gmra.mxu0 %v387
          %v522 = vpop.f32.mrf.mxu0
          %v523 = vadd.f32 0.0, %v522
          %v524 = vpop.f32.mrf.mxu0
          %525 = vmatprep.mubr.f32.mxu0 0.0
          %526 = vmatmul.mubr.f32.gmra.mxu0 %v390
          %v527 = vpop.f32.mrf.mxu0
          %v528 = vadd.f32 0.0, %v527
          %v529 = vpop.f32.mrf.mxu0
          %530 = vmatprep.mubr.f32.mxu0 0.0
          %531 = vmatmul.mubr.f32.gmra.mxu0 %v393
          %v532 = vpop.f32.mrf.mxu0
          %v533 = vadd.f32 0.0, %v532
          %v534 = vpop.f32.mrf.mxu0
          %535 = vmatprep.mubr.f32.mxu0 0.0
          %536 = vmatmul.mubr.f32.gmra.mxu0 %v396
          %v537 = vpop.f32.mrf.mxu0
          %v538 = vadd.f32 0.0, %v537
          %v539 = vpop.f32.mrf.mxu0
          %540 = vmatprep.mubr.f32.mxu0 0.0
          %541 = vmatmul.mubr.f32.gmra.mxu0 %v399
          %v542 = vpop.f32.mrf.mxu0
          %v543 = vadd.f32 0.0, %v542
          %v544 = vpop.f32.mrf.mxu0
          %545 = vdwg.mxu0
          %v546 = vld [vmem:[%s4] sm:$0xff]
          %v547 = vld [vmem:[%s4 + $0x8] sm:$0xff]
          %v548 = vld [vmem:[%s4 + $0x10] sm:$0xff]
          %v549 = vld [vmem:[%s4 + $0x18] sm:$0xff]
          %550 = vmatprep.subr.mxu0 0.0
          %551 = vmatpush1.msra.mxu0 0.0
          %552 = vmatprep.subr.mxu0 0.0
          %553 = vmatpush1.msra.mxu0 0.0
          %554 = vmatprep.subr.mxu0 0.0
          %555 = vmatpush1.msra.mxu0 0.0
          %556 = vmatprep.subr.mxu0 0.0
          %557 = vmatpush1.msra.mxu0 0.0
          %558 = vmatprep.subr.mxu0 0.0
          %559 = vmatpush1.msra.mxu0 0.0
          %560 = vmatprep.subr.mxu0 0.0
          %561 = vmatpush1.msra.mxu0 0.0
          %562 = vmatprep.subr.mxu0 0.0
          %563 = vmatpush1.msra.mxu0 0.0
          %564 = vmatprep.subr.mxu0 0.0
          %565 = vmatpush1.msra.mxu0 0.0
          %566 = vmatprep.subr.mxu0 0.0
          %567 = vmatpush1.msra.mxu0 0.0
          %568 = vmatprep.subr.mxu0 0.0
          %569 = vmatpush1.msra.mxu0 0.0
          %570 = vmatprep.subr.mxu0 0.0
          %571 = vmatpush1.msra.mxu0 0.0
          %572 = vmatprep.subr.mxu0 0.0
          %573 = vmatpush1.msra.mxu0 0.0
          %574 = vmatprep.subr.mxu0 0.0
          %575 = vmatpush1.msra.mxu0 %v549
          %576 = vmatprep.subr.mxu0 0.0
          %577 = vmatpush1.msra.mxu0 %v548
          %578 = vmatprep.subr.mxu0 0.0
          %579 = vmatpush1.msra.mxu0 %v547
          %580 = vmatprep.subr.mxu0 0.0
          %581 = vmatpush1.msra.mxu0 %v546
          %582 = vmatprep.subr.mxu0 0.0
          %583 = vmatpush2.msra.mxu0 0.0
          %584 = vmatprep.subr.mxu0 0.0
          %585 = vmatpush2.msra.mxu0 0.0
          %586 = vmatprep.subr.mxu0 0.0
          %587 = vmatpush2.msra.mxu0 0.0
          %588 = vmatprep.subr.mxu0 0.0
          %589 = vmatpush2.msra.mxu0 0.0
          %590 = vmatprep.subr.mxu0 0.0
          %591 = vmatpush2.msra.mxu0 0.0
          %592 = vmatprep.subr.mxu0 0.0
          %593 = vmatpush2.msra.mxu0 0.0
          %594 = vmatprep.subr.mxu0 0.0
          %595 = vmatpush2.msra.mxu0 0.0
          %596 = vmatprep.subr.mxu0 0.0
          %597 = vmatpush2.msra.mxu0 0.0
          %598 = vmatprep.subr.mxu0 0.0
          %599 = vmatpush2.msra.mxu0 0.0
          %600 = vmatprep.subr.mxu0 0.0
          %601 = vmatpush2.msra.mxu0 0.0
          %602 = vmatprep.subr.mxu0 0.0
          %603 = vmatpush2.msra.mxu0 0.0
          %604 = vmatprep.subr.mxu0 0.0
          %605 = vmatpush2.msra.mxu0 0.0
          %606 = vmatprep.subr.mxu0 0.0
          %607 = vmatpush2.msra.mxu0 0.0
          %608 = vmatprep.subr.mxu0 0.0
          %609 = vmatpush2.msra.mxu0 0.0
          %610 = vmatprep.subr.mxu0 0.0
          %611 = vmatpush2.msra.mxu0 0.0
          %612 = vmatprep.subr.mxu0 0.0
          %613 = vmatpush2.msra.mxu0 0.0
          %614 = vmatprep.mubr.f32.mxu0 0.0
          %615 = vmatmul.mubr.f32.gmra.mxu0 %v354
          %v616 = vpop.f32.mrf.mxu0
          %v617 = vadd.f32 0.0, %v616
          %v618 = vpop.f32.mrf.mxu0
          %619 = vmatprep.mubr.f32.mxu0 0.0
          %620 = vmatmul.mubr.f32.gmra.mxu0 %v357
          %v621 = vpop.f32.mrf.mxu0
          %v622 = vadd.f32 0.0, %v621
          %v623 = vpop.f32.mrf.mxu0
          %624 = vmatprep.mubr.f32.mxu0 0.0
          %625 = vmatmul.mubr.f32.gmra.mxu0 %v360
          %v626 = vpop.f32.mrf.mxu0
          %v627 = vadd.f32 0.0, %v626
          %v628 = vpop.f32.mrf.mxu0
          %629 = vmatprep.mubr.f32.mxu0 0.0
          %630 = vmatmul.mubr.f32.gmra.mxu0 %v363
          %v631 = vpop.f32.mrf.mxu0
          %v632 = vadd.f32 0.0, %v631
          %v633 = vpop.f32.mrf.mxu0
          %634 = vmatprep.mubr.f32.mxu0 0.0
          %635 = vmatmul.mubr.f32.gmra.mxu0 %v366
          %v636 = vpop.f32.mrf.mxu0
          %v637 = vadd.f32 0.0, %v636
          %v638 = vpop.f32.mrf.mxu0
          %639 = vmatprep.mubr.f32.mxu0 0.0
          %640 = vmatmul.mubr.f32.gmra.mxu0 %v369
          %v641 = vpop.f32.mrf.mxu0
          %v642 = vadd.f32 0.0, %v641
          %v643 = vpop.f32.mrf.mxu0
          %644 = vmatprep.mubr.f32.mxu0 0.0
          %645 = vmatmul.mubr.f32.gmra.mxu0 %v372
          %v646 = vpop.f32.mrf.mxu0
          %v647 = vadd.f32 0.0, %v646
          %v648 = vpop.f32.mrf.mxu0
          %649 = vmatprep.mubr.f32.mxu0 0.0
          %650 = vmatmul.mubr.f32.gmra.mxu0 %v375
          %v651 = vpop.f32.mrf.mxu0
          %v652 = vadd.f32 0.0, %v651
          %v653 = vpop.f32.mrf.mxu0
          %654 = vmatprep.mubr.f32.mxu0 0.0
          %655 = vmatmul.mubr.f32.gmra.mxu0 %v378
          %v656 = vpop.f32.mrf.mxu0
          %v657 = vadd.f32 0.0, %v656
          %v658 = vpop.f32.mrf.mxu0
          %659 = vmatprep.mubr.f32.mxu0 0.0
          %660 = vmatmul.mubr.f32.gmra.mxu0 %v381
          %v661 = vpop.f32.mrf.mxu0
          %v662 = vadd.f32 0.0, %v661
          %v663 = vpop.f32.mrf.mxu0
          %664 = vmatprep.mubr.f32.mxu0 0.0
          %665 = vmatmul.mubr.f32.gmra.mxu0 %v384
          %v666 = vpop.f32.mrf.mxu0
          %v667 = vadd.f32 0.0, %v666
          %v668 = vpop.f32.mrf.mxu0
          %669 = vmatprep.mubr.f32.mxu0 0.0
          %670 = vmatmul.mubr.f32.gmra.mxu0 %v387
          %v671 = vpop.f32.mrf.mxu0
          %v672 = vadd.f32 0.0, %v671
          %v673 = vpop.f32.mrf.mxu0
          %674 = vmatprep.mubr.f32.mxu0 0.0
          %675 = vmatmul.mubr.f32.gmra.mxu0 %v390
          %v676 = vpop.f32.mrf.mxu0
          %v677 = vadd.f32 0.0, %v676
          %v678 = vpop.f32.mrf.mxu0
          %679 = vmatprep.mubr.f32.mxu0 0.0
          %680 = vmatmul.mubr.f32.gmra.mxu0 %v393
          %v681 = vpop.f32.mrf.mxu0
          %v682 = vadd.f32 0.0, %v681
          %v683 = vpop.f32.mrf.mxu0
          %684 = vmatprep.mubr.f32.mxu0 0.0
          %685 = vmatmul.mubr.f32.gmra.mxu0 %v396
          %v686 = vpop.f32.mrf.mxu0
          %v687 = vadd.f32 0.0, %v686
          %v688 = vpop.f32.mrf.mxu0
          %689 = vmatprep.mubr.f32.mxu0 0.0
          %690 = vmatmul.mubr.f32.gmra.mxu0 %v399
          %v691 = vpop.f32.mrf.mxu0
          %v692 = vadd.f32 0.0, %v691
          %v693 = vpop.f32.mrf.mxu0
          %694 = vdwg.mxu0
          %711 = vrot.lane.b32.xlu0 %v468, 112
          %v712 = vpop.permute.xlu0 %711
          %713 = vrot.lane.b32.xlu0 %v473, 112
          %v714 = vpop.permute.xlu0 %713
          %715 = vrot.lane.b32.xlu0 %v478, 112
          %v716 = vpop.permute.xlu0 %715
          %717 = vrot.lane.b32.xlu0 %v483, 112
          %v718 = vpop.permute.xlu0 %717
          %719 = vrot.lane.b32.xlu0 %v488, 112
          %v720 = vpop.permute.xlu0 %719
          %721 = vrot.lane.b32.xlu0 %v493, 112
          %v722 = vpop.permute.xlu0 %721
          %723 = vrot.lane.b32.xlu0 %v498, 112
          %v724 = vpop.permute.xlu0 %723
          %725 = vrot.lane.b32.xlu0 %v503, 112
          %v726 = vpop.permute.xlu0 %725
          %727 = vrot.lane.b32.xlu0 %v508, 112
          %v728 = vpop.permute.xlu0 %727
          %729 = vrot.lane.b32.xlu0 %v513, 112
          %v730 = vpop.permute.xlu0 %729
          %731 = vrot.lane.b32.xlu0 %v518, 112
          %v732 = vpop.permute.xlu0 %731
          %733 = vrot.lane.b32.xlu0 %v523, 112
          %v734 = vpop.permute.xlu0 %733
          %735 = vrot.lane.b32.xlu0 %v528, 112
          %v736 = vpop.permute.xlu0 %735
          %737 = vrot.lane.b32.xlu0 %v533, 112
          %v738 = vpop.permute.xlu0 %737
          %739 = vrot.lane.b32.xlu0 %v538, 112
          %v740 = vpop.permute.xlu0 %739
          %741 = vrot.lane.b32.xlu0 %v543, 112
          %v742 = vpop.permute.xlu0 %741
          %759 = vrot.lane.b32.xlu0 %v468, 96
          %v760 = vpop.permute.xlu0 %759
          %761 = vrot.lane.b32.xlu0 %v473, 96
          %v762 = vpop.permute.xlu0 %761
          %763 = vrot.lane.b32.xlu0 %v478, 96
          %v764 = vpop.permute.xlu0 %763
          %765 = vrot.lane.b32.xlu0 %v483, 96
          %v766 = vpop.permute.xlu0 %765
          %767 = vrot.lane.b32.xlu0 %v488, 96
          %v768 = vpop.permute.xlu0 %767
          %769 = vrot.lane.b32.xlu0 %v493, 96
          %v770 = vpop.permute.xlu0 %769
          %771 = vrot.lane.b32.xlu0 %v498, 96
          %v772 = vpop.permute.xlu0 %771
          %773 = vrot.lane.b32.xlu0 %v503, 96
          %v774 = vpop.permute.xlu0 %773
          %775 = vrot.lane.b32.xlu0 %v508, 96
          %v776 = vpop.permute.xlu0 %775
          %777 = vrot.lane.b32.xlu0 %v513, 96
          %v778 = vpop.permute.xlu0 %777
          %779 = vrot.lane.b32.xlu0 %v518, 96
          %v780 = vpop.permute.xlu0 %779
          %781 = vrot.lane.b32.xlu0 %v523, 96
          %v782 = vpop.permute.xlu0 %781
          %783 = vrot.lane.b32.xlu0 %v528, 96
          %v784 = vpop.permute.xlu0 %783
          %785 = vrot.lane.b32.xlu0 %v533, 96
          %v786 = vpop.permute.xlu0 %785
          %787 = vrot.lane.b32.xlu0 %v538, 96
          %v788 = vpop.permute.xlu0 %787
          %789 = vrot.lane.b32.xlu0 %v543, 96
          %v790 = vpop.permute.xlu0 %789
          %807 = vrot.lane.b32.xlu0 %v468, 80
          %v808 = vpop.permute.xlu0 %807
          %809 = vrot.lane.b32.xlu0 %v473, 80
          %v810 = vpop.permute.xlu0 %809
          %811 = vrot.lane.b32.xlu0 %v478, 80
          %v812 = vpop.permute.xlu0 %811
          %813 = vrot.lane.b32.xlu0 %v483, 80
          %v814 = vpop.permute.xlu0 %813
          %815 = vrot.lane.b32.xlu0 %v488, 80
          %v816 = vpop.permute.xlu0 %815
          %817 = vrot.lane.b32.xlu0 %v493, 80
          %v818 = vpop.permute.xlu0 %817
          %819 = vrot.lane.b32.xlu0 %v498, 80
          %v820 = vpop.permute.xlu0 %819
          %821 = vrot.lane.b32.xlu0 %v503, 80
          %v822 = vpop.permute.xlu0 %821
          %823 = vrot.lane.b32.xlu0 %v508, 80
          %v824 = vpop.permute.xlu0 %823
          %825 = vrot.lane.b32.xlu0 %v513, 80
          %v826 = vpop.permute.xlu0 %825
          %827 = vrot.lane.b32.xlu0 %v518, 80
          %v828 = vpop.permute.xlu0 %827
          %829 = vrot.lane.b32.xlu0 %v523, 80
          %v830 = vpop.permute.xlu0 %829
          %831 = vrot.lane.b32.xlu0 %v528, 80
          %v832 = vpop.permute.xlu0 %831
          %833 = vrot.lane.b32.xlu0 %v533, 80
          %v834 = vpop.permute.xlu0 %833
          %835 = vrot.lane.b32.xlu0 %v538, 80
          %v836 = vpop.permute.xlu0 %835
          %837 = vrot.lane.b32.xlu0 %v543, 80
          %v838 = vpop.permute.xlu0 %837
          %v855 = vcombine.low %v468, %v760
          %v856 = vcombine.high %v468, %v760
          %v858 = vunpack.c.l.s4 1983009808
          %v859 = vunpack.c.0.s8 %v858
          %v860 = vlaneseq
          %v861 = vshrl.u32 %v860, 7
          %v862 = vsub.s32 %v859, %v861
          %v863 = vrot.slane %v855, %v862
          %v865 = vunpack.c.l.s4 1983009808
          %v866 = vunpack.c.0.s8 %v865
          %v867 = vlaneseq
          %v868 = vshrl.u32 %v867, 7
          %v869 = vsub.s32 %v866, %v868
          %v870 = vrot.slane %v856, %v869
          %v871 = vcombine.low %v712, %v808
          %v872 = vcombine.high %v712, %v808
          %v874 = vunpack.c.l.s4 1983009808
          %v875 = vunpack.c.0.s8 %v874
          %v876 = vlaneseq
          %v877 = vshrl.u32 %v876, 7
          %v878 = vsub.s32 %v875, %v877
          %v879 = vrot.slane %v871, %v878
          %v881 = vunpack.c.l.s4 1983009808
          %v882 = vunpack.c.0.s8 %v881
          %v883 = vlaneseq
          %v884 = vshrl.u32 %v883, 7
          %v885 = vsub.s32 %v882, %v884
          %v886 = vrot.slane %v872, %v885
          %v887 = vcombine.low %v863, %v879
          %v888 = vcombine.high %v863, %v879
          %v890 = vunpack.c.l.s4 1934713408
          %v891 = vunpack.c.0.s8 %v890
          %v892 = vlaneseq
          %v893 = vshrl.u32 %v892, 7
          %v894 = vsub.s32 %v891, %v893
          %v895 = vrot.slane %v887, %v894
          %v897 = vunpack.c.l.s4 1934713408
          %v898 = vunpack.c.0.s8 %v897
          %v899 = vlaneseq
          %v900 = vshrl.u32 %v899, 7
          %v901 = vsub.s32 %v898, %v900
          %v902 = vrot.slane %v888, %v901
          %v903 = vcombine.low %v870, %v886
          %v904 = vcombine.high %v870, %v886
          %v906 = vunpack.c.l.s4 1934713408
          %v907 = vunpack.c.0.s8 %v906
          %v908 = vlaneseq
          %v909 = vshrl.u32 %v908, 7
          %v910 = vsub.s32 %v907, %v909
          %v911 = vrot.slane %v903, %v910
          %v913 = vunpack.c.l.s4 1934713408
          %v914 = vunpack.c.0.s8 %v913
          %v915 = vlaneseq
          %v916 = vshrl.u32 %v915, 7
          %v917 = vsub.s32 %v914, %v916
          %v918 = vrot.slane %v904, %v917
          %v919 = vcombine.high %v895, 0.0
          %v920 = vcombine.high %v902, 0.0
          %v921 = vcombine.high %v911, 0.0
          %v922 = vcombine.high %v918, 0.0
          %v923 = vcombine.low %v473, %v762
          %v924 = vcombine.high %v473, %v762
          %v926 = vunpack.c.l.s4 1983009808
          %v927 = vunpack.c.0.s8 %v926
          %v928 = vlaneseq
          %v929 = vshrl.u32 %v928, 7
          %v930 = vsub.s32 %v927, %v929
          %v931 = vrot.slane %v923, %v930
          %v933 = vunpack.c.l.s4 1983009808
          %v934 = vunpack.c.0.s8 %v933
          %v935 = vlaneseq
          %v936 = vshrl.u32 %v935, 7
          %v937 = vsub.s32 %v934, %v936
          %v938 = vrot.slane %v924, %v937
          %v939 = vcombine.low %v714, %v810
          %v940 = vcombine.high %v714, %v810
          %v942 = vunpack.c.l.s4 1983009808
          %v943 = vunpack.c.0.s8 %v942
          %v944 = vlaneseq
          %v945 = vshrl.u32 %v944, 7
          %v946 = vsub.s32 %v943, %v945
          %v947 = vrot.slane %v939, %v946
          %v949 = vunpack.c.l.s4 1983009808
          %v950 = vunpack.c.0.s8 %v949
          %v951 = vlaneseq
          %v952 = vshrl.u32 %v951, 7
          %v953 = vsub.s32 %v950, %v952
          %v954 = vrot.slane %v940, %v953
          %v955 = vcombine.low %v931, %v947
          %v956 = vcombine.high %v931, %v947
          %v958 = vunpack.c.l.s4 1934713408
          %v959 = vunpack.c.0.s8 %v958
          %v960 = vlaneseq
          %v961 = vshrl.u32 %v960, 7
          %v962 = vsub.s32 %v959, %v961
          %v963 = vrot.slane %v955, %v962
          %v965 = vunpack.c.l.s4 1934713408
          %v966 = vunpack.c.0.s8 %v965
          %v967 = vlaneseq
          %v968 = vshrl.u32 %v967, 7
          %v969 = vsub.s32 %v966, %v968
          %v970 = vrot.slane %v956, %v969
          %v971 = vcombine.low %v938, %v954
          %v972 = vcombine.high %v938, %v954
          %v974 = vunpack.c.l.s4 1934713408
          %v975 = vunpack.c.0.s8 %v974
          %v976 = vlaneseq
          %v977 = vshrl.u32 %v976, 7
          %v978 = vsub.s32 %v975, %v977
          %v979 = vrot.slane %v971, %v978
          %v981 = vunpack.c.l.s4 1934713408
          %v982 = vunpack.c.0.s8 %v981
          %v983 = vlaneseq
          %v984 = vshrl.u32 %v983, 7
          %v985 = vsub.s32 %v982, %v984
          %v986 = vrot.slane %v972, %v985
          %v987 = vcombine.high %v963, 0.0
          %v988 = vcombine.high %v970, 0.0
          %v989 = vcombine.high %v979, 0.0
          %v990 = vcombine.high %v986, 0.0
          %v991 = vcombine.low %v478, %v764
          %v992 = vcombine.high %v478, %v764
          %v994 = vunpack.c.l.s4 1983009808
          %v995 = vunpack.c.0.s8 %v994
          %v996 = vlaneseq
          %v997 = vshrl.u32 %v996, 7
          %v998 = vsub.s32 %v995, %v997
          %v999 = vrot.slane %v991, %v998
          %v1001 = vunpack.c.l.s4 1983009808
          %v1002 = vunpack.c.0.s8 %v1001
          %v1003 = vlaneseq
          %v1004 = vshrl.u32 %v1003, 7
          %v1005 = vsub.s32 %v1002, %v1004
          %v1006 = vrot.slane %v992, %v1005
          %v1007 = vcombine.low %v716, %v812
          %v1008 = vcombine.high %v716, %v812
          %v1010 = vunpack.c.l.s4 1983009808
          %v1011 = vunpack.c.0.s8 %v1010
          %v1012 = vlaneseq
          %v1013 = vshrl.u32 %v1012, 7
          %v1014 = vsub.s32 %v1011, %v1013
          %v1015 = vrot.slane %v1007, %v1014
          %v1017 = vunpack.c.l.s4 1983009808
          %v1018 = vunpack.c.0.s8 %v1017
          %v1019 = vlaneseq
          %v1020 = vshrl.u32 %v1019, 7
          %v1021 = vsub.s32 %v1018, %v1020
          %v1022 = vrot.slane %v1008, %v1021
          %v1023 = vcombine.low %v999, %v1015
          %v1024 = vcombine.high %v999, %v1015
          %v1026 = vunpack.c.l.s4 1934713408
          %v1027 = vunpack.c.0.s8 %v1026
          %v1028 = vlaneseq
          %v1029 = vshrl.u32 %v1028, 7
          %v1030 = vsub.s32 %v1027, %v1029
          %v1031 = vrot.slane %v1023, %v1030
          %v1033 = vunpack.c.l.s4 1934713408
          %v1034 = vunpack.c.0.s8 %v1033
          %v1035 = vlaneseq
          %v1036 = vshrl.u32 %v1035, 7
          %v1037 = vsub.s32 %v1034, %v1036
          %v1038 = vrot.slane %v1024, %v1037
          %v1039 = vcombine.low %v1006, %v1022
          %v1040 = vcombine.high %v1006, %v1022
          %v1042 = vunpack.c.l.s4 1934713408
          %v1043 = vunpack.c.0.s8 %v1042
          %v1044 = vlaneseq
          %v1045 = vshrl.u32 %v1044, 7
          %v1046 = vsub.s32 %v1043, %v1045
          %v1047 = vrot.slane %v1039, %v1046
          %v1049 = vunpack.c.l.s4 1934713408
          %v1050 = vunpack.c.0.s8 %v1049
          %v1051 = vlaneseq
          %v1052 = vshrl.u32 %v1051, 7
          %v1053 = vsub.s32 %v1050, %v1052
          %v1054 = vrot.slane %v1040, %v1053
          %v1055 = vcombine.high %v1031, 0.0
          %v1056 = vcombine.high %v1038, 0.0
          %v1057 = vcombine.high %v1047, 0.0
          %v1058 = vcombine.high %v1054, 0.0
          %v1059 = vcombine.low %v483, %v766
          %v1060 = vcombine.high %v483, %v766
          %v1062 = vunpack.c.l.s4 1983009808
          %v1063 = vunpack.c.0.s8 %v1062
          %v1064 = vlaneseq
          %v1065 = vshrl.u32 %v1064, 7
          %v1066 = vsub.s32 %v1063, %v1065
          %v1067 = vrot.slane %v1059, %v1066
          %v1069 = vunpack.c.l.s4 1983009808
          %v1070 = vunpack.c.0.s8 %v1069
          %v1071 = vlaneseq
          %v1072 = vshrl.u32 %v1071, 7
          %v1073 = vsub.s32 %v1070, %v1072
          %v1074 = vrot.slane %v1060, %v1073
          %v1075 = vcombine.low %v718, %v814
          %v1076 = vcombine.high %v718, %v814
          %v1078 = vunpack.c.l.s4 1983009808
          %v1079 = vunpack.c.0.s8 %v1078
          %v1080 = vlaneseq
          %v1081 = vshrl.u32 %v1080, 7
          %v1082 = vsub.s32 %v1079, %v1081
          %v1083 = vrot.slane %v1075, %v1082
          %v1085 = vunpack.c.l.s4 1983009808
          %v1086 = vunpack.c.0.s8 %v1085
          %v1087 = vlaneseq
          %v1088 = vshrl.u32 %v1087, 7
          %v1089 = vsub.s32 %v1086, %v1088
          %v1090 = vrot.slane %v1076, %v1089
          %v1091 = vcombine.low %v1067, %v1083
          %v1092 = vcombine.high %v1067, %v1083
          %v1094 = vunpack.c.l.s4 1934713408
          %v1095 = vunpack.c.0.s8 %v1094
          %v1096 = vlaneseq
          %v1097 = vshrl.u32 %v1096, 7
          %v1098 = vsub.s32 %v1095, %v1097
          %v1099 = vrot.slane %v1091, %v1098
          %v1101 = vunpack.c.l.s4 1934713408
          %v1102 = vunpack.c.0.s8 %v1101
          %v1103 = vlaneseq
          %v1104 = vshrl.u32 %v1103, 7
          %v1105 = vsub.s32 %v1102, %v1104
          %v1106 = vrot.slane %v1092, %v1105
          %v1107 = vcombine.low %v1074, %v1090
          %v1108 = vcombine.high %v1074, %v1090
          %v1110 = vunpack.c.l.s4 1934713408
          %v1111 = vunpack.c.0.s8 %v1110
          %v1112 = vlaneseq
          %v1113 = vshrl.u32 %v1112, 7
          %v1114 = vsub.s32 %v1111, %v1113
          %v1115 = vrot.slane %v1107, %v1114
          %v1117 = vunpack.c.l.s4 1934713408
          %v1118 = vunpack.c.0.s8 %v1117
          %v1119 = vlaneseq
          %v1120 = vshrl.u32 %v1119, 7
          %v1121 = vsub.s32 %v1118, %v1120
          %v1122 = vrot.slane %v1108, %v1121
          %v1123 = vcombine.high %v1099, 0.0
          %v1124 = vcombine.high %v1106, 0.0
          %v1125 = vcombine.high %v1115, 0.0
          %v1126 = vcombine.high %v1122, 0.0
          %v1127 = vcombine.low %v488, %v768
          %v1128 = vcombine.high %v488, %v768
          %v1130 = vunpack.c.l.s4 1983009808
          %v1131 = vunpack.c.0.s8 %v1130
          %v1132 = vlaneseq
          %v1133 = vshrl.u32 %v1132, 7
          %v1134 = vsub.s32 %v1131, %v1133
          %v1135 = vrot.slane %v1127, %v1134
          %v1137 = vunpack.c.l.s4 1983009808
          %v1138 = vunpack.c.0.s8 %v1137
          %v1139 = vlaneseq
          %v1140 = vshrl.u32 %v1139, 7
          %v1141 = vsub.s32 %v1138, %v1140
          %v1142 = vrot.slane %v1128, %v1141
          %v1143 = vcombine.low %v720, %v816
          %v1144 = vcombine.high %v720, %v816
          %v1146 = vunpack.c.l.s4 1983009808
          %v1147 = vunpack.c.0.s8 %v1146
          %v1148 = vlaneseq
          %v1149 = vshrl.u32 %v1148, 7
          %v1150 = vsub.s32 %v1147, %v1149
          %v1151 = vrot.slane %v1143, %v1150
          %v1153 = vunpack.c.l.s4 1983009808
          %v1154 = vunpack.c.0.s8 %v1153
          %v1155 = vlaneseq
          %v1156 = vshrl.u32 %v1155, 7
          %v1157 = vsub.s32 %v1154, %v1156
          %v1158 = vrot.slane %v1144, %v1157
          %v1159 = vcombine.low %v1135, %v1151
          %v1160 = vcombine.high %v1135, %v1151
          %v1162 = vunpack.c.l.s4 1934713408
          %v1163 = vunpack.c.0.s8 %v1162
          %v1164 = vlaneseq
          %v1165 = vshrl.u32 %v1164, 7
          %v1166 = vsub.s32 %v1163, %v1165
          %v1167 = vrot.slane %v1159, %v1166
          %v1169 = vunpack.c.l.s4 1934713408
          %v1170 = vunpack.c.0.s8 %v1169
          %v1171 = vlaneseq
          %v1172 = vshrl.u32 %v1171, 7
          %v1173 = vsub.s32 %v1170, %v1172
          %v1174 = vrot.slane %v1160, %v1173
          %v1175 = vcombine.low %v1142, %v1158
          %v1176 = vcombine.high %v1142, %v1158
          %v1178 = vunpack.c.l.s4 1934713408
          %v1179 = vunpack.c.0.s8 %v1178
          %v1180 = vlaneseq
          %v1181 = vshrl.u32 %v1180, 7
          %v1182 = vsub.s32 %v1179, %v1181
          %v1183 = vrot.slane %v1175, %v1182
          %v1185 = vunpack.c.l.s4 1934713408
          %v1186 = vunpack.c.0.s8 %v1185
          %v1187 = vlaneseq
          %v1188 = vshrl.u32 %v1187, 7
          %v1189 = vsub.s32 %v1186, %v1188
          %v1190 = vrot.slane %v1176, %v1189
          %v1191 = vcombine.high %v1167, 0.0
          %v1192 = vcombine.high %v1174, 0.0
          %v1193 = vcombine.high %v1183, 0.0
          %v1194 = vcombine.high %v1190, 0.0
          %v1195 = vcombine.low %v493, %v770
          %v1196 = vcombine.high %v493, %v770
          %v1198 = vunpack.c.l.s4 1983009808
          %v1199 = vunpack.c.0.s8 %v1198
          %v1200 = vlaneseq
          %v1201 = vshrl.u32 %v1200, 7
          %v1202 = vsub.s32 %v1199, %v1201
          %v1203 = vrot.slane %v1195, %v1202
          %v1205 = vunpack.c.l.s4 1983009808
          %v1206 = vunpack.c.0.s8 %v1205
          %v1207 = vlaneseq
          %v1208 = vshrl.u32 %v1207, 7
          %v1209 = vsub.s32 %v1206, %v1208
          %v1210 = vrot.slane %v1196, %v1209
          %v1211 = vcombine.low %v722, %v818
          %v1212 = vcombine.high %v722, %v818
          %v1214 = vunpack.c.l.s4 1983009808
          %v1215 = vunpack.c.0.s8 %v1214
          %v1216 = vlaneseq
          %v1217 = vshrl.u32 %v1216, 7
          %v1218 = vsub.s32 %v1215, %v1217
          %v1219 = vrot.slane %v1211, %v1218
          %v1221 = vunpack.c.l.s4 1983009808
          %v1222 = vunpack.c.0.s8 %v1221
          %v1223 = vlaneseq
          %v1224 = vshrl.u32 %v1223, 7
          %v1225 = vsub.s32 %v1222, %v1224
          %v1226 = vrot.slane %v1212, %v1225
          %v1227 = vcombine.low %v1203, %v1219
          %v1228 = vcombine.high %v1203, %v1219
          %v1230 = vunpack.c.l.s4 1934713408
          %v1231 = vunpack.c.0.s8 %v1230
          %v1232 = vlaneseq
          %v1233 = vshrl.u32 %v1232, 7
          %v1234 = vsub.s32 %v1231, %v1233
          %v1235 = vrot.slane %v1227, %v1234
          %v1237 = vunpack.c.l.s4 1934713408
          %v1238 = vunpack.c.0.s8 %v1237
          %v1239 = vlaneseq
          %v1240 = vshrl.u32 %v1239, 7
          %v1241 = vsub.s32 %v1238, %v1240
          %v1242 = vrot.slane %v1228, %v1241
          %v1243 = vcombine.low %v1210, %v1226
          %v1244 = vcombine.high %v1210, %v1226
          %v1246 = vunpack.c.l.s4 1934713408
          %v1247 = vunpack.c.0.s8 %v1246
          %v1248 = vlaneseq
          %v1249 = vshrl.u32 %v1248, 7
          %v1250 = vsub.s32 %v1247, %v1249
          %v1251 = vrot.slane %v1243, %v1250
          %v1253 = vunpack.c.l.s4 1934713408
          %v1254 = vunpack.c.0.s8 %v1253
          %v1255 = vlaneseq
          %v1256 = vshrl.u32 %v1255, 7
          %v1257 = vsub.s32 %v1254, %v1256
          %v1258 = vrot.slane %v1244, %v1257
          %v1259 = vcombine.high %v1235, 0.0
          %v1260 = vcombine.high %v1242, 0.0
          %v1261 = vcombine.high %v1251, 0.0
          %v1262 = vcombine.high %v1258, 0.0
          %v1263 = vcombine.low %v498, %v772
          %v1264 = vcombine.high %v498, %v772
          %v1266 = vunpack.c.l.s4 1983009808
          %v1267 = vunpack.c.0.s8 %v1266
          %v1268 = vlaneseq
          %v1269 = vshrl.u32 %v1268, 7
          %v1270 = vsub.s32 %v1267, %v1269
          %v1271 = vrot.slane %v1263, %v1270
          %v1273 = vunpack.c.l.s4 1983009808
          %v1274 = vunpack.c.0.s8 %v1273
          %v1275 = vlaneseq
          %v1276 = vshrl.u32 %v1275, 7
          %v1277 = vsub.s32 %v1274, %v1276
          %v1278 = vrot.slane %v1264, %v1277
          %v1279 = vcombine.low %v724, %v820
          %v1280 = vcombine.high %v724, %v820
          %v1282 = vunpack.c.l.s4 1983009808
          %v1283 = vunpack.c.0.s8 %v1282
          %v1284 = vlaneseq
          %v1285 = vshrl.u32 %v1284, 7
          %v1286 = vsub.s32 %v1283, %v1285
          %v1287 = vrot.slane %v1279, %v1286
          %v1289 = vunpack.c.l.s4 1983009808
          %v1290 = vunpack.c.0.s8 %v1289
          %v1291 = vlaneseq
          %v1292 = vshrl.u32 %v1291, 7
          %v1293 = vsub.s32 %v1290, %v1292
          %v1294 = vrot.slane %v1280, %v1293
          %v1295 = vcombine.low %v1271, %v1287
          %v1296 = vcombine.high %v1271, %v1287
          %v1298 = vunpack.c.l.s4 1934713408
          %v1299 = vunpack.c.0.s8 %v1298
          %v1300 = vlaneseq
          %v1301 = vshrl.u32 %v1300, 7
          %v1302 = vsub.s32 %v1299, %v1301
          %v1303 = vrot.slane %v1295, %v1302
          %v1305 = vunpack.c.l.s4 1934713408
          %v1306 = vunpack.c.0.s8 %v1305
          %v1307 = vlaneseq
          %v1308 = vshrl.u32 %v1307, 7
          %v1309 = vsub.s32 %v1306, %v1308
          %v1310 = vrot.slane %v1296, %v1309
          %v1311 = vcombine.low %v1278, %v1294
          %v1312 = vcombine.high %v1278, %v1294
          %v1314 = vunpack.c.l.s4 1934713408
          %v1315 = vunpack.c.0.s8 %v1314
          %v1316 = vlaneseq
          %v1317 = vshrl.u32 %v1316, 7
          %v1318 = vsub.s32 %v1315, %v1317
          %v1319 = vrot.slane %v1311, %v1318
          %v1321 = vunpack.c.l.s4 1934713408
          %v1322 = vunpack.c.0.s8 %v1321
          %v1323 = vlaneseq
          %v1324 = vshrl.u32 %v1323, 7
          %v1325 = vsub.s32 %v1322, %v1324
          %v1326 = vrot.slane %v1312, %v1325
          %v1327 = vcombine.high %v1303, 0.0
          %v1328 = vcombine.high %v1310, 0.0
          %v1329 = vcombine.high %v1319, 0.0
          %v1330 = vcombine.high %v1326, 0.0
          %v1331 = vcombine.low %v503, %v774
          %v1332 = vcombine.high %v503, %v774
          %v1334 = vunpack.c.l.s4 1983009808
          %v1335 = vunpack.c.0.s8 %v1334
          %v1336 = vlaneseq
          %v1337 = vshrl.u32 %v1336, 7
          %v1338 = vsub.s32 %v1335, %v1337
          %v1339 = vrot.slane %v1331, %v1338
          %v1341 = vunpack.c.l.s4 1983009808
          %v1342 = vunpack.c.0.s8 %v1341
          %v1343 = vlaneseq
          %v1344 = vshrl.u32 %v1343, 7
          %v1345 = vsub.s32 %v1342, %v1344
          %v1346 = vrot.slane %v1332, %v1345
          %v1347 = vcombine.low %v726, %v822
          %v1348 = vcombine.high %v726, %v822
          %v1350 = vunpack.c.l.s4 1983009808
          %v1351 = vunpack.c.0.s8 %v1350
          %v1352 = vlaneseq
          %v1353 = vshrl.u32 %v1352, 7
          %v1354 = vsub.s32 %v1351, %v1353
          %v1355 = vrot.slane %v1347, %v1354
          %v1357 = vunpack.c.l.s4 1983009808
          %v1358 = vunpack.c.0.s8 %v1357
          %v1359 = vlaneseq
          %v1360 = vshrl.u32 %v1359, 7
          %v1361 = vsub.s32 %v1358, %v1360
          %v1362 = vrot.slane %v1348, %v1361
          %v1363 = vcombine.low %v1339, %v1355
          %v1364 = vcombine.high %v1339, %v1355
          %v1366 = vunpack.c.l.s4 1934713408
          %v1367 = vunpack.c.0.s8 %v1366
          %v1368 = vlaneseq
          %v1369 = vshrl.u32 %v1368, 7
          %v1370 = vsub.s32 %v1367, %v1369
          %v1371 = vrot.slane %v1363, %v1370
          %v1373 = vunpack.c.l.s4 1934713408
          %v1374 = vunpack.c.0.s8 %v1373
          %v1375 = vlaneseq
          %v1376 = vshrl.u32 %v1375, 7
          %v1377 = vsub.s32 %v1374, %v1376
          %v1378 = vrot.slane %v1364, %v1377
          %v1379 = vcombine.low %v1346, %v1362
          %v1380 = vcombine.high %v1346, %v1362
          %v1382 = vunpack.c.l.s4 1934713408
          %v1383 = vunpack.c.0.s8 %v1382
          %v1384 = vlaneseq
          %v1385 = vshrl.u32 %v1384, 7
          %v1386 = vsub.s32 %v1383, %v1385
          %v1387 = vrot.slane %v1379, %v1386
          %v1389 = vunpack.c.l.s4 1934713408
          %v1390 = vunpack.c.0.s8 %v1389
          %v1391 = vlaneseq
          %v1392 = vshrl.u32 %v1391, 7
          %v1393 = vsub.s32 %v1390, %v1392
          %v1394 = vrot.slane %v1380, %v1393
          %v1395 = vcombine.high %v1371, 0.0
          %v1396 = vcombine.high %v1378, 0.0
          %v1397 = vcombine.high %v1387, 0.0
          %v1398 = vcombine.high %v1394, 0.0
          %v1399 = vcombine.low %v508, %v776
          %v1400 = vcombine.high %v508, %v776
          %v1402 = vunpack.c.l.s4 1983009808
          %v1403 = vunpack.c.0.s8 %v1402
          %v1404 = vlaneseq
          %v1405 = vshrl.u32 %v1404, 7
          %v1406 = vsub.s32 %v1403, %v1405
          %v1407 = vrot.slane %v1399, %v1406
          %v1409 = vunpack.c.l.s4 1983009808
          %v1410 = vunpack.c.0.s8 %v1409
          %v1411 = vlaneseq
          %v1412 = vshrl.u32 %v1411, 7
          %v1413 = vsub.s32 %v1410, %v1412
          %v1414 = vrot.slane %v1400, %v1413
          %v1415 = vcombine.low %v728, %v824
          %v1416 = vcombine.high %v728, %v824
          %v1418 = vunpack.c.l.s4 1983009808
          %v1419 = vunpack.c.0.s8 %v1418
          %v1420 = vlaneseq
          %v1421 = vshrl.u32 %v1420, 7
          %v1422 = vsub.s32 %v1419, %v1421
          %v1423 = vrot.slane %v1415, %v1422
          %v1425 = vunpack.c.l.s4 1983009808
          %v1426 = vunpack.c.0.s8 %v1425
          %v1427 = vlaneseq
          %v1428 = vshrl.u32 %v1427, 7
          %v1429 = vsub.s32 %v1426, %v1428
          %v1430 = vrot.slane %v1416, %v1429
          %v1431 = vcombine.low %v1407, %v1423
          %v1432 = vcombine.high %v1407, %v1423
          %v1434 = vunpack.c.l.s4 1934713408
          %v1435 = vunpack.c.0.s8 %v1434
          %v1436 = vlaneseq
          %v1437 = vshrl.u32 %v1436, 7
          %v1438 = vsub.s32 %v1435, %v1437
          %v1439 = vrot.slane %v1431, %v1438
          %v1441 = vunpack.c.l.s4 1934713408
          %v1442 = vunpack.c.0.s8 %v1441
          %v1443 = vlaneseq
          %v1444 = vshrl.u32 %v1443, 7
          %v1445 = vsub.s32 %v1442, %v1444
          %v1446 = vrot.slane %v1432, %v1445
          %v1447 = vcombine.low %v1414, %v1430
          %v1448 = vcombine.high %v1414, %v1430
          %v1450 = vunpack.c.l.s4 1934713408
          %v1451 = vunpack.c.0.s8 %v1450
          %v1452 = vlaneseq
          %v1453 = vshrl.u32 %v1452, 7
          %v1454 = vsub.s32 %v1451, %v1453
          %v1455 = vrot.slane %v1447, %v1454
          %v1457 = vunpack.c.l.s4 1934713408
          %v1458 = vunpack.c.0.s8 %v1457
          %v1459 = vlaneseq
          %v1460 = vshrl.u32 %v1459, 7
          %v1461 = vsub.s32 %v1458, %v1460
          %v1462 = vrot.slane %v1448, %v1461
          %v1463 = vcombine.high %v1439, 0.0
          %v1464 = vcombine.high %v1446, 0.0
          %v1465 = vcombine.high %v1455, 0.0
          %v1466 = vcombine.high %v1462, 0.0
          %v1467 = vcombine.low %v513, %v778
          %v1468 = vcombine.high %v513, %v778
          %v1470 = vunpack.c.l.s4 1983009808
          %v1471 = vunpack.c.0.s8 %v1470
          %v1472 = vlaneseq
          %v1473 = vshrl.u32 %v1472, 7
          %v1474 = vsub.s32 %v1471, %v1473
          %v1475 = vrot.slane %v1467, %v1474
          %v1477 = vunpack.c.l.s4 1983009808
          %v1478 = vunpack.c.0.s8 %v1477
          %v1479 = vlaneseq
          %v1480 = vshrl.u32 %v1479, 7
          %v1481 = vsub.s32 %v1478, %v1480
          %v1482 = vrot.slane %v1468, %v1481
          %v1483 = vcombine.low %v730, %v826
          %v1484 = vcombine.high %v730, %v826
          %v1486 = vunpack.c.l.s4 1983009808
          %v1487 = vunpack.c.0.s8 %v1486
          %v1488 = vlaneseq
          %v1489 = vshrl.u32 %v1488, 7
          %v1490 = vsub.s32 %v1487, %v1489
          %v1491 = vrot.slane %v1483, %v1490
          %v1493 = vunpack.c.l.s4 1983009808
          %v1494 = vunpack.c.0.s8 %v1493
          %v1495 = vlaneseq
          %v1496 = vshrl.u32 %v1495, 7
          %v1497 = vsub.s32 %v1494, %v1496
          %v1498 = vrot.slane %v1484, %v1497
          %v1499 = vcombine.low %v1475, %v1491
          %v1500 = vcombine.high %v1475, %v1491
          %v1502 = vunpack.c.l.s4 1934713408
          %v1503 = vunpack.c.0.s8 %v1502
          %v1504 = vlaneseq
          %v1505 = vshrl.u32 %v1504, 7
          %v1506 = vsub.s32 %v1503, %v1505
          %v1507 = vrot.slane %v1499, %v1506
          %v1509 = vunpack.c.l.s4 1934713408
          %v1510 = vunpack.c.0.s8 %v1509
          %v1511 = vlaneseq
          %v1512 = vshrl.u32 %v1511, 7
          %v1513 = vsub.s32 %v1510, %v1512
          %v1514 = vrot.slane %v1500, %v1513
          %v1515 = vcombine.low %v1482, %v1498
          %v1516 = vcombine.high %v1482, %v1498
          %v1518 = vunpack.c.l.s4 1934713408
          %v1519 = vunpack.c.0.s8 %v1518
          %v1520 = vlaneseq
          %v1521 = vshrl.u32 %v1520, 7
          %v1522 = vsub.s32 %v1519, %v1521
          %v1523 = vrot.slane %v1515, %v1522
          %v1525 = vunpack.c.l.s4 1934713408
          %v1526 = vunpack.c.0.s8 %v1525
          %v1527 = vlaneseq
          %v1528 = vshrl.u32 %v1527, 7
          %v1529 = vsub.s32 %v1526, %v1528
          %v1530 = vrot.slane %v1516, %v1529
          %v1531 = vcombine.high %v1507, 0.0
          %v1532 = vcombine.high %v1514, 0.0
          %v1533 = vcombine.high %v1523, 0.0
          %v1534 = vcombine.high %v1530, 0.0
          %v1535 = vcombine.low %v518, %v780
          %v1536 = vcombine.high %v518, %v780
          %v1538 = vunpack.c.l.s4 1983009808
          %v1539 = vunpack.c.0.s8 %v1538
          %v1540 = vlaneseq
          %v1541 = vshrl.u32 %v1540, 7
          %v1542 = vsub.s32 %v1539, %v1541
          %v1543 = vrot.slane %v1535, %v1542
          %v1545 = vunpack.c.l.s4 1983009808
          %v1546 = vunpack.c.0.s8 %v1545
          %v1547 = vlaneseq
          %v1548 = vshrl.u32 %v1547, 7
          %v1549 = vsub.s32 %v1546, %v1548
          %v1550 = vrot.slane %v1536, %v1549
          %v1551 = vcombine.low %v732, %v828
          %v1552 = vcombine.high %v732, %v828
          %v1554 = vunpack.c.l.s4 1983009808
          %v1555 = vunpack.c.0.s8 %v1554
          %v1556 = vlaneseq
          %v1557 = vshrl.u32 %v1556, 7
          %v1558 = vsub.s32 %v1555, %v1557
          %v1559 = vrot.slane %v1551, %v1558
          %v1561 = vunpack.c.l.s4 1983009808
          %v1562 = vunpack.c.0.s8 %v1561
          %v1563 = vlaneseq
          %v1564 = vshrl.u32 %v1563, 7
          %v1565 = vsub.s32 %v1562, %v1564
          %v1566 = vrot.slane %v1552, %v1565
          %v1567 = vcombine.low %v1543, %v1559
          %v1568 = vcombine.high %v1543, %v1559
          %v1570 = vunpack.c.l.s4 1934713408
          %v1571 = vunpack.c.0.s8 %v1570
          %v1572 = vlaneseq
          %v1573 = vshrl.u32 %v1572, 7
          %v1574 = vsub.s32 %v1571, %v1573
          %v1575 = vrot.slane %v1567, %v1574
          %v1577 = vunpack.c.l.s4 1934713408
          %v1578 = vunpack.c.0.s8 %v1577
          %v1579 = vlaneseq
          %v1580 = vshrl.u32 %v1579, 7
          %v1581 = vsub.s32 %v1578, %v1580
          %v1582 = vrot.slane %v1568, %v1581
          %v1583 = vcombine.low %v1550, %v1566
          %v1584 = vcombine.high %v1550, %v1566
          %v1586 = vunpack.c.l.s4 1934713408
          %v1587 = vunpack.c.0.s8 %v1586
          %v1588 = vlaneseq
          %v1589 = vshrl.u32 %v1588, 7
          %v1590 = vsub.s32 %v1587, %v1589
          %v1591 = vrot.slane %v1583, %v1590
          %v1593 = vunpack.c.l.s4 1934713408
          %v1594 = vunpack.c.0.s8 %v1593
          %v1595 = vlaneseq
          %v1596 = vshrl.u32 %v1595, 7
          %v1597 = vsub.s32 %v1594, %v1596
          %v1598 = vrot.slane %v1584, %v1597
          %v1599 = vcombine.high %v1575, 0.0
          %v1600 = vcombine.high %v1582, 0.0
          %v1601 = vcombine.high %v1591, 0.0
          %v1602 = vcombine.high %v1598, 0.0
          %v1603 = vcombine.low %v523, %v782
          %v1604 = vcombine.high %v523, %v782
          %v1606 = vunpack.c.l.s4 1983009808
          %v1607 = vunpack.c.0.s8 %v1606
          %v1608 = vlaneseq
          %v1609 = vshrl.u32 %v1608, 7
          %v1610 = vsub.s32 %v1607, %v1609
          %v1611 = vrot.slane %v1603, %v1610
          %v1613 = vunpack.c.l.s4 1983009808
          %v1614 = vunpack.c.0.s8 %v1613
          %v1615 = vlaneseq
          %v1616 = vshrl.u32 %v1615, 7
          %v1617 = vsub.s32 %v1614, %v1616
          %v1618 = vrot.slane %v1604, %v1617
          %v1619 = vcombine.low %v734, %v830
          %v1620 = vcombine.high %v734, %v830
          %v1622 = vunpack.c.l.s4 1983009808
          %v1623 = vunpack.c.0.s8 %v1622
          %v1624 = vlaneseq
          %v1625 = vshrl.u32 %v1624, 7
          %v1626 = vsub.s32 %v1623, %v1625
          %v1627 = vrot.slane %v1619, %v1626
          %v1629 = vunpack.c.l.s4 1983009808
          %v1630 = vunpack.c.0.s8 %v1629
          %v1631 = vlaneseq
          %v1632 = vshrl.u32 %v1631, 7
          %v1633 = vsub.s32 %v1630, %v1632
          %v1634 = vrot.slane %v1620, %v1633
          %v1635 = vcombine.low %v1611, %v1627
          %v1636 = vcombine.high %v1611, %v1627
          %v1638 = vunpack.c.l.s4 1934713408
          %v1639 = vunpack.c.0.s8 %v1638
          %v1640 = vlaneseq
          %v1641 = vshrl.u32 %v1640, 7
          %v1642 = vsub.s32 %v1639, %v1641
          %v1643 = vrot.slane %v1635, %v1642
          %v1645 = vunpack.c.l.s4 1934713408
          %v1646 = vunpack.c.0.s8 %v1645
          %v1647 = vlaneseq
          %v1648 = vshrl.u32 %v1647, 7
          %v1649 = vsub.s32 %v1646, %v1648
          %v1650 = vrot.slane %v1636, %v1649
          %v1651 = vcombine.low %v1618, %v1634
          %v1652 = vcombine.high %v1618, %v1634
          %v1654 = vunpack.c.l.s4 1934713408
          %v1655 = vunpack.c.0.s8 %v1654
          %v1656 = vlaneseq
          %v1657 = vshrl.u32 %v1656, 7
          %v1658 = vsub.s32 %v1655, %v1657
          %v1659 = vrot.slane %v1651, %v1658
          %v1661 = vunpack.c.l.s4 1934713408
          %v1662 = vunpack.c.0.s8 %v1661
          %v1663 = vlaneseq
          %v1664 = vshrl.u32 %v1663, 7
          %v1665 = vsub.s32 %v1662, %v1664
          %v1666 = vrot.slane %v1652, %v1665
          %v1667 = vcombine.high %v1643, 0.0
          %v1668 = vcombine.high %v1650, 0.0
          %v1669 = vcombine.high %v1659, 0.0
          %v1670 = vcombine.high %v1666, 0.0
          %v1671 = vcombine.low %v528, %v784
          %v1672 = vcombine.high %v528, %v784
          %v1674 = vunpack.c.l.s4 1983009808
          %v1675 = vunpack.c.0.s8 %v1674
          %v1676 = vlaneseq
          %v1677 = vshrl.u32 %v1676, 7
          %v1678 = vsub.s32 %v1675, %v1677
          %v1679 = vrot.slane %v1671, %v1678
          %v1681 = vunpack.c.l.s4 1983009808
          %v1682 = vunpack.c.0.s8 %v1681
          %v1683 = vlaneseq
          %v1684 = vshrl.u32 %v1683, 7
          %v1685 = vsub.s32 %v1682, %v1684
          %v1686 = vrot.slane %v1672, %v1685
          %v1687 = vcombine.low %v736, %v832
          %v1688 = vcombine.high %v736, %v832
          %v1690 = vunpack.c.l.s4 1983009808
          %v1691 = vunpack.c.0.s8 %v1690
          %v1692 = vlaneseq
          %v1693 = vshrl.u32 %v1692, 7
          %v1694 = vsub.s32 %v1691, %v1693
          %v1695 = vrot.slane %v1687, %v1694
          %v1697 = vunpack.c.l.s4 1983009808
          %v1698 = vunpack.c.0.s8 %v1697
          %v1699 = vlaneseq
          %v1700 = vshrl.u32 %v1699, 7
          %v1701 = vsub.s32 %v1698, %v1700
          %v1702 = vrot.slane %v1688, %v1701
          %v1703 = vcombine.low %v1679, %v1695
          %v1704 = vcombine.high %v1679, %v1695
          %v1706 = vunpack.c.l.s4 1934713408
          %v1707 = vunpack.c.0.s8 %v1706
          %v1708 = vlaneseq
          %v1709 = vshrl.u32 %v1708, 7
          %v1710 = vsub.s32 %v1707, %v1709
          %v1711 = vrot.slane %v1703, %v1710
          %v1713 = vunpack.c.l.s4 1934713408
          %v1714 = vunpack.c.0.s8 %v1713
          %v1715 = vlaneseq
          %v1716 = vshrl.u32 %v1715, 7
          %v1717 = vsub.s32 %v1714, %v1716
          %v1718 = vrot.slane %v1704, %v1717
          %v1719 = vcombine.low %v1686, %v1702
          %v1720 = vcombine.high %v1686, %v1702
          %v1722 = vunpack.c.l.s4 1934713408
          %v1723 = vunpack.c.0.s8 %v1722
          %v1724 = vlaneseq
          %v1725 = vshrl.u32 %v1724, 7
          %v1726 = vsub.s32 %v1723, %v1725
          %v1727 = vrot.slane %v1719, %v1726
          %v1729 = vunpack.c.l.s4 1934713408
          %v1730 = vunpack.c.0.s8 %v1729
          %v1731 = vlaneseq
          %v1732 = vshrl.u32 %v1731, 7
          %v1733 = vsub.s32 %v1730, %v1732
          %v1734 = vrot.slane %v1720, %v1733
          %v1735 = vcombine.high %v1711, 0.0
          %v1736 = vcombine.high %v1718, 0.0
          %v1737 = vcombine.high %v1727, 0.0
          %v1738 = vcombine.high %v1734, 0.0
          %v1739 = vcombine.low %v533, %v786
          %v1740 = vcombine.high %v533, %v786
          %v1742 = vunpack.c.l.s4 1983009808
          %v1743 = vunpack.c.0.s8 %v1742
          %v1744 = vlaneseq
          %v1745 = vshrl.u32 %v1744, 7
          %v1746 = vsub.s32 %v1743, %v1745
          %v1747 = vrot.slane %v1739, %v1746
          %v1749 = vunpack.c.l.s4 1983009808
          %v1750 = vunpack.c.0.s8 %v1749
          %v1751 = vlaneseq
          %v1752 = vshrl.u32 %v1751, 7
          %v1753 = vsub.s32 %v1750, %v1752
          %v1754 = vrot.slane %v1740, %v1753
          %v1755 = vcombine.low %v738, %v834
          %v1756 = vcombine.high %v738, %v834
          %v1758 = vunpack.c.l.s4 1983009808
          %v1759 = vunpack.c.0.s8 %v1758
          %v1760 = vlaneseq
          %v1761 = vshrl.u32 %v1760, 7
          %v1762 = vsub.s32 %v1759, %v1761
          %v1763 = vrot.slane %v1755, %v1762
          %v1765 = vunpack.c.l.s4 1983009808
          %v1766 = vunpack.c.0.s8 %v1765
          %v1767 = vlaneseq
          %v1768 = vshrl.u32 %v1767, 7
          %v1769 = vsub.s32 %v1766, %v1768
          %v1770 = vrot.slane %v1756, %v1769
          %v1771 = vcombine.low %v1747, %v1763
          %v1772 = vcombine.high %v1747, %v1763
          %v1774 = vunpack.c.l.s4 1934713408
          %v1775 = vunpack.c.0.s8 %v1774
          %v1776 = vlaneseq
          %v1777 = vshrl.u32 %v1776, 7
          %v1778 = vsub.s32 %v1775, %v1777
          %v1779 = vrot.slane %v1771, %v1778
          %v1781 = vunpack.c.l.s4 1934713408
          %v1782 = vunpack.c.0.s8 %v1781
          %v1783 = vlaneseq
          %v1784 = vshrl.u32 %v1783, 7
          %v1785 = vsub.s32 %v1782, %v1784
          %v1786 = vrot.slane %v1772, %v1785
          %v1787 = vcombine.low %v1754, %v1770
          %v1788 = vcombine.high %v1754, %v1770
          %v1790 = vunpack.c.l.s4 1934713408
          %v1791 = vunpack.c.0.s8 %v1790
          %v1792 = vlaneseq
          %v1793 = vshrl.u32 %v1792, 7
          %v1794 = vsub.s32 %v1791, %v1793
          %v1795 = vrot.slane %v1787, %v1794
          %v1797 = vunpack.c.l.s4 1934713408
          %v1798 = vunpack.c.0.s8 %v1797
          %v1799 = vlaneseq
          %v1800 = vshrl.u32 %v1799, 7
          %v1801 = vsub.s32 %v1798, %v1800
          %v1802 = vrot.slane %v1788, %v1801
          %v1803 = vcombine.high %v1779, 0.0
          %v1804 = vcombine.high %v1786, 0.0
          %v1805 = vcombine.high %v1795, 0.0
          %v1806 = vcombine.high %v1802, 0.0
          %v1807 = vcombine.low %v538, %v788
          %v1808 = vcombine.high %v538, %v788
          %v1810 = vunpack.c.l.s4 1983009808
          %v1811 = vunpack.c.0.s8 %v1810
          %v1812 = vlaneseq
          %v1813 = vshrl.u32 %v1812, 7
          %v1814 = vsub.s32 %v1811, %v1813
          %v1815 = vrot.slane %v1807, %v1814
          %v1817 = vunpack.c.l.s4 1983009808
          %v1818 = vunpack.c.0.s8 %v1817
          %v1819 = vlaneseq
          %v1820 = vshrl.u32 %v1819, 7
          %v1821 = vsub.s32 %v1818, %v1820
          %v1822 = vrot.slane %v1808, %v1821
          %v1823 = vcombine.low %v740, %v836
          %v1824 = vcombine.high %v740, %v836
          %v1826 = vunpack.c.l.s4 1983009808
          %v1827 = vunpack.c.0.s8 %v1826
          %v1828 = vlaneseq
          %v1829 = vshrl.u32 %v1828, 7
          %v1830 = vsub.s32 %v1827, %v1829
          %v1831 = vrot.slane %v1823, %v1830
          %v1833 = vunpack.c.l.s4 1983009808
          %v1834 = vunpack.c.0.s8 %v1833
          %v1835 = vlaneseq
          %v1836 = vshrl.u32 %v1835, 7
          %v1837 = vsub.s32 %v1834, %v1836
          %v1838 = vrot.slane %v1824, %v1837
          %v1839 = vcombine.low %v1815, %v1831
          %v1840 = vcombine.high %v1815, %v1831
          %v1842 = vunpack.c.l.s4 1934713408
          %v1843 = vunpack.c.0.s8 %v1842
          %v1844 = vlaneseq
          %v1845 = vshrl.u32 %v1844, 7
          %v1846 = vsub.s32 %v1843, %v1845
          %v1847 = vrot.slane %v1839, %v1846
          %v1849 = vunpack.c.l.s4 1934713408
          %v1850 = vunpack.c.0.s8 %v1849
          %v1851 = vlaneseq
          %v1852 = vshrl.u32 %v1851, 7
          %v1853 = vsub.s32 %v1850, %v1852
          %v1854 = vrot.slane %v1840, %v1853
          %v1855 = vcombine.low %v1822, %v1838
          %v1856 = vcombine.high %v1822, %v1838
          %v1858 = vunpack.c.l.s4 1934713408
          %v1859 = vunpack.c.0.s8 %v1858
          %v1860 = vlaneseq
          %v1861 = vshrl.u32 %v1860, 7
          %v1862 = vsub.s32 %v1859, %v1861
          %v1863 = vrot.slane %v1855, %v1862
          %v1865 = vunpack.c.l.s4 1934713408
          %v1866 = vunpack.c.0.s8 %v1865
          %v1867 = vlaneseq
          %v1868 = vshrl.u32 %v1867, 7
          %v1869 = vsub.s32 %v1866, %v1868
          %v1870 = vrot.slane %v1856, %v1869
          %v1871 = vcombine.high %v1847, 0.0
          %v1872 = vcombine.high %v1854, 0.0
          %v1873 = vcombine.high %v1863, 0.0
          %v1874 = vcombine.high %v1870, 0.0
          %v1875 = vcombine.low %v543, %v790
          %v1876 = vcombine.high %v543, %v790
          %v1878 = vunpack.c.l.s4 1983009808
          %v1879 = vunpack.c.0.s8 %v1878
          %v1880 = vlaneseq
          %v1881 = vshrl.u32 %v1880, 7
          %v1882 = vsub.s32 %v1879, %v1881
          %v1883 = vrot.slane %v1875, %v1882
          %v1885 = vunpack.c.l.s4 1983009808
          %v1886 = vunpack.c.0.s8 %v1885
          %v1887 = vlaneseq
          %v1888 = vshrl.u32 %v1887, 7
          %v1889 = vsub.s32 %v1886, %v1888
          %v1890 = vrot.slane %v1876, %v1889
          %v1891 = vcombine.low %v742, %v838
          %v1892 = vcombine.high %v742, %v838
          %v1894 = vunpack.c.l.s4 1983009808
          %v1895 = vunpack.c.0.s8 %v1894
          %v1896 = vlaneseq
          %v1897 = vshrl.u32 %v1896, 7
          %v1898 = vsub.s32 %v1895, %v1897
          %v1899 = vrot.slane %v1891, %v1898
          %v1901 = vunpack.c.l.s4 1983009808
          %v1902 = vunpack.c.0.s8 %v1901
          %v1903 = vlaneseq
          %v1904 = vshrl.u32 %v1903, 7
          %v1905 = vsub.s32 %v1902, %v1904
          %v1906 = vrot.slane %v1892, %v1905
          %v1907 = vcombine.low %v1883, %v1899
          %v1908 = vcombine.high %v1883, %v1899
          %v1910 = vunpack.c.l.s4 1934713408
          %v1911 = vunpack.c.0.s8 %v1910
          %v1912 = vlaneseq
          %v1913 = vshrl.u32 %v1912, 7
          %v1914 = vsub.s32 %v1911, %v1913
          %v1915 = vrot.slane %v1907, %v1914
          %v1917 = vunpack.c.l.s4 1934713408
          %v1918 = vunpack.c.0.s8 %v1917
          %v1919 = vlaneseq
          %v1920 = vshrl.u32 %v1919, 7
          %v1921 = vsub.s32 %v1918, %v1920
          %v1922 = vrot.slane %v1908, %v1921
          %v1923 = vcombine.low %v1890, %v1906
          %v1924 = vcombine.high %v1890, %v1906
          %v1926 = vunpack.c.l.s4 1934713408
          %v1927 = vunpack.c.0.s8 %v1926
          %v1928 = vlaneseq
          %v1929 = vshrl.u32 %v1928, 7
          %v1930 = vsub.s32 %v1927, %v1929
          %v1931 = vrot.slane %v1923, %v1930
          %v1933 = vunpack.c.l.s4 1934713408
          %v1934 = vunpack.c.0.s8 %v1933
          %v1935 = vlaneseq
          %v1936 = vshrl.u32 %v1935, 7
          %v1937 = vsub.s32 %v1934, %v1936
          %v1938 = vrot.slane %v1924, %v1937
          %v1939 = vcombine.high %v1915, 0.0
          %v1940 = vcombine.high %v1922, 0.0
          %v1941 = vcombine.high %v1931, 0.0
          %v1942 = vcombine.high %v1938, 0.0
          %v1943 = vcombine.low %v895, %v902
          %v1945 = vunpack.c.l.s4 1983009808
          %v1946 = vunpack.c.0.s8 %v1945
          %v1947 = vlaneseq
          %v1948 = vshrl.u32 %v1947, 7
          %v1949 = vsub.s32 %v1946, %v1948
          %v1950 = vrot.slane %v1943, %v1949
          %v1951 = vcombine.low %v919, %v920
          %v1953 = vunpack.c.l.s4 1983009808
          %v1954 = vunpack.c.0.s8 %v1953
          %v1955 = vlaneseq
          %v1956 = vshrl.u32 %v1955, 7
          %v1957 = vsub.s32 %v1954, %v1956
          %v1958 = vrot.slane %v1951, %v1957
          %v1959 = vcombine.low %v911, %v918
          %v1961 = vunpack.c.l.s4 1983009808
          %v1962 = vunpack.c.0.s8 %v1961
          %v1963 = vlaneseq
          %v1964 = vshrl.u32 %v1963, 7
          %v1965 = vsub.s32 %v1962, %v1964
          %v1966 = vrot.slane %v1959, %v1965
          %v1967 = vcombine.low %v921, %v922
          %v1969 = vunpack.c.l.s4 1983009808
          %v1970 = vunpack.c.0.s8 %v1969
          %v1971 = vlaneseq
          %v1972 = vshrl.u32 %v1971, 7
          %v1973 = vsub.s32 %v1970, %v1972
          %v1974 = vrot.slane %v1967, %v1973
          %v1975 = vcombine.low %v1950, %v1958
          %v1976 = vcombine.high %v1950, %v1958
          %v1978 = vunpack.c.l.s4 1934713408
          %v1979 = vunpack.c.0.s8 %v1978
          %v1980 = vlaneseq
          %v1981 = vshrl.u32 %v1980, 7
          %v1982 = vsub.s32 %v1979, %v1981
          %v1983 = vrot.slane %v1975, %v1982
          %v1985 = vunpack.c.l.s4 1934713408
          %v1986 = vunpack.c.0.s8 %v1985
          %v1987 = vlaneseq
          %v1988 = vshrl.u32 %v1987, 7
          %v1989 = vsub.s32 %v1986, %v1988
          %v1990 = vrot.slane %v1976, %v1989
          %v1991 = vcombine.low %v1966, %v1974
          %v1992 = vcombine.high %v1966, %v1974
          %v1994 = vunpack.c.l.s4 1934713408
          %v1995 = vunpack.c.0.s8 %v1994
          %v1996 = vlaneseq
          %v1997 = vshrl.u32 %v1996, 7
          %v1998 = vsub.s32 %v1995, %v1997
          %v1999 = vrot.slane %v1991, %v1998
          %v2001 = vunpack.c.l.s4 1934713408
          %v2002 = vunpack.c.0.s8 %v2001
          %v2003 = vlaneseq
          %v2004 = vshrl.u32 %v2003, 7
          %v2005 = vsub.s32 %v2002, %v2004
          %v2006 = vrot.slane %v1992, %v2005
          %v2007 = vcombine.low %v1983, %v1999
          %v2008 = vcombine.high %v1983, %v1999
          %v2009 = vcombine.low %v1990, %v2006
          %v2010 = vcombine.high %v1990, %v2006
          %v2011 = vcombine.low %v963, %v970
          %v2013 = vunpack.c.l.s4 1983009808
          %v2014 = vunpack.c.0.s8 %v2013
          %v2015 = vlaneseq
          %v2016 = vshrl.u32 %v2015, 7
          %v2017 = vsub.s32 %v2014, %v2016
          %v2018 = vrot.slane %v2011, %v2017
          %v2019 = vcombine.low %v987, %v988
          %v2021 = vunpack.c.l.s4 1983009808
          %v2022 = vunpack.c.0.s8 %v2021
          %v2023 = vlaneseq
          %v2024 = vshrl.u32 %v2023, 7
          %v2025 = vsub.s32 %v2022, %v2024
          %v2026 = vrot.slane %v2019, %v2025
          %v2027 = vcombine.low %v979, %v986
          %v2029 = vunpack.c.l.s4 1983009808
          %v2030 = vunpack.c.0.s8 %v2029
          %v2031 = vlaneseq
          %v2032 = vshrl.u32 %v2031, 7
          %v2033 = vsub.s32 %v2030, %v2032
          %v2034 = vrot.slane %v2027, %v2033
          %v2035 = vcombine.low %v989, %v990
          %v2037 = vunpack.c.l.s4 1983009808
          %v2038 = vunpack.c.0.s8 %v2037
          %v2039 = vlaneseq
          %v2040 = vshrl.u32 %v2039, 7
          %v2041 = vsub.s32 %v2038, %v2040
          %v2042 = vrot.slane %v2035, %v2041
          %v2043 = vcombine.low %v2018, %v2026
          %v2044 = vcombine.high %v2018, %v2026
          %v2046 = vunpack.c.l.s4 1934713408
          %v2047 = vunpack.c.0.s8 %v2046
          %v2048 = vlaneseq
          %v2049 = vshrl.u32 %v2048, 7
          %v2050 = vsub.s32 %v2047, %v2049
          %v2051 = vrot.slane %v2043, %v2050
          %v2053 = vunpack.c.l.s4 1934713408
          %v2054 = vunpack.c.0.s8 %v2053
          %v2055 = vlaneseq
          %v2056 = vshrl.u32 %v2055, 7
          %v2057 = vsub.s32 %v2054, %v2056
          %v2058 = vrot.slane %v2044, %v2057
          %v2059 = vcombine.low %v2034, %v2042
          %v2060 = vcombine.high %v2034, %v2042
          %v2062 = vunpack.c.l.s4 1934713408
          %v2063 = vunpack.c.0.s8 %v2062
          %v2064 = vlaneseq
          %v2065 = vshrl.u32 %v2064, 7
          %v2066 = vsub.s32 %v2063, %v2065
          %v2067 = vrot.slane %v2059, %v2066
          %v2069 = vunpack.c.l.s4 1934713408
          %v2070 = vunpack.c.0.s8 %v2069
          %v2071 = vlaneseq
          %v2072 = vshrl.u32 %v2071, 7
          %v2073 = vsub.s32 %v2070, %v2072
          %v2074 = vrot.slane %v2060, %v2073
          %v2075 = vcombine.low %v2051, %v2067
          %v2076 = vcombine.high %v2051, %v2067
          %v2077 = vcombine.low %v2058, %v2074
          %v2078 = vcombine.high %v2058, %v2074
          %v2079 = vcombine.low %v1031, %v1038
          %v2081 = vunpack.c.l.s4 1983009808
          %v2082 = vunpack.c.0.s8 %v2081
          %v2083 = vlaneseq
          %v2084 = vshrl.u32 %v2083, 7
          %v2085 = vsub.s32 %v2082, %v2084
          %v2086 = vrot.slane %v2079, %v2085
          %v2087 = vcombine.low %v1055, %v1056
          %v2089 = vunpack.c.l.s4 1983009808
          %v2090 = vunpack.c.0.s8 %v2089
          %v2091 = vlaneseq
          %v2092 = vshrl.u32 %v2091, 7
          %v2093 = vsub.s32 %v2090, %v2092
          %v2094 = vrot.slane %v2087, %v2093
          %v2095 = vcombine.low %v1047, %v1054
          %v2097 = vunpack.c.l.s4 1983009808
          %v2098 = vunpack.c.0.s8 %v2097
          %v2099 = vlaneseq
          %v2100 = vshrl.u32 %v2099, 7
          %v2101 = vsub.s32 %v2098, %v2100
          %v2102 = vrot.slane %v2095, %v2101
          %v2103 = vcombine.low %v1057, %v1058
          %v2105 = vunpack.c.l.s4 1983009808
          %v2106 = vunpack.c.0.s8 %v2105
          %v2107 = vlaneseq
          %v2108 = vshrl.u32 %v2107, 7
          %v2109 = vsub.s32 %v2106, %v2108
          %v2110 = vrot.slane %v2103, %v2109
          %v2111 = vcombine.low %v2086, %v2094
          %v2112 = vcombine.high %v2086, %v2094
          %v2114 = vunpack.c.l.s4 1934713408
          %v2115 = vunpack.c.0.s8 %v2114
          %v2116 = vlaneseq
          %v2117 = vshrl.u32 %v2116, 7
          %v2118 = vsub.s32 %v2115, %v2117
          %v2119 = vrot.slane %v2111, %v2118
          %v2121 = vunpack.c.l.s4 1934713408
          %v2122 = vunpack.c.0.s8 %v2121
          %v2123 = vlaneseq
          %v2124 = vshrl.u32 %v2123, 7
          %v2125 = vsub.s32 %v2122, %v2124
          %v2126 = vrot.slane %v2112, %v2125
          %v2127 = vcombine.low %v2102, %v2110
          %v2128 = vcombine.high %v2102, %v2110
          %v2130 = vunpack.c.l.s4 1934713408
          %v2131 = vunpack.c.0.s8 %v2130
          %v2132 = vlaneseq
          %v2133 = vshrl.u32 %v2132, 7
          %v2134 = vsub.s32 %v2131, %v2133
          %v2135 = vrot.slane %v2127, %v2134
          %v2137 = vunpack.c.l.s4 1934713408
          %v2138 = vunpack.c.0.s8 %v2137
          %v2139 = vlaneseq
          %v2140 = vshrl.u32 %v2139, 7
          %v2141 = vsub.s32 %v2138, %v2140
          %v2142 = vrot.slane %v2128, %v2141
          %v2143 = vcombine.low %v2119, %v2135
          %v2144 = vcombine.high %v2119, %v2135
          %v2145 = vcombine.low %v2126, %v2142
          %v2146 = vcombine.high %v2126, %v2142
          %v2147 = vcombine.low %v1099, %v1106
          %v2149 = vunpack.c.l.s4 1983009808
          %v2150 = vunpack.c.0.s8 %v2149
          %v2151 = vlaneseq
          %v2152 = vshrl.u32 %v2151, 7
          %v2153 = vsub.s32 %v2150, %v2152
          %v2154 = vrot.slane %v2147, %v2153
          %v2155 = vcombine.low %v1123, %v1124
          %v2157 = vunpack.c.l.s4 1983009808
          %v2158 = vunpack.c.0.s8 %v2157
          %v2159 = vlaneseq
          %v2160 = vshrl.u32 %v2159, 7
          %v2161 = vsub.s32 %v2158, %v2160
          %v2162 = vrot.slane %v2155, %v2161
          %v2163 = vcombine.low %v1115, %v1122
          %v2165 = vunpack.c.l.s4 1983009808
          %v2166 = vunpack.c.0.s8 %v2165
          %v2167 = vlaneseq
          %v2168 = vshrl.u32 %v2167, 7
          %v2169 = vsub.s32 %v2166, %v2168
          %v2170 = vrot.slane %v2163, %v2169
          %v2171 = vcombine.low %v1125, %v1126
          %v2173 = vunpack.c.l.s4 1983009808
          %v2174 = vunpack.c.0.s8 %v2173
          %v2175 = vlaneseq
          %v2176 = vshrl.u32 %v2175, 7
          %v2177 = vsub.s32 %v2174, %v2176
          %v2178 = vrot.slane %v2171, %v2177
          %v2179 = vcombine.low %v2154, %v2162
          %v2180 = vcombine.high %v2154, %v2162
          %v2182 = vunpack.c.l.s4 1934713408
          %v2183 = vunpack.c.0.s8 %v2182
          %v2184 = vlaneseq
          %v2185 = vshrl.u32 %v2184, 7
          %v2186 = vsub.s32 %v2183, %v2185
          %v2187 = vrot.slane %v2179, %v2186
          %v2189 = vunpack.c.l.s4 1934713408
          %v2190 = vunpack.c.0.s8 %v2189
          %v2191 = vlaneseq
          %v2192 = vshrl.u32 %v2191, 7
          %v2193 = vsub.s32 %v2190, %v2192
          %v2194 = vrot.slane %v2180, %v2193
          %v2195 = vcombine.low %v2170, %v2178
          %v2196 = vcombine.high %v2170, %v2178
          %v2198 = vunpack.c.l.s4 1934713408
          %v2199 = vunpack.c.0.s8 %v2198
          %v2200 = vlaneseq
          %v2201 = vshrl.u32 %v2200, 7
          %v2202 = vsub.s32 %v2199, %v2201
          %v2203 = vrot.slane %v2195, %v2202
          %v2205 = vunpack.c.l.s4 1934713408
          %v2206 = vunpack.c.0.s8 %v2205
          %v2207 = vlaneseq
          %v2208 = vshrl.u32 %v2207, 7
          %v2209 = vsub.s32 %v2206, %v2208
          %v2210 = vrot.slane %v2196, %v2209
          %v2211 = vcombine.low %v2187, %v2203
          %v2212 = vcombine.high %v2187, %v2203
          %v2213 = vcombine.low %v2194, %v2210
          %v2214 = vcombine.high %v2194, %v2210
          %v2215 = vcombine.low %v1167, %v1174
          %v2217 = vunpack.c.l.s4 1983009808
          %v2218 = vunpack.c.0.s8 %v2217
          %v2219 = vlaneseq
          %v2220 = vshrl.u32 %v2219, 7
          %v2221 = vsub.s32 %v2218, %v2220
          %v2222 = vrot.slane %v2215, %v2221
          %v2223 = vcombine.low %v1191, %v1192
          %v2225 = vunpack.c.l.s4 1983009808
          %v2226 = vunpack.c.0.s8 %v2225
          %v2227 = vlaneseq
          %v2228 = vshrl.u32 %v2227, 7
          %v2229 = vsub.s32 %v2226, %v2228
          %v2230 = vrot.slane %v2223, %v2229
          %v2231 = vcombine.low %v1183, %v1190
          %v2233 = vunpack.c.l.s4 1983009808
          %v2234 = vunpack.c.0.s8 %v2233
          %v2235 = vlaneseq
          %v2236 = vshrl.u32 %v2235, 7
          %v2237 = vsub.s32 %v2234, %v2236
          %v2238 = vrot.slane %v2231, %v2237
          %v2239 = vcombine.low %v1193, %v1194
          %v2241 = vunpack.c.l.s4 1983009808
          %v2242 = vunpack.c.0.s8 %v2241
          %v2243 = vlaneseq
          %v2244 = vshrl.u32 %v2243, 7
          %v2245 = vsub.s32 %v2242, %v2244
          %v2246 = vrot.slane %v2239, %v2245
          %v2247 = vcombine.low %v2222, %v2230
          %v2248 = vcombine.high %v2222, %v2230
          %v2250 = vunpack.c.l.s4 1934713408
          %v2251 = vunpack.c.0.s8 %v2250
          %v2252 = vlaneseq
          %v2253 = vshrl.u32 %v2252, 7
          %v2254 = vsub.s32 %v2251, %v2253
          %v2255 = vrot.slane %v2247, %v2254
          %v2257 = vunpack.c.l.s4 1934713408
          %v2258 = vunpack.c.0.s8 %v2257
          %v2259 = vlaneseq
          %v2260 = vshrl.u32 %v2259, 7
          %v2261 = vsub.s32 %v2258, %v2260
          %v2262 = vrot.slane %v2248, %v2261
          %v2263 = vcombine.low %v2238, %v2246
          %v2264 = vcombine.high %v2238, %v2246
          %v2266 = vunpack.c.l.s4 1934713408
          %v2267 = vunpack.c.0.s8 %v2266
          %v2268 = vlaneseq
          %v2269 = vshrl.u32 %v2268, 7
          %v2270 = vsub.s32 %v2267, %v2269
          %v2271 = vrot.slane %v2263, %v2270
          %v2273 = vunpack.c.l.s4 1934713408
          %v2274 = vunpack.c.0.s8 %v2273
          %v2275 = vlaneseq
          %v2276 = vshrl.u32 %v2275, 7
          %v2277 = vsub.s32 %v2274, %v2276
          %v2278 = vrot.slane %v2264, %v2277
          %v2279 = vcombine.low %v2255, %v2271
          %v2280 = vcombine.high %v2255, %v2271
          %v2281 = vcombine.low %v2262, %v2278
          %v2282 = vcombine.high %v2262, %v2278
          %v2283 = vcombine.low %v1235, %v1242
          %v2285 = vunpack.c.l.s4 1983009808
          %v2286 = vunpack.c.0.s8 %v2285
          %v2287 = vlaneseq
          %v2288 = vshrl.u32 %v2287, 7
          %v2289 = vsub.s32 %v2286, %v2288
          %v2290 = vrot.slane %v2283, %v2289
          %v2291 = vcombine.low %v1259, %v1260
          %v2293 = vunpack.c.l.s4 1983009808
          %v2294 = vunpack.c.0.s8 %v2293
          %v2295 = vlaneseq
          %v2296 = vshrl.u32 %v2295, 7
          %v2297 = vsub.s32 %v2294, %v2296
          %v2298 = vrot.slane %v2291, %v2297
          %v2299 = vcombine.low %v1251, %v1258
          %v2301 = vunpack.c.l.s4 1983009808
          %v2302 = vunpack.c.0.s8 %v2301
          %v2303 = vlaneseq
          %v2304 = vshrl.u32 %v2303, 7
          %v2305 = vsub.s32 %v2302, %v2304
          %v2306 = vrot.slane %v2299, %v2305
          %v2307 = vcombine.low %v1261, %v1262
          %v2309 = vunpack.c.l.s4 1983009808
          %v2310 = vunpack.c.0.s8 %v2309
          %v2311 = vlaneseq
          %v2312 = vshrl.u32 %v2311, 7
          %v2313 = vsub.s32 %v2310, %v2312
          %v2314 = vrot.slane %v2307, %v2313
          %v2315 = vcombine.low %v2290, %v2298
          %v2316 = vcombine.high %v2290, %v2298
          %v2318 = vunpack.c.l.s4 1934713408
          %v2319 = vunpack.c.0.s8 %v2318
          %v2320 = vlaneseq
          %v2321 = vshrl.u32 %v2320, 7
          %v2322 = vsub.s32 %v2319, %v2321
          %v2323 = vrot.slane %v2315, %v2322
          %v2325 = vunpack.c.l.s4 1934713408
          %v2326 = vunpack.c.0.s8 %v2325
          %v2327 = vlaneseq
          %v2328 = vshrl.u32 %v2327, 7
          %v2329 = vsub.s32 %v2326, %v2328
          %v2330 = vrot.slane %v2316, %v2329
          %v2331 = vcombine.low %v2306, %v2314
          %v2332 = vcombine.high %v2306, %v2314
          %v2334 = vunpack.c.l.s4 1934713408
          %v2335 = vunpack.c.0.s8 %v2334
          %v2336 = vlaneseq
          %v2337 = vshrl.u32 %v2336, 7
          %v2338 = vsub.s32 %v2335, %v2337
          %v2339 = vrot.slane %v2331, %v2338
          %v2341 = vunpack.c.l.s4 1934713408
          %v2342 = vunpack.c.0.s8 %v2341
          %v2343 = vlaneseq
          %v2344 = vshrl.u32 %v2343, 7
          %v2345 = vsub.s32 %v2342, %v2344
          %v2346 = vrot.slane %v2332, %v2345
          %v2347 = vcombine.low %v2323, %v2339
          %v2348 = vcombine.high %v2323, %v2339
          %v2349 = vcombine.low %v2330, %v2346
          %v2350 = vcombine.high %v2330, %v2346
          %v2351 = vcombine.low %v1303, %v1310
          %v2353 = vunpack.c.l.s4 1983009808
          %v2354 = vunpack.c.0.s8 %v2353
          %v2355 = vlaneseq
          %v2356 = vshrl.u32 %v2355, 7
          %v2357 = vsub.s32 %v2354, %v2356
          %v2358 = vrot.slane %v2351, %v2357
          %v2359 = vcombine.low %v1327, %v1328
          %v2361 = vunpack.c.l.s4 1983009808
          %v2362 = vunpack.c.0.s8 %v2361
          %v2363 = vlaneseq
          %v2364 = vshrl.u32 %v2363, 7
          %v2365 = vsub.s32 %v2362, %v2364
          %v2366 = vrot.slane %v2359, %v2365
          %v2367 = vcombine.low %v1319, %v1326
          %v2369 = vunpack.c.l.s4 1983009808
          %v2370 = vunpack.c.0.s8 %v2369
          %v2371 = vlaneseq
          %v2372 = vshrl.u32 %v2371, 7
          %v2373 = vsub.s32 %v2370, %v2372
          %v2374 = vrot.slane %v2367, %v2373
          %v2375 = vcombine.low %v1329, %v1330
          %v2377 = vunpack.c.l.s4 1983009808
          %v2378 = vunpack.c.0.s8 %v2377
          %v2379 = vlaneseq
          %v2380 = vshrl.u32 %v2379, 7
          %v2381 = vsub.s32 %v2378, %v2380
          %v2382 = vrot.slane %v2375, %v2381
          %v2383 = vcombine.low %v2358, %v2366
          %v2384 = vcombine.high %v2358, %v2366
          %v2386 = vunpack.c.l.s4 1934713408
          %v2387 = vunpack.c.0.s8 %v2386
          %v2388 = vlaneseq
          %v2389 = vshrl.u32 %v2388, 7
          %v2390 = vsub.s32 %v2387, %v2389
          %v2391 = vrot.slane %v2383, %v2390
          %v2393 = vunpack.c.l.s4 1934713408
          %v2394 = vunpack.c.0.s8 %v2393
          %v2395 = vlaneseq
          %v2396 = vshrl.u32 %v2395, 7
          %v2397 = vsub.s32 %v2394, %v2396
          %v2398 = vrot.slane %v2384, %v2397
          %v2399 = vcombine.low %v2374, %v2382
          %v2400 = vcombine.high %v2374, %v2382
          %v2402 = vunpack.c.l.s4 1934713408
          %v2403 = vunpack.c.0.s8 %v2402
          %v2404 = vlaneseq
          %v2405 = vshrl.u32 %v2404, 7
          %v2406 = vsub.s32 %v2403, %v2405
          %v2407 = vrot.slane %v2399, %v2406
          %v2409 = vunpack.c.l.s4 1934713408
          %v2410 = vunpack.c.0.s8 %v2409
          %v2411 = vlaneseq
          %v2412 = vshrl.u32 %v2411, 7
          %v2413 = vsub.s32 %v2410, %v2412
          %v2414 = vrot.slane %v2400, %v2413
          %v2415 = vcombine.low %v2391, %v2407
          %v2416 = vcombine.high %v2391, %v2407
          %v2417 = vcombine.low %v2398, %v2414
          %v2418 = vcombine.high %v2398, %v2414
          %v2419 = vcombine.low %v1371, %v1378
          %v2421 = vunpack.c.l.s4 1983009808
          %v2422 = vunpack.c.0.s8 %v2421
          %v2423 = vlaneseq
          %v2424 = vshrl.u32 %v2423, 7
          %v2425 = vsub.s32 %v2422, %v2424
          %v2426 = vrot.slane %v2419, %v2425
          %v2427 = vcombine.low %v1395, %v1396
          %v2429 = vunpack.c.l.s4 1983009808
          %v2430 = vunpack.c.0.s8 %v2429
          %v2431 = vlaneseq
          %v2432 = vshrl.u32 %v2431, 7
          %v2433 = vsub.s32 %v2430, %v2432
          %v2434 = vrot.slane %v2427, %v2433
          %v2435 = vcombine.low %v1387, %v1394
          %v2437 = vunpack.c.l.s4 1983009808
          %v2438 = vunpack.c.0.s8 %v2437
          %v2439 = vlaneseq
          %v2440 = vshrl.u32 %v2439, 7
          %v2441 = vsub.s32 %v2438, %v2440
          %v2442 = vrot.slane %v2435, %v2441
          %v2443 = vcombine.low %v1397, %v1398
          %v2445 = vunpack.c.l.s4 1983009808
          %v2446 = vunpack.c.0.s8 %v2445
          %v2447 = vlaneseq
          %v2448 = vshrl.u32 %v2447, 7
          %v2449 = vsub.s32 %v2446, %v2448
          %v2450 = vrot.slane %v2443, %v2449
          %v2451 = vcombine.low %v2426, %v2434
          %v2452 = vcombine.high %v2426, %v2434
          %v2454 = vunpack.c.l.s4 1934713408
          %v2455 = vunpack.c.0.s8 %v2454
          %v2456 = vlaneseq
          %v2457 = vshrl.u32 %v2456, 7
          %v2458 = vsub.s32 %v2455, %v2457
          %v2459 = vrot.slane %v2451, %v2458
          %v2461 = vunpack.c.l.s4 1934713408
          %v2462 = vunpack.c.0.s8 %v2461
          %v2463 = vlaneseq
          %v2464 = vshrl.u32 %v2463, 7
          %v2465 = vsub.s32 %v2462, %v2464
          %v2466 = vrot.slane %v2452, %v2465
          %v2467 = vcombine.low %v2442, %v2450
          %v2468 = vcombine.high %v2442, %v2450
          %v2470 = vunpack.c.l.s4 1934713408
          %v2471 = vunpack.c.0.s8 %v2470
          %v2472 = vlaneseq
          %v2473 = vshrl.u32 %v2472, 7
          %v2474 = vsub.s32 %v2471, %v2473
          %v2475 = vrot.slane %v2467, %v2474
          %v2477 = vunpack.c.l.s4 1934713408
          %v2478 = vunpack.c.0.s8 %v2477
          %v2479 = vlaneseq
          %v2480 = vshrl.u32 %v2479, 7
          %v2481 = vsub.s32 %v2478, %v2480
          %v2482 = vrot.slane %v2468, %v2481
          %v2483 = vcombine.low %v2459, %v2475
          %v2484 = vcombine.high %v2459, %v2475
          %v2485 = vcombine.low %v2466, %v2482
          %v2486 = vcombine.high %v2466, %v2482
          %v2487 = vcombine.low %v1439, %v1446
          %v2489 = vunpack.c.l.s4 1983009808
          %v2490 = vunpack.c.0.s8 %v2489
          %v2491 = vlaneseq
          %v2492 = vshrl.u32 %v2491, 7
          %v2493 = vsub.s32 %v2490, %v2492
          %v2494 = vrot.slane %v2487, %v2493
          %v2495 = vcombine.low %v1463, %v1464
          %v2497 = vunpack.c.l.s4 1983009808
          %v2498 = vunpack.c.0.s8 %v2497
          %v2499 = vlaneseq
          %v2500 = vshrl.u32 %v2499, 7
          %v2501 = vsub.s32 %v2498, %v2500
          %v2502 = vrot.slane %v2495, %v2501
          %v2503 = vcombine.low %v1455, %v1462
          %v2505 = vunpack.c.l.s4 1983009808
          %v2506 = vunpack.c.0.s8 %v2505
          %v2507 = vlaneseq
          %v2508 = vshrl.u32 %v2507, 7
          %v2509 = vsub.s32 %v2506, %v2508
          %v2510 = vrot.slane %v2503, %v2509
          %v2511 = vcombine.low %v1465, %v1466
          %v2513 = vunpack.c.l.s4 1983009808
          %v2514 = vunpack.c.0.s8 %v2513
          %v2515 = vlaneseq
          %v2516 = vshrl.u32 %v2515, 7
          %v2517 = vsub.s32 %v2514, %v2516
          %v2518 = vrot.slane %v2511, %v2517
          %v2519 = vcombine.low %v2494, %v2502
          %v2520 = vcombine.high %v2494, %v2502
          %v2522 = vunpack.c.l.s4 1934713408
          %v2523 = vunpack.c.0.s8 %v2522
          %v2524 = vlaneseq
          %v2525 = vshrl.u32 %v2524, 7
          %v2526 = vsub.s32 %v2523, %v2525
          %v2527 = vrot.slane %v2519, %v2526
          %v2529 = vunpack.c.l.s4 1934713408
          %v2530 = vunpack.c.0.s8 %v2529
          %v2531 = vlaneseq
          %v2532 = vshrl.u32 %v2531, 7
          %v2533 = vsub.s32 %v2530, %v2532
          %v2534 = vrot.slane %v2520, %v2533
          %v2535 = vcombine.low %v2510, %v2518
          %v2536 = vcombine.high %v2510, %v2518
          %v2538 = vunpack.c.l.s4 1934713408
          %v2539 = vunpack.c.0.s8 %v2538
          %v2540 = vlaneseq
          %v2541 = vshrl.u32 %v2540, 7
          %v2542 = vsub.s32 %v2539, %v2541
          %v2543 = vrot.slane %v2535, %v2542
          %v2545 = vunpack.c.l.s4 1934713408
          %v2546 = vunpack.c.0.s8 %v2545
          %v2547 = vlaneseq
          %v2548 = vshrl.u32 %v2547, 7
          %v2549 = vsub.s32 %v2546, %v2548
          %v2550 = vrot.slane %v2536, %v2549
          %v2551 = vcombine.low %v2527, %v2543
          %v2552 = vcombine.high %v2527, %v2543
          %v2553 = vcombine.low %v2534, %v2550
          %v2554 = vcombine.high %v2534, %v2550
          %v2555 = vcombine.low %v1507, %v1514
          %v2557 = vunpack.c.l.s4 1983009808
          %v2558 = vunpack.c.0.s8 %v2557
          %v2559 = vlaneseq
          %v2560 = vshrl.u32 %v2559, 7
          %v2561 = vsub.s32 %v2558, %v2560
          %v2562 = vrot.slane %v2555, %v2561
          %v2563 = vcombine.low %v1531, %v1532
          %v2565 = vunpack.c.l.s4 1983009808
          %v2566 = vunpack.c.0.s8 %v2565
          %v2567 = vlaneseq
          %v2568 = vshrl.u32 %v2567, 7
          %v2569 = vsub.s32 %v2566, %v2568
          %v2570 = vrot.slane %v2563, %v2569
          %v2571 = vcombine.low %v1523, %v1530
          %v2573 = vunpack.c.l.s4 1983009808
          %v2574 = vunpack.c.0.s8 %v2573
          %v2575 = vlaneseq
          %v2576 = vshrl.u32 %v2575, 7
          %v2577 = vsub.s32 %v2574, %v2576
          %v2578 = vrot.slane %v2571, %v2577
          %v2579 = vcombine.low %v1533, %v1534
          %v2581 = vunpack.c.l.s4 1983009808
          %v2582 = vunpack.c.0.s8 %v2581
          %v2583 = vlaneseq
          %v2584 = vshrl.u32 %v2583, 7
          %v2585 = vsub.s32 %v2582, %v2584
          %v2586 = vrot.slane %v2579, %v2585
          %v2587 = vcombine.low %v2562, %v2570
          %v2588 = vcombine.high %v2562, %v2570
          %v2590 = vunpack.c.l.s4 1934713408
          %v2591 = vunpack.c.0.s8 %v2590
          %v2592 = vlaneseq
          %v2593 = vshrl.u32 %v2592, 7
          %v2594 = vsub.s32 %v2591, %v2593
          %v2595 = vrot.slane %v2587, %v2594
          %v2597 = vunpack.c.l.s4 1934713408
          %v2598 = vunpack.c.0.s8 %v2597
          %v2599 = vlaneseq
          %v2600 = vshrl.u32 %v2599, 7
          %v2601 = vsub.s32 %v2598, %v2600
          %v2602 = vrot.slane %v2588, %v2601
          %v2603 = vcombine.low %v2578, %v2586
          %v2604 = vcombine.high %v2578, %v2586
          %v2606 = vunpack.c.l.s4 1934713408
          %v2607 = vunpack.c.0.s8 %v2606
          %v2608 = vlaneseq
          %v2609 = vshrl.u32 %v2608, 7
          %v2610 = vsub.s32 %v2607, %v2609
          %v2611 = vrot.slane %v2603, %v2610
          %v2613 = vunpack.c.l.s4 1934713408
          %v2614 = vunpack.c.0.s8 %v2613
          %v2615 = vlaneseq
          %v2616 = vshrl.u32 %v2615, 7
          %v2617 = vsub.s32 %v2614, %v2616
          %v2618 = vrot.slane %v2604, %v2617
          %v2619 = vcombine.low %v2595, %v2611
          %v2620 = vcombine.high %v2595, %v2611
          %v2621 = vcombine.low %v2602, %v2618
          %v2622 = vcombine.high %v2602, %v2618
          %v2623 = vcombine.low %v1575, %v1582
          %v2625 = vunpack.c.l.s4 1983009808
          %v2626 = vunpack.c.0.s8 %v2625
          %v2627 = vlaneseq
          %v2628 = vshrl.u32 %v2627, 7
          %v2629 = vsub.s32 %v2626, %v2628
          %v2630 = vrot.slane %v2623, %v2629
          %v2631 = vcombine.low %v1599, %v1600
          %v2633 = vunpack.c.l.s4 1983009808
          %v2634 = vunpack.c.0.s8 %v2633
          %v2635 = vlaneseq
          %v2636 = vshrl.u32 %v2635, 7
          %v2637 = vsub.s32 %v2634, %v2636
          %v2638 = vrot.slane %v2631, %v2637
          %v2639 = vcombine.low %v1591, %v1598
          %v2641 = vunpack.c.l.s4 1983009808
          %v2642 = vunpack.c.0.s8 %v2641
          %v2643 = vlaneseq
          %v2644 = vshrl.u32 %v2643, 7
          %v2645 = vsub.s32 %v2642, %v2644
          %v2646 = vrot.slane %v2639, %v2645
          %v2647 = vcombine.low %v1601, %v1602
          %v2649 = vunpack.c.l.s4 1983009808
          %v2650 = vunpack.c.0.s8 %v2649
          %v2651 = vlaneseq
          %v2652 = vshrl.u32 %v2651, 7
          %v2653 = vsub.s32 %v2650, %v2652
          %v2654 = vrot.slane %v2647, %v2653
          %v2655 = vcombine.low %v2630, %v2638
          %v2656 = vcombine.high %v2630, %v2638
          %v2658 = vunpack.c.l.s4 1934713408
          %v2659 = vunpack.c.0.s8 %v2658
          %v2660 = vlaneseq
          %v2661 = vshrl.u32 %v2660, 7
          %v2662 = vsub.s32 %v2659, %v2661
          %v2663 = vrot.slane %v2655, %v2662
          %v2665 = vunpack.c.l.s4 1934713408
          %v2666 = vunpack.c.0.s8 %v2665
          %v2667 = vlaneseq
          %v2668 = vshrl.u32 %v2667, 7
          %v2669 = vsub.s32 %v2666, %v2668
          %v2670 = vrot.slane %v2656, %v2669
          %v2671 = vcombine.low %v2646, %v2654
          %v2672 = vcombine.high %v2646, %v2654
          %v2674 = vunpack.c.l.s4 1934713408
          %v2675 = vunpack.c.0.s8 %v2674
          %v2676 = vlaneseq
          %v2677 = vshrl.u32 %v2676, 7
          %v2678 = vsub.s32 %v2675, %v2677
          %v2679 = vrot.slane %v2671, %v2678
          %v2681 = vunpack.c.l.s4 1934713408
          %v2682 = vunpack.c.0.s8 %v2681
          %v2683 = vlaneseq
          %v2684 = vshrl.u32 %v2683, 7
          %v2685 = vsub.s32 %v2682, %v2684
          %v2686 = vrot.slane %v2672, %v2685
          %v2687 = vcombine.low %v2663, %v2679
          %v2688 = vcombine.high %v2663, %v2679
          %v2689 = vcombine.low %v2670, %v2686
          %v2690 = vcombine.high %v2670, %v2686
          %v2691 = vcombine.low %v1643, %v1650
          %v2693 = vunpack.c.l.s4 1983009808
          %v2694 = vunpack.c.0.s8 %v2693
          %v2695 = vlaneseq
          %v2696 = vshrl.u32 %v2695, 7
          %v2697 = vsub.s32 %v2694, %v2696
          %v2698 = vrot.slane %v2691, %v2697
          %v2699 = vcombine.low %v1667, %v1668
          %v2701 = vunpack.c.l.s4 1983009808
          %v2702 = vunpack.c.0.s8 %v2701
          %v2703 = vlaneseq
          %v2704 = vshrl.u32 %v2703, 7
          %v2705 = vsub.s32 %v2702, %v2704
          %v2706 = vrot.slane %v2699, %v2705
          %v2707 = vcombine.low %v1659, %v1666
          %v2709 = vunpack.c.l.s4 1983009808
          %v2710 = vunpack.c.0.s8 %v2709
          %v2711 = vlaneseq
          %v2712 = vshrl.u32 %v2711, 7
          %v2713 = vsub.s32 %v2710, %v2712
          %v2714 = vrot.slane %v2707, %v2713
          %v2715 = vcombine.low %v1669, %v1670
          %v2717 = vunpack.c.l.s4 1983009808
          %v2718 = vunpack.c.0.s8 %v2717
          %v2719 = vlaneseq
          %v2720 = vshrl.u32 %v2719, 7
          %v2721 = vsub.s32 %v2718, %v2720
          %v2722 = vrot.slane %v2715, %v2721
          %v2723 = vcombine.low %v2698, %v2706
          %v2724 = vcombine.high %v2698, %v2706
          %v2726 = vunpack.c.l.s4 1934713408
          %v2727 = vunpack.c.0.s8 %v2726
          %v2728 = vlaneseq
          %v2729 = vshrl.u32 %v2728, 7
          %v2730 = vsub.s32 %v2727, %v2729
          %v2731 = vrot.slane %v2723, %v2730
          %v2733 = vunpack.c.l.s4 1934713408
          %v2734 = vunpack.c.0.s8 %v2733
          %v2735 = vlaneseq
          %v2736 = vshrl.u32 %v2735, 7
          %v2737 = vsub.s32 %v2734, %v2736
          %v2738 = vrot.slane %v2724, %v2737
          %v2739 = vcombine.low %v2714, %v2722
          %v2740 = vcombine.high %v2714, %v2722
          %v2742 = vunpack.c.l.s4 1934713408
          %v2743 = vunpack.c.0.s8 %v2742
          %v2744 = vlaneseq
          %v2745 = vshrl.u32 %v2744, 7
          %v2746 = vsub.s32 %v2743, %v2745
          %v2747 = vrot.slane %v2739, %v2746
          %v2749 = vunpack.c.l.s4 1934713408
          %v2750 = vunpack.c.0.s8 %v2749
          %v2751 = vlaneseq
          %v2752 = vshrl.u32 %v2751, 7
          %v2753 = vsub.s32 %v2750, %v2752
          %v2754 = vrot.slane %v2740, %v2753
          %v2755 = vcombine.low %v2731, %v2747
          %v2756 = vcombine.high %v2731, %v2747
          %v2757 = vcombine.low %v2738, %v2754
          %v2758 = vcombine.high %v2738, %v2754
          %v2759 = vcombine.low %v1711, %v1718
          %v2761 = vunpack.c.l.s4 1983009808
          %v2762 = vunpack.c.0.s8 %v2761
          %v2763 = vlaneseq
          %v2764 = vshrl.u32 %v2763, 7
          %v2765 = vsub.s32 %v2762, %v2764
          %v2766 = vrot.slane %v2759, %v2765
          %v2767 = vcombine.low %v1735, %v1736
          %v2769 = vunpack.c.l.s4 1983009808
          %v2770 = vunpack.c.0.s8 %v2769
          %v2771 = vlaneseq
          %v2772 = vshrl.u32 %v2771, 7
          %v2773 = vsub.s32 %v2770, %v2772
          %v2774 = vrot.slane %v2767, %v2773
          %v2775 = vcombine.low %v1727, %v1734
          %v2777 = vunpack.c.l.s4 1983009808
          %v2778 = vunpack.c.0.s8 %v2777
          %v2779 = vlaneseq
          %v2780 = vshrl.u32 %v2779, 7
          %v2781 = vsub.s32 %v2778, %v2780
          %v2782 = vrot.slane %v2775, %v2781
          %v2783 = vcombine.low %v1737, %v1738
          %v2785 = vunpack.c.l.s4 1983009808
          %v2786 = vunpack.c.0.s8 %v2785
          %v2787 = vlaneseq
          %v2788 = vshrl.u32 %v2787, 7
          %v2789 = vsub.s32 %v2786, %v2788
          %v2790 = vrot.slane %v2783, %v2789
          %v2791 = vcombine.low %v2766, %v2774
          %v2792 = vcombine.high %v2766, %v2774
          %v2794 = vunpack.c.l.s4 1934713408
          %v2795 = vunpack.c.0.s8 %v2794
          %v2796 = vlaneseq
          %v2797 = vshrl.u32 %v2796, 7
          %v2798 = vsub.s32 %v2795, %v2797
          %v2799 = vrot.slane %v2791, %v2798
          %v2801 = vunpack.c.l.s4 1934713408
          %v2802 = vunpack.c.0.s8 %v2801
          %v2803 = vlaneseq
          %v2804 = vshrl.u32 %v2803, 7
          %v2805 = vsub.s32 %v2802, %v2804
          %v2806 = vrot.slane %v2792, %v2805
          %v2807 = vcombine.low %v2782, %v2790
          %v2808 = vcombine.high %v2782, %v2790
          %v2810 = vunpack.c.l.s4 1934713408
          %v2811 = vunpack.c.0.s8 %v2810
          %v2812 = vlaneseq
          %v2813 = vshrl.u32 %v2812, 7
          %v2814 = vsub.s32 %v2811, %v2813
          %v2815 = vrot.slane %v2807, %v2814
          %v2817 = vunpack.c.l.s4 1934713408
          %v2818 = vunpack.c.0.s8 %v2817
          %v2819 = vlaneseq
          %v2820 = vshrl.u32 %v2819, 7
          %v2821 = vsub.s32 %v2818, %v2820
          %v2822 = vrot.slane %v2808, %v2821
          %v2823 = vcombine.low %v2799, %v2815
          %v2824 = vcombine.high %v2799, %v2815
          %v2825 = vcombine.low %v2806, %v2822
          %v2826 = vcombine.high %v2806, %v2822
          %v2827 = vcombine.low %v1779, %v1786
          %v2829 = vunpack.c.l.s4 1983009808
          %v2830 = vunpack.c.0.s8 %v2829
          %v2831 = vlaneseq
          %v2832 = vshrl.u32 %v2831, 7
          %v2833 = vsub.s32 %v2830, %v2832
          %v2834 = vrot.slane %v2827, %v2833
          %v2835 = vcombine.low %v1803, %v1804
          %v2837 = vunpack.c.l.s4 1983009808
          %v2838 = vunpack.c.0.s8 %v2837
          %v2839 = vlaneseq
          %v2840 = vshrl.u32 %v2839, 7
          %v2841 = vsub.s32 %v2838, %v2840
          %v2842 = vrot.slane %v2835, %v2841
          %v2843 = vcombine.low %v1795, %v1802
          %v2845 = vunpack.c.l.s4 1983009808
          %v2846 = vunpack.c.0.s8 %v2845
          %v2847 = vlaneseq
          %v2848 = vshrl.u32 %v2847, 7
          %v2849 = vsub.s32 %v2846, %v2848
          %v2850 = vrot.slane %v2843, %v2849
          %v2851 = vcombine.low %v1805, %v1806
          %v2853 = vunpack.c.l.s4 1983009808
          %v2854 = vunpack.c.0.s8 %v2853
          %v2855 = vlaneseq
          %v2856 = vshrl.u32 %v2855, 7
          %v2857 = vsub.s32 %v2854, %v2856
          %v2858 = vrot.slane %v2851, %v2857
          %v2859 = vcombine.low %v2834, %v2842
          %v2860 = vcombine.high %v2834, %v2842
          %v2862 = vunpack.c.l.s4 1934713408
          %v2863 = vunpack.c.0.s8 %v2862
          %v2864 = vlaneseq
          %v2865 = vshrl.u32 %v2864, 7
          %v2866 = vsub.s32 %v2863, %v2865
          %v2867 = vrot.slane %v2859, %v2866
          %v2869 = vunpack.c.l.s4 1934713408
          %v2870 = vunpack.c.0.s8 %v2869
          %v2871 = vlaneseq
          %v2872 = vshrl.u32 %v2871, 7
          %v2873 = vsub.s32 %v2870, %v2872
          %v2874 = vrot.slane %v2860, %v2873
          %v2875 = vcombine.low %v2850, %v2858
          %v2876 = vcombine.high %v2850, %v2858
          %v2878 = vunpack.c.l.s4 1934713408
          %v2879 = vunpack.c.0.s8 %v2878
          %v2880 = vlaneseq
          %v2881 = vshrl.u32 %v2880, 7
          %v2882 = vsub.s32 %v2879, %v2881
          %v2883 = vrot.slane %v2875, %v2882
          %v2885 = vunpack.c.l.s4 1934713408
          %v2886 = vunpack.c.0.s8 %v2885
          %v2887 = vlaneseq
          %v2888 = vshrl.u32 %v2887, 7
          %v2889 = vsub.s32 %v2886, %v2888
          %v2890 = vrot.slane %v2876, %v2889
          %v2891 = vcombine.low %v2867, %v2883
          %v2892 = vcombine.high %v2867, %v2883
          %v2893 = vcombine.low %v2874, %v2890
          %v2894 = vcombine.high %v2874, %v2890
          %v2895 = vcombine.low %v1847, %v1854
          %v2897 = vunpack.c.l.s4 1983009808
          %v2898 = vunpack.c.0.s8 %v2897
          %v2899 = vlaneseq
          %v2900 = vshrl.u32 %v2899, 7
          %v2901 = vsub.s32 %v2898, %v2900
          %v2902 = vrot.slane %v2895, %v2901
          %v2903 = vcombine.low %v1871, %v1872
          %v2905 = vunpack.c.l.s4 1983009808
          %v2906 = vunpack.c.0.s8 %v2905
          %v2907 = vlaneseq
          %v2908 = vshrl.u32 %v2907, 7
          %v2909 = vsub.s32 %v2906, %v2908
          %v2910 = vrot.slane %v2903, %v2909
          %v2911 = vcombine.low %v1863, %v1870
          %v2913 = vunpack.c.l.s4 1983009808
          %v2914 = vunpack.c.0.s8 %v2913
          %v2915 = vlaneseq
          %v2916 = vshrl.u32 %v2915, 7
          %v2917 = vsub.s32 %v2914, %v2916
          %v2918 = vrot.slane %v2911, %v2917
          %v2919 = vcombine.low %v1873, %v1874
          %v2921 = vunpack.c.l.s4 1983009808
          %v2922 = vunpack.c.0.s8 %v2921
          %v2923 = vlaneseq
          %v2924 = vshrl.u32 %v2923, 7
          %v2925 = vsub.s32 %v2922, %v2924
          %v2926 = vrot.slane %v2919, %v2925
          %v2927 = vcombine.low %v2902, %v2910
          %v2928 = vcombine.high %v2902, %v2910
          %v2930 = vunpack.c.l.s4 1934713408
          %v2931 = vunpack.c.0.s8 %v2930
          %v2932 = vlaneseq
          %v2933 = vshrl.u32 %v2932, 7
          %v2934 = vsub.s32 %v2931, %v2933
          %v2935 = vrot.slane %v2927, %v2934
          %v2937 = vunpack.c.l.s4 1934713408
          %v2938 = vunpack.c.0.s8 %v2937
          %v2939 = vlaneseq
          %v2940 = vshrl.u32 %v2939, 7
          %v2941 = vsub.s32 %v2938, %v2940
          %v2942 = vrot.slane %v2928, %v2941
          %v2943 = vcombine.low %v2918, %v2926
          %v2944 = vcombine.high %v2918, %v2926
          %v2946 = vunpack.c.l.s4 1934713408
          %v2947 = vunpack.c.0.s8 %v2946
          %v2948 = vlaneseq
          %v2949 = vshrl.u32 %v2948, 7
          %v2950 = vsub.s32 %v2947, %v2949
          %v2951 = vrot.slane %v2943, %v2950
          %v2953 = vunpack.c.l.s4 1934713408
          %v2954 = vunpack.c.0.s8 %v2953
          %v2955 = vlaneseq
          %v2956 = vshrl.u32 %v2955, 7
          %v2957 = vsub.s32 %v2954, %v2956
          %v2958 = vrot.slane %v2944, %v2957
          %v2959 = vcombine.low %v2935, %v2951
          %v2960 = vcombine.high %v2935, %v2951
          %v2961 = vcombine.low %v2942, %v2958
          %v2962 = vcombine.high %v2942, %v2958
          %v2963 = vcombine.low %v1915, %v1922
          %v2965 = vunpack.c.l.s4 1983009808
          %v2966 = vunpack.c.0.s8 %v2965
          %v2967 = vlaneseq
          %v2968 = vshrl.u32 %v2967, 7
          %v2969 = vsub.s32 %v2966, %v2968
          %v2970 = vrot.slane %v2963, %v2969
          %v2971 = vcombine.low %v1939, %v1940
          %v2973 = vunpack.c.l.s4 1983009808
          %v2974 = vunpack.c.0.s8 %v2973
          %v2975 = vlaneseq
          %v2976 = vshrl.u32 %v2975, 7
          %v2977 = vsub.s32 %v2974, %v2976
          %v2978 = vrot.slane %v2971, %v2977
          %v2979 = vcombine.low %v1931, %v1938
          %v2981 = vunpack.c.l.s4 1983009808
          %v2982 = vunpack.c.0.s8 %v2981
          %v2983 = vlaneseq
          %v2984 = vshrl.u32 %v2983, 7
          %v2985 = vsub.s32 %v2982, %v2984
          %v2986 = vrot.slane %v2979, %v2985
          %v2987 = vcombine.low %v1941, %v1942
          %v2989 = vunpack.c.l.s4 1983009808
          %v2990 = vunpack.c.0.s8 %v2989
          %v2991 = vlaneseq
          %v2992 = vshrl.u32 %v2991, 7
          %v2993 = vsub.s32 %v2990, %v2992
          %v2994 = vrot.slane %v2987, %v2993
          %v2995 = vcombine.low %v2970, %v2978
          %v2996 = vcombine.high %v2970, %v2978
          %v2998 = vunpack.c.l.s4 1934713408
          %v2999 = vunpack.c.0.s8 %v2998
          %v3000 = vlaneseq
          %v3001 = vshrl.u32 %v3000, 7
          %v3002 = vsub.s32 %v2999, %v3001
          %v3003 = vrot.slane %v2995, %v3002
          %v3005 = vunpack.c.l.s4 1934713408
          %v3006 = vunpack.c.0.s8 %v3005
          %v3007 = vlaneseq
          %v3008 = vshrl.u32 %v3007, 7
          %v3009 = vsub.s32 %v3006, %v3008
          %v3010 = vrot.slane %v2996, %v3009
          %v3011 = vcombine.low %v2986, %v2994
          %v3012 = vcombine.high %v2986, %v2994
          %v3014 = vunpack.c.l.s4 1934713408
          %v3015 = vunpack.c.0.s8 %v3014
          %v3016 = vlaneseq
          %v3017 = vshrl.u32 %v3016, 7
          %v3018 = vsub.s32 %v3015, %v3017
          %v3019 = vrot.slane %v3011, %v3018
          %v3021 = vunpack.c.l.s4 1934713408
          %v3022 = vunpack.c.0.s8 %v3021
          %v3023 = vlaneseq
          %v3024 = vshrl.u32 %v3023, 7
          %v3025 = vsub.s32 %v3022, %v3024
          %v3026 = vrot.slane %v3012, %v3025
          %v3027 = vcombine.low %v3003, %v3019
          %v3028 = vcombine.high %v3003, %v3019
          %v3029 = vcombine.low %v3010, %v3026
          %v3030 = vcombine.high %v3010, %v3026
          %vm3031 = vcmask 130048
          %3032 = vst.msk [vmem:[#allocation2] sm:$0xff] %vm3031, %v2007
          %3033 = vst.msk [vmem:[#allocation2 + $0x8] sm:$0xff] %vm3031, %v2075
          %3034 = vst.msk [vmem:[#allocation2 + $0x10] sm:$0xff] %vm3031, %v2143
          %3035 = vst.msk [vmem:[#allocation2 + $0x18] sm:$0xff] %vm3031, %v2211
          %3036 = vst.msk [vmem:[#allocation2 + $0x20] sm:$0xff] %vm3031, %v2279
          %3037 = vst.msk [vmem:[#allocation2 + $0x28] sm:$0xff] %vm3031, %v2347
          %3038 = vst.msk [vmem:[#allocation2 + $0x30] sm:$0xff] %vm3031, %v2415
          %3039 = vst.msk [vmem:[#allocation2 + $0x38] sm:$0xff] %vm3031, %v2483
          %3040 = vst.msk [vmem:[#allocation2 + $0x40] sm:$0xff] %vm3031, %v2551
          %3041 = vst.msk [vmem:[#allocation2 + $0x48] sm:$0xff] %vm3031, %v2619
          %3042 = vst.msk [vmem:[#allocation2 + $0x50] sm:$0xff] %vm3031, %v2687
          %3043 = vst.msk [vmem:[#allocation2 + $0x58] sm:$0xff] %vm3031, %v2755
          %3044 = vst.msk [vmem:[#allocation2 + $0x60] sm:$0xff] %vm3031, %v2823
          %3045 = vst.msk [vmem:[#allocation2 + $0x68] sm:$0xff] %vm3031, %v2891
          %3046 = vst.msk [vmem:[#allocation2 + $0x70] sm:$0xff] %vm3031, %v2959
          %3047 = vst.msk [vmem:[#allocation2 + $0x78] sm:$0xff] %vm3031, %v3027
          %3048 = vst.msk [vmem:[#allocation2 + $0x80] sm:$0xff] %vm3031, %v2008
          %3049 = vst.msk [vmem:[#allocation2 + $0x88] sm:$0xff] %vm3031, %v2076
          %3050 = vst.msk [vmem:[#allocation2 + $0x90] sm:$0xff] %vm3031, %v2144
          %3051 = vst.msk [vmem:[#allocation2 + $0x98] sm:$0xff] %vm3031, %v2212
          %3052 = vst.msk [vmem:[#allocation2 + $0xa0] sm:$0xff] %vm3031, %v2280
          %3053 = vst.msk [vmem:[#allocation2 + $0xa8] sm:$0xff] %vm3031, %v2348
          %3054 = vst.msk [vmem:[#allocation2 + $0xb0] sm:$0xff] %vm3031, %v2416
          %3055 = vst.msk [vmem:[#allocation2 + $0xb8] sm:$0xff] %vm3031, %v2484
          %3056 = vst.msk [vmem:[#allocation2 + $0xc0] sm:$0xff] %vm3031, %v2552
          %3057 = vst.msk [vmem:[#allocation2 + $0xc8] sm:$0xff] %vm3031, %v2620
          %3058 = vst.msk [vmem:[#allocation2 + $0xd0] sm:$0xff] %vm3031, %v2688
          %3059 = vst.msk [vmem:[#allocation2 + $0xd8] sm:$0xff] %vm3031, %v2756
          %3060 = vst.msk [vmem:[#allocation2 + $0xe0] sm:$0xff] %vm3031, %v2824
          %3061 = vst.msk [vmem:[#allocation2 + $0xe8] sm:$0xff] %vm3031, %v2892
          %3062 = vst.msk [vmem:[#allocation2 + $0xf0] sm:$0xff] %vm3031, %v2960
          %3063 = vst.msk [vmem:[#allocation2 + $0xf8] sm:$0xff] %vm3031, %v3028
          %3064 = vst.msk [vmem:[#allocation2 + $0x100] sm:$0xff] %vm3031, %v2009
          %3065 = vst.msk [vmem:[#allocation2 + $0x108] sm:$0xff] %vm3031, %v2077
          %3066 = vst.msk [vmem:[#allocation2 + $0x110] sm:$0xff] %vm3031, %v2145
          %3067 = vst.msk [vmem:[#allocation2 + $0x118] sm:$0xff] %vm3031, %v2213
          %3068 = vst.msk [vmem:[#allocation2 + $0x120] sm:$0xff] %vm3031, %v2281
          %3069 = vst.msk [vmem:[#allocation2 + $0x128] sm:$0xff] %vm3031, %v2349
          %3070 = vst.msk [vmem:[#allocation2 + $0x130] sm:$0xff] %vm3031, %v2417
          %3071 = vst.msk [vmem:[#allocation2 + $0x138] sm:$0xff] %vm3031, %v2485
          %3072 = vst.msk [vmem:[#allocation2 + $0x140] sm:$0xff] %vm3031, %v2553
          %3073 = vst.msk [vmem:[#allocation2 + $0x148] sm:$0xff] %vm3031, %v2621
          %3074 = vst.msk [vmem:[#allocation2 + $0x150] sm:$0xff] %vm3031, %v2689
          %3075 = vst.msk [vmem:[#allocation2 + $0x158] sm:$0xff] %vm3031, %v2757
          %3076 = vst.msk [vmem:[#allocation2 + $0x160] sm:$0xff] %vm3031, %v2825
          %3077 = vst.msk [vmem:[#allocation2 + $0x168] sm:$0xff] %vm3031, %v2893
          %3078 = vst.msk [vmem:[#allocation2 + $0x170] sm:$0xff] %vm3031, %v2961
          %3079 = vst.msk [vmem:[#allocation2 + $0x178] sm:$0xff] %vm3031, %v3029
          %3080 = vst.msk [vmem:[#allocation2 + $0x180] sm:$0xff] %vm3031, %v2010
          %3081 = vst.msk [vmem:[#allocation2 + $0x188] sm:$0xff] %vm3031, %v2078
          %3082 = vst.msk [vmem:[#allocation2 + $0x190] sm:$0xff] %vm3031, %v2146
          %3083 = vst.msk [vmem:[#allocation2 + $0x198] sm:$0xff] %vm3031, %v2214
          %3084 = vst.msk [vmem:[#allocation2 + $0x1a0] sm:$0xff] %vm3031, %v2282
          %3085 = vst.msk [vmem:[#allocation2 + $0x1a8] sm:$0xff] %vm3031, %v2350
          %3086 = vst.msk [vmem:[#allocation2 + $0x1b0] sm:$0xff] %vm3031, %v2418
          %3087 = vst.msk [vmem:[#allocation2 + $0x1b8] sm:$0xff] %vm3031, %v2486
          %3088 = vst.msk [vmem:[#allocation2 + $0x1c0] sm:$0xff] %vm3031, %v2554
          %3089 = vst.msk [vmem:[#allocation2 + $0x1c8] sm:$0xff] %vm3031, %v2622
          %3090 = vst.msk [vmem:[#allocation2 + $0x1d0] sm:$0xff] %vm3031, %v2690
          %3091 = vst.msk [vmem:[#allocation2 + $0x1d8] sm:$0xff] %vm3031, %v2758
          %3092 = vst.msk [vmem:[#allocation2 + $0x1e0] sm:$0xff] %vm3031, %v2826
          %3093 = vst.msk [vmem:[#allocation2 + $0x1e8] sm:$0xff] %vm3031, %v2894
          %3094 = vst.msk [vmem:[#allocation2 + $0x1f0] sm:$0xff] %vm3031, %v2962
          %3095 = vst.msk [vmem:[#allocation2 + $0x1f8] sm:$0xff] %vm3031, %v3030
          %3112 = vrot.lane.b32.xlu0 %v617, 112
          %v3113 = vpop.permute.xlu0 %3112
          %3114 = vrot.lane.b32.xlu0 %v622, 112
          %v3115 = vpop.permute.xlu0 %3114
          %3116 = vrot.lane.b32.xlu0 %v627, 112
          %v3117 = vpop.permute.xlu0 %3116
          %3118 = vrot.lane.b32.xlu0 %v632, 112
          %v3119 = vpop.permute.xlu0 %3118
          %3120 = vrot.lane.b32.xlu0 %v637, 112
          %v3121 = vpop.permute.xlu0 %3120
          %3122 = vrot.lane.b32.xlu0 %v642, 112
          %v3123 = vpop.permute.xlu0 %3122
          %3124 = vrot.lane.b32.xlu0 %v647, 112
          %v3125 = vpop.permute.xlu0 %3124
          %3126 = vrot.lane.b32.xlu0 %v652, 112
          %v3127 = vpop.permute.xlu0 %3126
          %3128 = vrot.lane.b32.xlu0 %v657, 112
          %v3129 = vpop.permute.xlu0 %3128
          %3130 = vrot.lane.b32.xlu0 %v662, 112
          %v3131 = vpop.permute.xlu0 %3130
          %3132 = vrot.lane.b32.xlu0 %v667, 112
          %v3133 = vpop.permute.xlu0 %3132
          %3134 = vrot.lane.b32.xlu0 %v672, 112
          %v3135 = vpop.permute.xlu0 %3134
          %3136 = vrot.lane.b32.xlu0 %v677, 112
          %v3137 = vpop.permute.xlu0 %3136
          %3138 = vrot.lane.b32.xlu0 %v682, 112
          %v3139 = vpop.permute.xlu0 %3138
          %3140 = vrot.lane.b32.xlu0 %v687, 112
          %v3141 = vpop.permute.xlu0 %3140
          %3142 = vrot.lane.b32.xlu0 %v692, 112
          %v3143 = vpop.permute.xlu0 %3142
          %3160 = vrot.lane.b32.xlu0 %v617, 96
          %v3161 = vpop.permute.xlu0 %3160
          %3162 = vrot.lane.b32.xlu0 %v622, 96
          %v3163 = vpop.permute.xlu0 %3162
          %3164 = vrot.lane.b32.xlu0 %v627, 96
          %v3165 = vpop.permute.xlu0 %3164
          %3166 = vrot.lane.b32.xlu0 %v632, 96
          %v3167 = vpop.permute.xlu0 %3166
          %3168 = vrot.lane.b32.xlu0 %v637, 96
          %v3169 = vpop.permute.xlu0 %3168
          %3170 = vrot.lane.b32.xlu0 %v642, 96
          %v3171 = vpop.permute.xlu0 %3170
          %3172 = vrot.lane.b32.xlu0 %v647, 96
          %v3173 = vpop.permute.xlu0 %3172
          %3174 = vrot.lane.b32.xlu0 %v652, 96
          %v3175 = vpop.permute.xlu0 %3174
          %3176 = vrot.lane.b32.xlu0 %v657, 96
          %v3177 = vpop.permute.xlu0 %3176
          %3178 = vrot.lane.b32.xlu0 %v662, 96
          %v3179 = vpop.permute.xlu0 %3178
          %3180 = vrot.lane.b32.xlu0 %v667, 96
          %v3181 = vpop.permute.xlu0 %3180
          %3182 = vrot.lane.b32.xlu0 %v672, 96
          %v3183 = vpop.permute.xlu0 %3182
          %3184 = vrot.lane.b32.xlu0 %v677, 96
          %v3185 = vpop.permute.xlu0 %3184
          %3186 = vrot.lane.b32.xlu0 %v682, 96
          %v3187 = vpop.permute.xlu0 %3186
          %3188 = vrot.lane.b32.xlu0 %v687, 96
          %v3189 = vpop.permute.xlu0 %3188
          %3190 = vrot.lane.b32.xlu0 %v692, 96
          %v3191 = vpop.permute.xlu0 %3190
          %3208 = vrot.lane.b32.xlu0 %v617, 80
          %v3209 = vpop.permute.xlu0 %3208
          %3210 = vrot.lane.b32.xlu0 %v622, 80
          %v3211 = vpop.permute.xlu0 %3210
          %3212 = vrot.lane.b32.xlu0 %v627, 80
          %v3213 = vpop.permute.xlu0 %3212
          %3214 = vrot.lane.b32.xlu0 %v632, 80
          %v3215 = vpop.permute.xlu0 %3214
          %3216 = vrot.lane.b32.xlu0 %v637, 80
          %v3217 = vpop.permute.xlu0 %3216
          %3218 = vrot.lane.b32.xlu0 %v642, 80
          %v3219 = vpop.permute.xlu0 %3218
          %3220 = vrot.lane.b32.xlu0 %v647, 80
          %v3221 = vpop.permute.xlu0 %3220
          %3222 = vrot.lane.b32.xlu0 %v652, 80
          %v3223 = vpop.permute.xlu0 %3222
          %3224 = vrot.lane.b32.xlu0 %v657, 80
          %v3225 = vpop.permute.xlu0 %3224
          %3226 = vrot.lane.b32.xlu0 %v662, 80
          %v3227 = vpop.permute.xlu0 %3226
          %3228 = vrot.lane.b32.xlu0 %v667, 80
          %v3229 = vpop.permute.xlu0 %3228
          %3230 = vrot.lane.b32.xlu0 %v672, 80
          %v3231 = vpop.permute.xlu0 %3230
          %3232 = vrot.lane.b32.xlu0 %v677, 80
          %v3233 = vpop.permute.xlu0 %3232
          %3234 = vrot.lane.b32.xlu0 %v682, 80
          %v3235 = vpop.permute.xlu0 %3234
          %3236 = vrot.lane.b32.xlu0 %v687, 80
          %v3237 = vpop.permute.xlu0 %3236
          %3238 = vrot.lane.b32.xlu0 %v692, 80
          %v3239 = vpop.permute.xlu0 %3238
          %v3256 = vcombine.low %v617, %v3161
          %v3257 = vcombine.high %v617, %v3161
          %v3259 = vunpack.c.l.s4 1983009808
          %v3260 = vunpack.c.0.s8 %v3259
          %v3261 = vlaneseq
          %v3262 = vshrl.u32 %v3261, 7
          %v3263 = vsub.s32 %v3260, %v3262
          %v3264 = vrot.slane %v3256, %v3263
          %v3266 = vunpack.c.l.s4 1983009808
          %v3267 = vunpack.c.0.s8 %v3266
          %v3268 = vlaneseq
          %v3269 = vshrl.u32 %v3268, 7
          %v3270 = vsub.s32 %v3267, %v3269
          %v3271 = vrot.slane %v3257, %v3270
          %v3272 = vcombine.low %v3113, %v3209
          %v3273 = vcombine.high %v3113, %v3209
          %v3275 = vunpack.c.l.s4 1983009808
          %v3276 = vunpack.c.0.s8 %v3275
          %v3277 = vlaneseq
          %v3278 = vshrl.u32 %v3277, 7
          %v3279 = vsub.s32 %v3276, %v3278
          %v3280 = vrot.slane %v3272, %v3279
          %v3282 = vunpack.c.l.s4 1983009808
          %v3283 = vunpack.c.0.s8 %v3282
          %v3284 = vlaneseq
          %v3285 = vshrl.u32 %v3284, 7
          %v3286 = vsub.s32 %v3283, %v3285
          %v3287 = vrot.slane %v3273, %v3286
          %v3288 = vcombine.low %v3264, %v3280
          %v3289 = vcombine.high %v3264, %v3280
          %v3291 = vunpack.c.l.s4 1934713408
          %v3292 = vunpack.c.0.s8 %v3291
          %v3293 = vlaneseq
          %v3294 = vshrl.u32 %v3293, 7
          %v3295 = vsub.s32 %v3292, %v3294
          %v3296 = vrot.slane %v3288, %v3295
          %v3298 = vunpack.c.l.s4 1934713408
          %v3299 = vunpack.c.0.s8 %v3298
          %v3300 = vlaneseq
          %v3301 = vshrl.u32 %v3300, 7
          %v3302 = vsub.s32 %v3299, %v3301
          %v3303 = vrot.slane %v3289, %v3302
          %v3304 = vcombine.low %v3271, %v3287
          %v3305 = vcombine.high %v3271, %v3287
          %v3307 = vunpack.c.l.s4 1934713408
          %v3308 = vunpack.c.0.s8 %v3307
          %v3309 = vlaneseq
          %v3310 = vshrl.u32 %v3309, 7
          %v3311 = vsub.s32 %v3308, %v3310
          %v3312 = vrot.slane %v3304, %v3311
          %v3314 = vunpack.c.l.s4 1934713408
          %v3315 = vunpack.c.0.s8 %v3314
          %v3316 = vlaneseq
          %v3317 = vshrl.u32 %v3316, 7
          %v3318 = vsub.s32 %v3315, %v3317
          %v3319 = vrot.slane %v3305, %v3318
          %v3320 = vcombine.high %v3296, 0.0
          %v3321 = vcombine.high %v3303, 0.0
          %v3322 = vcombine.high %v3312, 0.0
          %v3323 = vcombine.high %v3319, 0.0
          %v3324 = vcombine.low %v622, %v3163
          %v3325 = vcombine.high %v622, %v3163
          %v3327 = vunpack.c.l.s4 1983009808
          %v3328 = vunpack.c.0.s8 %v3327
          %v3329 = vlaneseq
          %v3330 = vshrl.u32 %v3329, 7
          %v3331 = vsub.s32 %v3328, %v3330
          %v3332 = vrot.slane %v3324, %v3331
          %v3334 = vunpack.c.l.s4 1983009808
          %v3335 = vunpack.c.0.s8 %v3334
          %v3336 = vlaneseq
          %v3337 = vshrl.u32 %v3336, 7
          %v3338 = vsub.s32 %v3335, %v3337
          %v3339 = vrot.slane %v3325, %v3338
          %v3340 = vcombine.low %v3115, %v3211
          %v3341 = vcombine.high %v3115, %v3211
          %v3343 = vunpack.c.l.s4 1983009808
          %v3344 = vunpack.c.0.s8 %v3343
          %v3345 = vlaneseq
          %v3346 = vshrl.u32 %v3345, 7
          %v3347 = vsub.s32 %v3344, %v3346
          %v3348 = vrot.slane %v3340, %v3347
          %v3350 = vunpack.c.l.s4 1983009808
          %v3351 = vunpack.c.0.s8 %v3350
          %v3352 = vlaneseq
          %v3353 = vshrl.u32 %v3352, 7
          %v3354 = vsub.s32 %v3351, %v3353
          %v3355 = vrot.slane %v3341, %v3354
          %v3356 = vcombine.low %v3332, %v3348
          %v3357 = vcombine.high %v3332, %v3348
          %v3359 = vunpack.c.l.s4 1934713408
          %v3360 = vunpack.c.0.s8 %v3359
          %v3361 = vlaneseq
          %v3362 = vshrl.u32 %v3361, 7
          %v3363 = vsub.s32 %v3360, %v3362
          %v3364 = vrot.slane %v3356, %v3363
          %v3366 = vunpack.c.l.s4 1934713408
          %v3367 = vunpack.c.0.s8 %v3366
          %v3368 = vlaneseq
          %v3369 = vshrl.u32 %v3368, 7
          %v3370 = vsub.s32 %v3367, %v3369
          %v3371 = vrot.slane %v3357, %v3370
          %v3372 = vcombine.low %v3339, %v3355
          %v3373 = vcombine.high %v3339, %v3355
          %v3375 = vunpack.c.l.s4 1934713408
          %v3376 = vunpack.c.0.s8 %v3375
          %v3377 = vlaneseq
          %v3378 = vshrl.u32 %v3377, 7
          %v3379 = vsub.s32 %v3376, %v3378
          %v3380 = vrot.slane %v3372, %v3379
          %v3382 = vunpack.c.l.s4 1934713408
          %v3383 = vunpack.c.0.s8 %v3382
          %v3384 = vlaneseq
          %v3385 = vshrl.u32 %v3384, 7
          %v3386 = vsub.s32 %v3383, %v3385
          %v3387 = vrot.slane %v3373, %v3386
          %v3388 = vcombine.high %v3364, 0.0
          %v3389 = vcombine.high %v3371, 0.0
          %v3390 = vcombine.high %v3380, 0.0
          %v3391 = vcombine.high %v3387, 0.0
          %v3392 = vcombine.low %v627, %v3165
          %v3393 = vcombine.high %v627, %v3165
          %v3395 = vunpack.c.l.s4 1983009808
          %v3396 = vunpack.c.0.s8 %v3395
          %v3397 = vlaneseq
          %v3398 = vshrl.u32 %v3397, 7
          %v3399 = vsub.s32 %v3396, %v3398
          %v3400 = vrot.slane %v3392, %v3399
          %v3402 = vunpack.c.l.s4 1983009808
          %v3403 = vunpack.c.0.s8 %v3402
          %v3404 = vlaneseq
          %v3405 = vshrl.u32 %v3404, 7
          %v3406 = vsub.s32 %v3403, %v3405
          %v3407 = vrot.slane %v3393, %v3406
          %v3408 = vcombine.low %v3117, %v3213
          %v3409 = vcombine.high %v3117, %v3213
          %v3411 = vunpack.c.l.s4 1983009808
          %v3412 = vunpack.c.0.s8 %v3411
          %v3413 = vlaneseq
          %v3414 = vshrl.u32 %v3413, 7
          %v3415 = vsub.s32 %v3412, %v3414
          %v3416 = vrot.slane %v3408, %v3415
          %v3418 = vunpack.c.l.s4 1983009808
          %v3419 = vunpack.c.0.s8 %v3418
          %v3420 = vlaneseq
          %v3421 = vshrl.u32 %v3420, 7
          %v3422 = vsub.s32 %v3419, %v3421
          %v3423 = vrot.slane %v3409, %v3422
          %v3424 = vcombine.low %v3400, %v3416
          %v3425 = vcombine.high %v3400, %v3416
          %v3427 = vunpack.c.l.s4 1934713408
          %v3428 = vunpack.c.0.s8 %v3427
          %v3429 = vlaneseq
          %v3430 = vshrl.u32 %v3429, 7
          %v3431 = vsub.s32 %v3428, %v3430
          %v3432 = vrot.slane %v3424, %v3431
          %v3434 = vunpack.c.l.s4 1934713408
          %v3435 = vunpack.c.0.s8 %v3434
          %v3436 = vlaneseq
          %v3437 = vshrl.u32 %v3436, 7
          %v3438 = vsub.s32 %v3435, %v3437
          %v3439 = vrot.slane %v3425, %v3438
          %v3440 = vcombine.low %v3407, %v3423
          %v3441 = vcombine.high %v3407, %v3423
          %v3443 = vunpack.c.l.s4 1934713408
          %v3444 = vunpack.c.0.s8 %v3443
          %v3445 = vlaneseq
          %v3446 = vshrl.u32 %v3445, 7
          %v3447 = vsub.s32 %v3444, %v3446
          %v3448 = vrot.slane %v3440, %v3447
          %v3450 = vunpack.c.l.s4 1934713408
          %v3451 = vunpack.c.0.s8 %v3450
          %v3452 = vlaneseq
          %v3453 = vshrl.u32 %v3452, 7
          %v3454 = vsub.s32 %v3451, %v3453
          %v3455 = vrot.slane %v3441, %v3454
          %v3456 = vcombine.high %v3432, 0.0
          %v3457 = vcombine.high %v3439, 0.0
          %v3458 = vcombine.high %v3448, 0.0
          %v3459 = vcombine.high %v3455, 0.0
          %v3460 = vcombine.low %v632, %v3167
          %v3461 = vcombine.high %v632, %v3167
          %v3463 = vunpack.c.l.s4 1983009808
          %v3464 = vunpack.c.0.s8 %v3463
          %v3465 = vlaneseq
          %v3466 = vshrl.u32 %v3465, 7
          %v3467 = vsub.s32 %v3464, %v3466
          %v3468 = vrot.slane %v3460, %v3467
          %v3470 = vunpack.c.l.s4 1983009808
          %v3471 = vunpack.c.0.s8 %v3470
          %v3472 = vlaneseq
          %v3473 = vshrl.u32 %v3472, 7
          %v3474 = vsub.s32 %v3471, %v3473
          %v3475 = vrot.slane %v3461, %v3474
          %v3476 = vcombine.low %v3119, %v3215
          %v3477 = vcombine.high %v3119, %v3215
          %v3479 = vunpack.c.l.s4 1983009808
          %v3480 = vunpack.c.0.s8 %v3479
          %v3481 = vlaneseq
          %v3482 = vshrl.u32 %v3481, 7
          %v3483 = vsub.s32 %v3480, %v3482
          %v3484 = vrot.slane %v3476, %v3483
          %v3486 = vunpack.c.l.s4 1983009808
          %v3487 = vunpack.c.0.s8 %v3486
          %v3488 = vlaneseq
          %v3489 = vshrl.u32 %v3488, 7
          %v3490 = vsub.s32 %v3487, %v3489
          %v3491 = vrot.slane %v3477, %v3490
          %v3492 = vcombine.low %v3468, %v3484
          %v3493 = vcombine.high %v3468, %v3484
          %v3495 = vunpack.c.l.s4 1934713408
          %v3496 = vunpack.c.0.s8 %v3495
          %v3497 = vlaneseq
          %v3498 = vshrl.u32 %v3497, 7
          %v3499 = vsub.s32 %v3496, %v3498
          %v3500 = vrot.slane %v3492, %v3499
          %v3502 = vunpack.c.l.s4 1934713408
          %v3503 = vunpack.c.0.s8 %v3502
          %v3504 = vlaneseq
          %v3505 = vshrl.u32 %v3504, 7
          %v3506 = vsub.s32 %v3503, %v3505
          %v3507 = vrot.slane %v3493, %v3506
          %v3508 = vcombine.low %v3475, %v3491
          %v3509 = vcombine.high %v3475, %v3491
          %v3511 = vunpack.c.l.s4 1934713408
          %v3512 = vunpack.c.0.s8 %v3511
          %v3513 = vlaneseq
          %v3514 = vshrl.u32 %v3513, 7
          %v3515 = vsub.s32 %v3512, %v3514
          %v3516 = vrot.slane %v3508, %v3515
          %v3518 = vunpack.c.l.s4 1934713408
          %v3519 = vunpack.c.0.s8 %v3518
          %v3520 = vlaneseq
          %v3521 = vshrl.u32 %v3520, 7
          %v3522 = vsub.s32 %v3519, %v3521
          %v3523 = vrot.slane %v3509, %v3522
          %v3524 = vcombine.high %v3500, 0.0
          %v3525 = vcombine.high %v3507, 0.0
          %v3526 = vcombine.high %v3516, 0.0
          %v3527 = vcombine.high %v3523, 0.0
          %v3528 = vcombine.low %v637, %v3169
          %v3529 = vcombine.high %v637, %v3169
          %v3531 = vunpack.c.l.s4 1983009808
          %v3532 = vunpack.c.0.s8 %v3531
          %v3533 = vlaneseq
          %v3534 = vshrl.u32 %v3533, 7
          %v3535 = vsub.s32 %v3532, %v3534
          %v3536 = vrot.slane %v3528, %v3535
          %v3538 = vunpack.c.l.s4 1983009808
          %v3539 = vunpack.c.0.s8 %v3538
          %v3540 = vlaneseq
          %v3541 = vshrl.u32 %v3540, 7
          %v3542 = vsub.s32 %v3539, %v3541
          %v3543 = vrot.slane %v3529, %v3542
          %v3544 = vcombine.low %v3121, %v3217
          %v3545 = vcombine.high %v3121, %v3217
          %v3547 = vunpack.c.l.s4 1983009808
          %v3548 = vunpack.c.0.s8 %v3547
          %v3549 = vlaneseq
          %v3550 = vshrl.u32 %v3549, 7
          %v3551 = vsub.s32 %v3548, %v3550
          %v3552 = vrot.slane %v3544, %v3551
          %v3554 = vunpack.c.l.s4 1983009808
          %v3555 = vunpack.c.0.s8 %v3554
          %v3556 = vlaneseq
          %v3557 = vshrl.u32 %v3556, 7
          %v3558 = vsub.s32 %v3555, %v3557
          %v3559 = vrot.slane %v3545, %v3558
          %v3560 = vcombine.low %v3536, %v3552
          %v3561 = vcombine.high %v3536, %v3552
          %v3563 = vunpack.c.l.s4 1934713408
          %v3564 = vunpack.c.0.s8 %v3563
          %v3565 = vlaneseq
          %v3566 = vshrl.u32 %v3565, 7
          %v3567 = vsub.s32 %v3564, %v3566
          %v3568 = vrot.slane %v3560, %v3567
          %v3570 = vunpack.c.l.s4 1934713408
          %v3571 = vunpack.c.0.s8 %v3570
          %v3572 = vlaneseq
          %v3573 = vshrl.u32 %v3572, 7
          %v3574 = vsub.s32 %v3571, %v3573
          %v3575 = vrot.slane %v3561, %v3574
          %v3576 = vcombine.low %v3543, %v3559
          %v3577 = vcombine.high %v3543, %v3559
          %v3579 = vunpack.c.l.s4 1934713408
          %v3580 = vunpack.c.0.s8 %v3579
          %v3581 = vlaneseq
          %v3582 = vshrl.u32 %v3581, 7
          %v3583 = vsub.s32 %v3580, %v3582
          %v3584 = vrot.slane %v3576, %v3583
          %v3586 = vunpack.c.l.s4 1934713408
          %v3587 = vunpack.c.0.s8 %v3586
          %v3588 = vlaneseq
          %v3589 = vshrl.u32 %v3588, 7
          %v3590 = vsub.s32 %v3587, %v3589
          %v3591 = vrot.slane %v3577, %v3590
          %v3592 = vcombine.high %v3568, 0.0
          %v3593 = vcombine.high %v3575, 0.0
          %v3594 = vcombine.high %v3584, 0.0
          %v3595 = vcombine.high %v3591, 0.0
          %v3596 = vcombine.low %v642, %v3171
          %v3597 = vcombine.high %v642, %v3171
          %v3599 = vunpack.c.l.s4 1983009808
          %v3600 = vunpack.c.0.s8 %v3599
          %v3601 = vlaneseq
          %v3602 = vshrl.u32 %v3601, 7
          %v3603 = vsub.s32 %v3600, %v3602
          %v3604 = vrot.slane %v3596, %v3603
          %v3606 = vunpack.c.l.s4 1983009808
          %v3607 = vunpack.c.0.s8 %v3606
          %v3608 = vlaneseq
          %v3609 = vshrl.u32 %v3608, 7
          %v3610 = vsub.s32 %v3607, %v3609
          %v3611 = vrot.slane %v3597, %v3610
          %v3612 = vcombine.low %v3123, %v3219
          %v3613 = vcombine.high %v3123, %v3219
          %v3615 = vunpack.c.l.s4 1983009808
          %v3616 = vunpack.c.0.s8 %v3615
          %v3617 = vlaneseq
          %v3618 = vshrl.u32 %v3617, 7
          %v3619 = vsub.s32 %v3616, %v3618
          %v3620 = vrot.slane %v3612, %v3619
          %v3622 = vunpack.c.l.s4 1983009808
          %v3623 = vunpack.c.0.s8 %v3622
          %v3624 = vlaneseq
          %v3625 = vshrl.u32 %v3624, 7
          %v3626 = vsub.s32 %v3623, %v3625
          %v3627 = vrot.slane %v3613, %v3626
          %v3628 = vcombine.low %v3604, %v3620
          %v3629 = vcombine.high %v3604, %v3620
          %v3631 = vunpack.c.l.s4 1934713408
          %v3632 = vunpack.c.0.s8 %v3631
          %v3633 = vlaneseq
          %v3634 = vshrl.u32 %v3633, 7
          %v3635 = vsub.s32 %v3632, %v3634
          %v3636 = vrot.slane %v3628, %v3635
          %v3638 = vunpack.c.l.s4 1934713408
          %v3639 = vunpack.c.0.s8 %v3638
          %v3640 = vlaneseq
          %v3641 = vshrl.u32 %v3640, 7
          %v3642 = vsub.s32 %v3639, %v3641
          %v3643 = vrot.slane %v3629, %v3642
          %v3644 = vcombine.low %v3611, %v3627
          %v3645 = vcombine.high %v3611, %v3627
          %v3647 = vunpack.c.l.s4 1934713408
          %v3648 = vunpack.c.0.s8 %v3647
          %v3649 = vlaneseq
          %v3650 = vshrl.u32 %v3649, 7
          %v3651 = vsub.s32 %v3648, %v3650
          %v3652 = vrot.slane %v3644, %v3651
          %v3654 = vunpack.c.l.s4 1934713408
          %v3655 = vunpack.c.0.s8 %v3654
          %v3656 = vlaneseq
          %v3657 = vshrl.u32 %v3656, 7
          %v3658 = vsub.s32 %v3655, %v3657
          %v3659 = vrot.slane %v3645, %v3658
          %v3660 = vcombine.high %v3636, 0.0
          %v3661 = vcombine.high %v3643, 0.0
          %v3662 = vcombine.high %v3652, 0.0
          %v3663 = vcombine.high %v3659, 0.0
          %v3664 = vcombine.low %v647, %v3173
          %v3665 = vcombine.high %v647, %v3173
          %v3667 = vunpack.c.l.s4 1983009808
          %v3668 = vunpack.c.0.s8 %v3667
          %v3669 = vlaneseq
          %v3670 = vshrl.u32 %v3669, 7
          %v3671 = vsub.s32 %v3668, %v3670
          %v3672 = vrot.slane %v3664, %v3671
          %v3674 = vunpack.c.l.s4 1983009808
          %v3675 = vunpack.c.0.s8 %v3674
          %v3676 = vlaneseq
          %v3677 = vshrl.u32 %v3676, 7
          %v3678 = vsub.s32 %v3675, %v3677
          %v3679 = vrot.slane %v3665, %v3678
          %v3680 = vcombine.low %v3125, %v3221
          %v3681 = vcombine.high %v3125, %v3221
          %v3683 = vunpack.c.l.s4 1983009808
          %v3684 = vunpack.c.0.s8 %v3683
          %v3685 = vlaneseq
          %v3686 = vshrl.u32 %v3685, 7
          %v3687 = vsub.s32 %v3684, %v3686
          %v3688 = vrot.slane %v3680, %v3687
          %v3690 = vunpack.c.l.s4 1983009808
          %v3691 = vunpack.c.0.s8 %v3690
          %v3692 = vlaneseq
          %v3693 = vshrl.u32 %v3692, 7
          %v3694 = vsub.s32 %v3691, %v3693
          %v3695 = vrot.slane %v3681, %v3694
          %v3696 = vcombine.low %v3672, %v3688
          %v3697 = vcombine.high %v3672, %v3688
          %v3699 = vunpack.c.l.s4 1934713408
          %v3700 = vunpack.c.0.s8 %v3699
          %v3701 = vlaneseq
          %v3702 = vshrl.u32 %v3701, 7
          %v3703 = vsub.s32 %v3700, %v3702
          %v3704 = vrot.slane %v3696, %v3703
          %v3706 = vunpack.c.l.s4 1934713408
          %v3707 = vunpack.c.0.s8 %v3706
          %v3708 = vlaneseq
          %v3709 = vshrl.u32 %v3708, 7
          %v3710 = vsub.s32 %v3707, %v3709
          %v3711 = vrot.slane %v3697, %v3710
          %v3712 = vcombine.low %v3679, %v3695
          %v3713 = vcombine.high %v3679, %v3695
          %v3715 = vunpack.c.l.s4 1934713408
          %v3716 = vunpack.c.0.s8 %v3715
          %v3717 = vlaneseq
          %v3718 = vshrl.u32 %v3717, 7
          %v3719 = vsub.s32 %v3716, %v3718
          %v3720 = vrot.slane %v3712, %v3719
          %v3722 = vunpack.c.l.s4 1934713408
          %v3723 = vunpack.c.0.s8 %v3722
          %v3724 = vlaneseq
          %v3725 = vshrl.u32 %v3724, 7
          %v3726 = vsub.s32 %v3723, %v3725
          %v3727 = vrot.slane %v3713, %v3726
          %v3728 = vcombine.high %v3704, 0.0
          %v3729 = vcombine.high %v3711, 0.0
          %v3730 = vcombine.high %v3720, 0.0
          %v3731 = vcombine.high %v3727, 0.0
          %v3732 = vcombine.low %v652, %v3175
          %v3733 = vcombine.high %v652, %v3175
          %v3735 = vunpack.c.l.s4 1983009808
          %v3736 = vunpack.c.0.s8 %v3735
          %v3737 = vlaneseq
          %v3738 = vshrl.u32 %v3737, 7
          %v3739 = vsub.s32 %v3736, %v3738
          %v3740 = vrot.slane %v3732, %v3739
          %v3742 = vunpack.c.l.s4 1983009808
          %v3743 = vunpack.c.0.s8 %v3742
          %v3744 = vlaneseq
          %v3745 = vshrl.u32 %v3744, 7
          %v3746 = vsub.s32 %v3743, %v3745
          %v3747 = vrot.slane %v3733, %v3746
          %v3748 = vcombine.low %v3127, %v3223
          %v3749 = vcombine.high %v3127, %v3223
          %v3751 = vunpack.c.l.s4 1983009808
          %v3752 = vunpack.c.0.s8 %v3751
          %v3753 = vlaneseq
          %v3754 = vshrl.u32 %v3753, 7
          %v3755 = vsub.s32 %v3752, %v3754
          %v3756 = vrot.slane %v3748, %v3755
          %v3758 = vunpack.c.l.s4 1983009808
          %v3759 = vunpack.c.0.s8 %v3758
          %v3760 = vlaneseq
          %v3761 = vshrl.u32 %v3760, 7
          %v3762 = vsub.s32 %v3759, %v3761
          %v3763 = vrot.slane %v3749, %v3762
          %v3764 = vcombine.low %v3740, %v3756
          %v3765 = vcombine.high %v3740, %v3756
          %v3767 = vunpack.c.l.s4 1934713408
          %v3768 = vunpack.c.0.s8 %v3767
          %v3769 = vlaneseq
          %v3770 = vshrl.u32 %v3769, 7
          %v3771 = vsub.s32 %v3768, %v3770
          %v3772 = vrot.slane %v3764, %v3771
          %v3774 = vunpack.c.l.s4 1934713408
          %v3775 = vunpack.c.0.s8 %v3774
          %v3776 = vlaneseq
          %v3777 = vshrl.u32 %v3776, 7
          %v3778 = vsub.s32 %v3775, %v3777
          %v3779 = vrot.slane %v3765, %v3778
          %v3780 = vcombine.low %v3747, %v3763
          %v3781 = vcombine.high %v3747, %v3763
          %v3783 = vunpack.c.l.s4 1934713408
          %v3784 = vunpack.c.0.s8 %v3783
          %v3785 = vlaneseq
          %v3786 = vshrl.u32 %v3785, 7
          %v3787 = vsub.s32 %v3784, %v3786
          %v3788 = vrot.slane %v3780, %v3787
          %v3790 = vunpack.c.l.s4 1934713408
          %v3791 = vunpack.c.0.s8 %v3790
          %v3792 = vlaneseq
          %v3793 = vshrl.u32 %v3792, 7
          %v3794 = vsub.s32 %v3791, %v3793
          %v3795 = vrot.slane %v3781, %v3794
          %v3796 = vcombine.high %v3772, 0.0
          %v3797 = vcombine.high %v3779, 0.0
          %v3798 = vcombine.high %v3788, 0.0
          %v3799 = vcombine.high %v3795, 0.0
          %v3800 = vcombine.low %v657, %v3177
          %v3801 = vcombine.high %v657, %v3177
          %v3803 = vunpack.c.l.s4 1983009808
          %v3804 = vunpack.c.0.s8 %v3803
          %v3805 = vlaneseq
          %v3806 = vshrl.u32 %v3805, 7
          %v3807 = vsub.s32 %v3804, %v3806
          %v3808 = vrot.slane %v3800, %v3807
          %v3810 = vunpack.c.l.s4 1983009808
          %v3811 = vunpack.c.0.s8 %v3810
          %v3812 = vlaneseq
          %v3813 = vshrl.u32 %v3812, 7
          %v3814 = vsub.s32 %v3811, %v3813
          %v3815 = vrot.slane %v3801, %v3814
          %v3816 = vcombine.low %v3129, %v3225
          %v3817 = vcombine.high %v3129, %v3225
          %v3819 = vunpack.c.l.s4 1983009808
          %v3820 = vunpack.c.0.s8 %v3819
          %v3821 = vlaneseq
          %v3822 = vshrl.u32 %v3821, 7
          %v3823 = vsub.s32 %v3820, %v3822
          %v3824 = vrot.slane %v3816, %v3823
          %v3826 = vunpack.c.l.s4 1983009808
          %v3827 = vunpack.c.0.s8 %v3826
          %v3828 = vlaneseq
          %v3829 = vshrl.u32 %v3828, 7
          %v3830 = vsub.s32 %v3827, %v3829
          %v3831 = vrot.slane %v3817, %v3830
          %v3832 = vcombine.low %v3808, %v3824
          %v3833 = vcombine.high %v3808, %v3824
          %v3835 = vunpack.c.l.s4 1934713408
          %v3836 = vunpack.c.0.s8 %v3835
          %v3837 = vlaneseq
          %v3838 = vshrl.u32 %v3837, 7
          %v3839 = vsub.s32 %v3836, %v3838
          %v3840 = vrot.slane %v3832, %v3839
          %v3842 = vunpack.c.l.s4 1934713408
          %v3843 = vunpack.c.0.s8 %v3842
          %v3844 = vlaneseq
          %v3845 = vshrl.u32 %v3844, 7
          %v3846 = vsub.s32 %v3843, %v3845
          %v3847 = vrot.slane %v3833, %v3846
          %v3848 = vcombine.low %v3815, %v3831
          %v3849 = vcombine.high %v3815, %v3831
          %v3851 = vunpack.c.l.s4 1934713408
          %v3852 = vunpack.c.0.s8 %v3851
          %v3853 = vlaneseq
          %v3854 = vshrl.u32 %v3853, 7
          %v3855 = vsub.s32 %v3852, %v3854
          %v3856 = vrot.slane %v3848, %v3855
          %v3858 = vunpack.c.l.s4 1934713408
          %v3859 = vunpack.c.0.s8 %v3858
          %v3860 = vlaneseq
          %v3861 = vshrl.u32 %v3860, 7
          %v3862 = vsub.s32 %v3859, %v3861
          %v3863 = vrot.slane %v3849, %v3862
          %v3864 = vcombine.high %v3840, 0.0
          %v3865 = vcombine.high %v3847, 0.0
          %v3866 = vcombine.high %v3856, 0.0
          %v3867 = vcombine.high %v3863, 0.0
          %v3868 = vcombine.low %v662, %v3179
          %v3869 = vcombine.high %v662, %v3179
          %v3871 = vunpack.c.l.s4 1983009808
          %v3872 = vunpack.c.0.s8 %v3871
          %v3873 = vlaneseq
          %v3874 = vshrl.u32 %v3873, 7
          %v3875 = vsub.s32 %v3872, %v3874
          %v3876 = vrot.slane %v3868, %v3875
          %v3878 = vunpack.c.l.s4 1983009808
          %v3879 = vunpack.c.0.s8 %v3878
          %v3880 = vlaneseq
          %v3881 = vshrl.u32 %v3880, 7
          %v3882 = vsub.s32 %v3879, %v3881
          %v3883 = vrot.slane %v3869, %v3882
          %v3884 = vcombine.low %v3131, %v3227
          %v3885 = vcombine.high %v3131, %v3227
          %v3887 = vunpack.c.l.s4 1983009808
          %v3888 = vunpack.c.0.s8 %v3887
          %v3889 = vlaneseq
          %v3890 = vshrl.u32 %v3889, 7
          %v3891 = vsub.s32 %v3888, %v3890
          %v3892 = vrot.slane %v3884, %v3891
          %v3894 = vunpack.c.l.s4 1983009808
          %v3895 = vunpack.c.0.s8 %v3894
          %v3896 = vlaneseq
          %v3897 = vshrl.u32 %v3896, 7
          %v3898 = vsub.s32 %v3895, %v3897
          %v3899 = vrot.slane %v3885, %v3898
          %v3900 = vcombine.low %v3876, %v3892
          %v3901 = vcombine.high %v3876, %v3892
          %v3903 = vunpack.c.l.s4 1934713408
          %v3904 = vunpack.c.0.s8 %v3903
          %v3905 = vlaneseq
          %v3906 = vshrl.u32 %v3905, 7
          %v3907 = vsub.s32 %v3904, %v3906
          %v3908 = vrot.slane %v3900, %v3907
          %v3910 = vunpack.c.l.s4 1934713408
          %v3911 = vunpack.c.0.s8 %v3910
          %v3912 = vlaneseq
          %v3913 = vshrl.u32 %v3912, 7
          %v3914 = vsub.s32 %v3911, %v3913
          %v3915 = vrot.slane %v3901, %v3914
          %v3916 = vcombine.low %v3883, %v3899
          %v3917 = vcombine.high %v3883, %v3899
          %v3919 = vunpack.c.l.s4 1934713408
          %v3920 = vunpack.c.0.s8 %v3919
          %v3921 = vlaneseq
          %v3922 = vshrl.u32 %v3921, 7
          %v3923 = vsub.s32 %v3920, %v3922
          %v3924 = vrot.slane %v3916, %v3923
          %v3926 = vunpack.c.l.s4 1934713408
          %v3927 = vunpack.c.0.s8 %v3926
          %v3928 = vlaneseq
          %v3929 = vshrl.u32 %v3928, 7
          %v3930 = vsub.s32 %v3927, %v3929
          %v3931 = vrot.slane %v3917, %v3930
          %v3932 = vcombine.high %v3908, 0.0
          %v3933 = vcombine.high %v3915, 0.0
          %v3934 = vcombine.high %v3924, 0.0
          %v3935 = vcombine.high %v3931, 0.0
          %v3936 = vcombine.low %v667, %v3181
          %v3937 = vcombine.high %v667, %v3181
          %v3939 = vunpack.c.l.s4 1983009808
          %v3940 = vunpack.c.0.s8 %v3939
          %v3941 = vlaneseq
          %v3942 = vshrl.u32 %v3941, 7
          %v3943 = vsub.s32 %v3940, %v3942
          %v3944 = vrot.slane %v3936, %v3943
          %v3946 = vunpack.c.l.s4 1983009808
          %v3947 = vunpack.c.0.s8 %v3946
          %v3948 = vlaneseq
          %v3949 = vshrl.u32 %v3948, 7
          %v3950 = vsub.s32 %v3947, %v3949
          %v3951 = vrot.slane %v3937, %v3950
          %v3952 = vcombine.low %v3133, %v3229
          %v3953 = vcombine.high %v3133, %v3229
          %v3955 = vunpack.c.l.s4 1983009808
          %v3956 = vunpack.c.0.s8 %v3955
          %v3957 = vlaneseq
          %v3958 = vshrl.u32 %v3957, 7
          %v3959 = vsub.s32 %v3956, %v3958
          %v3960 = vrot.slane %v3952, %v3959
          %v3962 = vunpack.c.l.s4 1983009808
          %v3963 = vunpack.c.0.s8 %v3962
          %v3964 = vlaneseq
          %v3965 = vshrl.u32 %v3964, 7
          %v3966 = vsub.s32 %v3963, %v3965
          %v3967 = vrot.slane %v3953, %v3966
          %v3968 = vcombine.low %v3944, %v3960
          %v3969 = vcombine.high %v3944, %v3960
          %v3971 = vunpack.c.l.s4 1934713408
          %v3972 = vunpack.c.0.s8 %v3971
          %v3973 = vlaneseq
          %v3974 = vshrl.u32 %v3973, 7
          %v3975 = vsub.s32 %v3972, %v3974
          %v3976 = vrot.slane %v3968, %v3975
          %v3978 = vunpack.c.l.s4 1934713408
          %v3979 = vunpack.c.0.s8 %v3978
          %v3980 = vlaneseq
          %v3981 = vshrl.u32 %v3980, 7
          %v3982 = vsub.s32 %v3979, %v3981
          %v3983 = vrot.slane %v3969, %v3982
          %v3984 = vcombine.low %v3951, %v3967
          %v3985 = vcombine.high %v3951, %v3967
          %v3987 = vunpack.c.l.s4 1934713408
          %v3988 = vunpack.c.0.s8 %v3987
          %v3989 = vlaneseq
          %v3990 = vshrl.u32 %v3989, 7
          %v3991 = vsub.s32 %v3988, %v3990
          %v3992 = vrot.slane %v3984, %v3991
          %v3994 = vunpack.c.l.s4 1934713408
          %v3995 = vunpack.c.0.s8 %v3994
          %v3996 = vlaneseq
          %v3997 = vshrl.u32 %v3996, 7
          %v3998 = vsub.s32 %v3995, %v3997
          %v3999 = vrot.slane %v3985, %v3998
          %v4000 = vcombine.high %v3976, 0.0
          %v4001 = vcombine.high %v3983, 0.0
          %v4002 = vcombine.high %v3992, 0.0
          %v4003 = vcombine.high %v3999, 0.0
          %v4004 = vcombine.low %v672, %v3183
          %v4005 = vcombine.high %v672, %v3183
          %v4007 = vunpack.c.l.s4 1983009808
          %v4008 = vunpack.c.0.s8 %v4007
          %v4009 = vlaneseq
          %v4010 = vshrl.u32 %v4009, 7
          %v4011 = vsub.s32 %v4008, %v4010
          %v4012 = vrot.slane %v4004, %v4011
          %v4014 = vunpack.c.l.s4 1983009808
          %v4015 = vunpack.c.0.s8 %v4014
          %v4016 = vlaneseq
          %v4017 = vshrl.u32 %v4016, 7
          %v4018 = vsub.s32 %v4015, %v4017
          %v4019 = vrot.slane %v4005, %v4018
          %v4020 = vcombine.low %v3135, %v3231
          %v4021 = vcombine.high %v3135, %v3231
          %v4023 = vunpack.c.l.s4 1983009808
          %v4024 = vunpack.c.0.s8 %v4023
          %v4025 = vlaneseq
          %v4026 = vshrl.u32 %v4025, 7
          %v4027 = vsub.s32 %v4024, %v4026
          %v4028 = vrot.slane %v4020, %v4027
          %v4030 = vunpack.c.l.s4 1983009808
          %v4031 = vunpack.c.0.s8 %v4030
          %v4032 = vlaneseq
          %v4033 = vshrl.u32 %v4032, 7
          %v4034 = vsub.s32 %v4031, %v4033
          %v4035 = vrot.slane %v4021, %v4034
          %v4036 = vcombine.low %v4012, %v4028
          %v4037 = vcombine.high %v4012, %v4028
          %v4039 = vunpack.c.l.s4 1934713408
          %v4040 = vunpack.c.0.s8 %v4039
          %v4041 = vlaneseq
          %v4042 = vshrl.u32 %v4041, 7
          %v4043 = vsub.s32 %v4040, %v4042
          %v4044 = vrot.slane %v4036, %v4043
          %v4046 = vunpack.c.l.s4 1934713408
          %v4047 = vunpack.c.0.s8 %v4046
          %v4048 = vlaneseq
          %v4049 = vshrl.u32 %v4048, 7
          %v4050 = vsub.s32 %v4047, %v4049
          %v4051 = vrot.slane %v4037, %v4050
          %v4052 = vcombine.low %v4019, %v4035
          %v4053 = vcombine.high %v4019, %v4035
          %v4055 = vunpack.c.l.s4 1934713408
          %v4056 = vunpack.c.0.s8 %v4055
          %v4057 = vlaneseq
          %v4058 = vshrl.u32 %v4057, 7
          %v4059 = vsub.s32 %v4056, %v4058
          %v4060 = vrot.slane %v4052, %v4059
          %v4062 = vunpack.c.l.s4 1934713408
          %v4063 = vunpack.c.0.s8 %v4062
          %v4064 = vlaneseq
          %v4065 = vshrl.u32 %v4064, 7
          %v4066 = vsub.s32 %v4063, %v4065
          %v4067 = vrot.slane %v4053, %v4066
          %v4068 = vcombine.high %v4044, 0.0
          %v4069 = vcombine.high %v4051, 0.0
          %v4070 = vcombine.high %v4060, 0.0
          %v4071 = vcombine.high %v4067, 0.0
          %v4072 = vcombine.low %v677, %v3185
          %v4073 = vcombine.high %v677, %v3185
          %v4075 = vunpack.c.l.s4 1983009808
          %v4076 = vunpack.c.0.s8 %v4075
          %v4077 = vlaneseq
          %v4078 = vshrl.u32 %v4077, 7
          %v4079 = vsub.s32 %v4076, %v4078
          %v4080 = vrot.slane %v4072, %v4079
          %v4082 = vunpack.c.l.s4 1983009808
          %v4083 = vunpack.c.0.s8 %v4082
          %v4084 = vlaneseq
          %v4085 = vshrl.u32 %v4084, 7
          %v4086 = vsub.s32 %v4083, %v4085
          %v4087 = vrot.slane %v4073, %v4086
          %v4088 = vcombine.low %v3137, %v3233
          %v4089 = vcombine.high %v3137, %v3233
          %v4091 = vunpack.c.l.s4 1983009808
          %v4092 = vunpack.c.0.s8 %v4091
          %v4093 = vlaneseq
          %v4094 = vshrl.u32 %v4093, 7
          %v4095 = vsub.s32 %v4092, %v4094
          %v4096 = vrot.slane %v4088, %v4095
          %v4098 = vunpack.c.l.s4 1983009808
          %v4099 = vunpack.c.0.s8 %v4098
          %v4100 = vlaneseq
          %v4101 = vshrl.u32 %v4100, 7
          %v4102 = vsub.s32 %v4099, %v4101
          %v4103 = vrot.slane %v4089, %v4102
          %v4104 = vcombine.low %v4080, %v4096
          %v4105 = vcombine.high %v4080, %v4096
          %v4107 = vunpack.c.l.s4 1934713408
          %v4108 = vunpack.c.0.s8 %v4107
          %v4109 = vlaneseq
          %v4110 = vshrl.u32 %v4109, 7
          %v4111 = vsub.s32 %v4108, %v4110
          %v4112 = vrot.slane %v4104, %v4111
          %v4114 = vunpack.c.l.s4 1934713408
          %v4115 = vunpack.c.0.s8 %v4114
          %v4116 = vlaneseq
          %v4117 = vshrl.u32 %v4116, 7
          %v4118 = vsub.s32 %v4115, %v4117
          %v4119 = vrot.slane %v4105, %v4118
          %v4120 = vcombine.low %v4087, %v4103
          %v4121 = vcombine.high %v4087, %v4103
          %v4123 = vunpack.c.l.s4 1934713408
          %v4124 = vunpack.c.0.s8 %v4123
          %v4125 = vlaneseq
          %v4126 = vshrl.u32 %v4125, 7
          %v4127 = vsub.s32 %v4124, %v4126
          %v4128 = vrot.slane %v4120, %v4127
          %v4130 = vunpack.c.l.s4 1934713408
          %v4131 = vunpack.c.0.s8 %v4130
          %v4132 = vlaneseq
          %v4133 = vshrl.u32 %v4132, 7
          %v4134 = vsub.s32 %v4131, %v4133
          %v4135 = vrot.slane %v4121, %v4134
          %v4136 = vcombine.high %v4112, 0.0
          %v4137 = vcombine.high %v4119, 0.0
          %v4138 = vcombine.high %v4128, 0.0
          %v4139 = vcombine.high %v4135, 0.0
          %v4140 = vcombine.low %v682, %v3187
          %v4141 = vcombine.high %v682, %v3187
          %v4143 = vunpack.c.l.s4 1983009808
          %v4144 = vunpack.c.0.s8 %v4143
          %v4145 = vlaneseq
          %v4146 = vshrl.u32 %v4145, 7
          %v4147 = vsub.s32 %v4144, %v4146
          %v4148 = vrot.slane %v4140, %v4147
          %v4150 = vunpack.c.l.s4 1983009808
          %v4151 = vunpack.c.0.s8 %v4150
          %v4152 = vlaneseq
          %v4153 = vshrl.u32 %v4152, 7
          %v4154 = vsub.s32 %v4151, %v4153
          %v4155 = vrot.slane %v4141, %v4154
          %v4156 = vcombine.low %v3139, %v3235
          %v4157 = vcombine.high %v3139, %v3235
          %v4159 = vunpack.c.l.s4 1983009808
          %v4160 = vunpack.c.0.s8 %v4159
          %v4161 = vlaneseq
          %v4162 = vshrl.u32 %v4161, 7
          %v4163 = vsub.s32 %v4160, %v4162
          %v4164 = vrot.slane %v4156, %v4163
          %v4166 = vunpack.c.l.s4 1983009808
          %v4167 = vunpack.c.0.s8 %v4166
          %v4168 = vlaneseq
          %v4169 = vshrl.u32 %v4168, 7
          %v4170 = vsub.s32 %v4167, %v4169
          %v4171 = vrot.slane %v4157, %v4170
          %v4172 = vcombine.low %v4148, %v4164
          %v4173 = vcombine.high %v4148, %v4164
          %v4175 = vunpack.c.l.s4 1934713408
          %v4176 = vunpack.c.0.s8 %v4175
          %v4177 = vlaneseq
          %v4178 = vshrl.u32 %v4177, 7
          %v4179 = vsub.s32 %v4176, %v4178
          %v4180 = vrot.slane %v4172, %v4179
          %v4182 = vunpack.c.l.s4 1934713408
          %v4183 = vunpack.c.0.s8 %v4182
          %v4184 = vlaneseq
          %v4185 = vshrl.u32 %v4184, 7
          %v4186 = vsub.s32 %v4183, %v4185
          %v4187 = vrot.slane %v4173, %v4186
          %v4188 = vcombine.low %v4155, %v4171
          %v4189 = vcombine.high %v4155, %v4171
          %v4191 = vunpack.c.l.s4 1934713408
          %v4192 = vunpack.c.0.s8 %v4191
          %v4193 = vlaneseq
          %v4194 = vshrl.u32 %v4193, 7
          %v4195 = vsub.s32 %v4192, %v4194
          %v4196 = vrot.slane %v4188, %v4195
          %v4198 = vunpack.c.l.s4 1934713408
          %v4199 = vunpack.c.0.s8 %v4198
          %v4200 = vlaneseq
          %v4201 = vshrl.u32 %v4200, 7
          %v4202 = vsub.s32 %v4199, %v4201
          %v4203 = vrot.slane %v4189, %v4202
          %v4204 = vcombine.high %v4180, 0.0
          %v4205 = vcombine.high %v4187, 0.0
          %v4206 = vcombine.high %v4196, 0.0
          %v4207 = vcombine.high %v4203, 0.0
          %v4208 = vcombine.low %v687, %v3189
          %v4209 = vcombine.high %v687, %v3189
          %v4211 = vunpack.c.l.s4 1983009808
          %v4212 = vunpack.c.0.s8 %v4211
          %v4213 = vlaneseq
          %v4214 = vshrl.u32 %v4213, 7
          %v4215 = vsub.s32 %v4212, %v4214
          %v4216 = vrot.slane %v4208, %v4215
          %v4218 = vunpack.c.l.s4 1983009808
          %v4219 = vunpack.c.0.s8 %v4218
          %v4220 = vlaneseq
          %v4221 = vshrl.u32 %v4220, 7
          %v4222 = vsub.s32 %v4219, %v4221
          %v4223 = vrot.slane %v4209, %v4222
          %v4224 = vcombine.low %v3141, %v3237
          %v4225 = vcombine.high %v3141, %v3237
          %v4227 = vunpack.c.l.s4 1983009808
          %v4228 = vunpack.c.0.s8 %v4227
          %v4229 = vlaneseq
          %v4230 = vshrl.u32 %v4229, 7
          %v4231 = vsub.s32 %v4228, %v4230
          %v4232 = vrot.slane %v4224, %v4231
          %v4234 = vunpack.c.l.s4 1983009808
          %v4235 = vunpack.c.0.s8 %v4234
          %v4236 = vlaneseq
          %v4237 = vshrl.u32 %v4236, 7
          %v4238 = vsub.s32 %v4235, %v4237
          %v4239 = vrot.slane %v4225, %v4238
          %v4240 = vcombine.low %v4216, %v4232
          %v4241 = vcombine.high %v4216, %v4232
          %v4243 = vunpack.c.l.s4 1934713408
          %v4244 = vunpack.c.0.s8 %v4243
          %v4245 = vlaneseq
          %v4246 = vshrl.u32 %v4245, 7
          %v4247 = vsub.s32 %v4244, %v4246
          %v4248 = vrot.slane %v4240, %v4247
          %v4250 = vunpack.c.l.s4 1934713408
          %v4251 = vunpack.c.0.s8 %v4250
          %v4252 = vlaneseq
          %v4253 = vshrl.u32 %v4252, 7
          %v4254 = vsub.s32 %v4251, %v4253
          %v4255 = vrot.slane %v4241, %v4254
          %v4256 = vcombine.low %v4223, %v4239
          %v4257 = vcombine.high %v4223, %v4239
          %v4259 = vunpack.c.l.s4 1934713408
          %v4260 = vunpack.c.0.s8 %v4259
          %v4261 = vlaneseq
          %v4262 = vshrl.u32 %v4261, 7
          %v4263 = vsub.s32 %v4260, %v4262
          %v4264 = vrot.slane %v4256, %v4263
          %v4266 = vunpack.c.l.s4 1934713408
          %v4267 = vunpack.c.0.s8 %v4266
          %v4268 = vlaneseq
          %v4269 = vshrl.u32 %v4268, 7
          %v4270 = vsub.s32 %v4267, %v4269
          %v4271 = vrot.slane %v4257, %v4270
          %v4272 = vcombine.high %v4248, 0.0
          %v4273 = vcombine.high %v4255, 0.0
          %v4274 = vcombine.high %v4264, 0.0
          %v4275 = vcombine.high %v4271, 0.0
          %v4276 = vcombine.low %v692, %v3191
          %v4277 = vcombine.high %v692, %v3191
          %v4279 = vunpack.c.l.s4 1983009808
          %v4280 = vunpack.c.0.s8 %v4279
          %v4281 = vlaneseq
          %v4282 = vshrl.u32 %v4281, 7
          %v4283 = vsub.s32 %v4280, %v4282
          %v4284 = vrot.slane %v4276, %v4283
          %v4286 = vunpack.c.l.s4 1983009808
          %v4287 = vunpack.c.0.s8 %v4286
          %v4288 = vlaneseq
          %v4289 = vshrl.u32 %v4288, 7
          %v4290 = vsub.s32 %v4287, %v4289
          %v4291 = vrot.slane %v4277, %v4290
          %v4292 = vcombine.low %v3143, %v3239
          %v4293 = vcombine.high %v3143, %v3239
          %v4295 = vunpack.c.l.s4 1983009808
          %v4296 = vunpack.c.0.s8 %v4295
          %v4297 = vlaneseq
          %v4298 = vshrl.u32 %v4297, 7
          %v4299 = vsub.s32 %v4296, %v4298
          %v4300 = vrot.slane %v4292, %v4299
          %v4302 = vunpack.c.l.s4 1983009808
          %v4303 = vunpack.c.0.s8 %v4302
          %v4304 = vlaneseq
          %v4305 = vshrl.u32 %v4304, 7
          %v4306 = vsub.s32 %v4303, %v4305
          %v4307 = vrot.slane %v4293, %v4306
          %v4308 = vcombine.low %v4284, %v4300
          %v4309 = vcombine.high %v4284, %v4300
          %v4311 = vunpack.c.l.s4 1934713408
          %v4312 = vunpack.c.0.s8 %v4311
          %v4313 = vlaneseq
          %v4314 = vshrl.u32 %v4313, 7
          %v4315 = vsub.s32 %v4312, %v4314
          %v4316 = vrot.slane %v4308, %v4315
          %v4318 = vunpack.c.l.s4 1934713408
          %v4319 = vunpack.c.0.s8 %v4318
          %v4320 = vlaneseq
          %v4321 = vshrl.u32 %v4320, 7
          %v4322 = vsub.s32 %v4319, %v4321
          %v4323 = vrot.slane %v4309, %v4322
          %v4324 = vcombine.low %v4291, %v4307
          %v4325 = vcombine.high %v4291, %v4307
          %v4327 = vunpack.c.l.s4 1934713408
          %v4328 = vunpack.c.0.s8 %v4327
          %v4329 = vlaneseq
          %v4330 = vshrl.u32 %v4329, 7
          %v4331 = vsub.s32 %v4328, %v4330
          %v4332 = vrot.slane %v4324, %v4331
          %v4334 = vunpack.c.l.s4 1934713408
          %v4335 = vunpack.c.0.s8 %v4334
          %v4336 = vlaneseq
          %v4337 = vshrl.u32 %v4336, 7
          %v4338 = vsub.s32 %v4335, %v4337
          %v4339 = vrot.slane %v4325, %v4338
          %v4340 = vcombine.high %v4316, 0.0
          %v4341 = vcombine.high %v4323, 0.0
          %v4342 = vcombine.high %v4332, 0.0
          %v4343 = vcombine.high %v4339, 0.0
          %v4344 = vcombine.low %v3296, %v3303
          %v4346 = vunpack.c.l.s4 1983009808
          %v4347 = vunpack.c.0.s8 %v4346
          %v4348 = vlaneseq
          %v4349 = vshrl.u32 %v4348, 7
          %v4350 = vsub.s32 %v4347, %v4349
          %v4351 = vrot.slane %v4344, %v4350
          %v4352 = vcombine.low %v3320, %v3321
          %v4354 = vunpack.c.l.s4 1983009808
          %v4355 = vunpack.c.0.s8 %v4354
          %v4356 = vlaneseq
          %v4357 = vshrl.u32 %v4356, 7
          %v4358 = vsub.s32 %v4355, %v4357
          %v4359 = vrot.slane %v4352, %v4358
          %v4360 = vcombine.low %v3312, %v3319
          %v4362 = vunpack.c.l.s4 1983009808
          %v4363 = vunpack.c.0.s8 %v4362
          %v4364 = vlaneseq
          %v4365 = vshrl.u32 %v4364, 7
          %v4366 = vsub.s32 %v4363, %v4365
          %v4367 = vrot.slane %v4360, %v4366
          %v4368 = vcombine.low %v3322, %v3323
          %v4370 = vunpack.c.l.s4 1983009808
          %v4371 = vunpack.c.0.s8 %v4370
          %v4372 = vlaneseq
          %v4373 = vshrl.u32 %v4372, 7
          %v4374 = vsub.s32 %v4371, %v4373
          %v4375 = vrot.slane %v4368, %v4374
          %v4376 = vcombine.low %v4351, %v4359
          %v4377 = vcombine.high %v4351, %v4359
          %v4379 = vunpack.c.l.s4 1934713408
          %v4380 = vunpack.c.0.s8 %v4379
          %v4381 = vlaneseq
          %v4382 = vshrl.u32 %v4381, 7
          %v4383 = vsub.s32 %v4380, %v4382
          %v4384 = vrot.slane %v4376, %v4383
          %v4386 = vunpack.c.l.s4 1934713408
          %v4387 = vunpack.c.0.s8 %v4386
          %v4388 = vlaneseq
          %v4389 = vshrl.u32 %v4388, 7
          %v4390 = vsub.s32 %v4387, %v4389
          %v4391 = vrot.slane %v4377, %v4390
          %v4392 = vcombine.low %v4367, %v4375
          %v4393 = vcombine.high %v4367, %v4375
          %v4395 = vunpack.c.l.s4 1934713408
          %v4396 = vunpack.c.0.s8 %v4395
          %v4397 = vlaneseq
          %v4398 = vshrl.u32 %v4397, 7
          %v4399 = vsub.s32 %v4396, %v4398
          %v4400 = vrot.slane %v4392, %v4399
          %v4402 = vunpack.c.l.s4 1934713408
          %v4403 = vunpack.c.0.s8 %v4402
          %v4404 = vlaneseq
          %v4405 = vshrl.u32 %v4404, 7
          %v4406 = vsub.s32 %v4403, %v4405
          %v4407 = vrot.slane %v4393, %v4406
          %v4408 = vcombine.low %v4384, %v4400
          %v4409 = vcombine.high %v4384, %v4400
          %v4410 = vcombine.low %v4391, %v4407
          %v4411 = vcombine.high %v4391, %v4407
          %v4412 = vcombine.low %v3364, %v3371
          %v4414 = vunpack.c.l.s4 1983009808
          %v4415 = vunpack.c.0.s8 %v4414
          %v4416 = vlaneseq
          %v4417 = vshrl.u32 %v4416, 7
          %v4418 = vsub.s32 %v4415, %v4417
          %v4419 = vrot.slane %v4412, %v4418
          %v4420 = vcombine.low %v3388, %v3389
          %v4422 = vunpack.c.l.s4 1983009808
          %v4423 = vunpack.c.0.s8 %v4422
          %v4424 = vlaneseq
          %v4425 = vshrl.u32 %v4424, 7
          %v4426 = vsub.s32 %v4423, %v4425
          %v4427 = vrot.slane %v4420, %v4426
          %v4428 = vcombine.low %v3380, %v3387
          %v4430 = vunpack.c.l.s4 1983009808
          %v4431 = vunpack.c.0.s8 %v4430
          %v4432 = vlaneseq
          %v4433 = vshrl.u32 %v4432, 7
          %v4434 = vsub.s32 %v4431, %v4433
          %v4435 = vrot.slane %v4428, %v4434
          %v4436 = vcombine.low %v3390, %v3391
          %v4438 = vunpack.c.l.s4 1983009808
          %v4439 = vunpack.c.0.s8 %v4438
          %v4440 = vlaneseq
          %v4441 = vshrl.u32 %v4440, 7
          %v4442 = vsub.s32 %v4439, %v4441
          %v4443 = vrot.slane %v4436, %v4442
          %v4444 = vcombine.low %v4419, %v4427
          %v4445 = vcombine.high %v4419, %v4427
          %v4447 = vunpack.c.l.s4 1934713408
          %v4448 = vunpack.c.0.s8 %v4447
          %v4449 = vlaneseq
          %v4450 = vshrl.u32 %v4449, 7
          %v4451 = vsub.s32 %v4448, %v4450
          %v4452 = vrot.slane %v4444, %v4451
          %v4454 = vunpack.c.l.s4 1934713408
          %v4455 = vunpack.c.0.s8 %v4454
          %v4456 = vlaneseq
          %v4457 = vshrl.u32 %v4456, 7
          %v4458 = vsub.s32 %v4455, %v4457
          %v4459 = vrot.slane %v4445, %v4458
          %v4460 = vcombine.low %v4435, %v4443
          %v4461 = vcombine.high %v4435, %v4443
          %v4463 = vunpack.c.l.s4 1934713408
          %v4464 = vunpack.c.0.s8 %v4463
          %v4465 = vlaneseq
          %v4466 = vshrl.u32 %v4465, 7
          %v4467 = vsub.s32 %v4464, %v4466
          %v4468 = vrot.slane %v4460, %v4467
          %v4470 = vunpack.c.l.s4 1934713408
          %v4471 = vunpack.c.0.s8 %v4470
          %v4472 = vlaneseq
          %v4473 = vshrl.u32 %v4472, 7
          %v4474 = vsub.s32 %v4471, %v4473
          %v4475 = vrot.slane %v4461, %v4474
          %v4476 = vcombine.low %v4452, %v4468
          %v4477 = vcombine.high %v4452, %v4468
          %v4478 = vcombine.low %v4459, %v4475
          %v4479 = vcombine.high %v4459, %v4475
          %v4480 = vcombine.low %v3432, %v3439
          %v4482 = vunpack.c.l.s4 1983009808
          %v4483 = vunpack.c.0.s8 %v4482
          %v4484 = vlaneseq
          %v4485 = vshrl.u32 %v4484, 7
          %v4486 = vsub.s32 %v4483, %v4485
          %v4487 = vrot.slane %v4480, %v4486
          %v4488 = vcombine.low %v3456, %v3457
          %v4490 = vunpack.c.l.s4 1983009808
          %v4491 = vunpack.c.0.s8 %v4490
          %v4492 = vlaneseq
          %v4493 = vshrl.u32 %v4492, 7
          %v4494 = vsub.s32 %v4491, %v4493
          %v4495 = vrot.slane %v4488, %v4494
          %v4496 = vcombine.low %v3448, %v3455
          %v4498 = vunpack.c.l.s4 1983009808
          %v4499 = vunpack.c.0.s8 %v4498
          %v4500 = vlaneseq
          %v4501 = vshrl.u32 %v4500, 7
          %v4502 = vsub.s32 %v4499, %v4501
          %v4503 = vrot.slane %v4496, %v4502
          %v4504 = vcombine.low %v3458, %v3459
          %v4506 = vunpack.c.l.s4 1983009808
          %v4507 = vunpack.c.0.s8 %v4506
          %v4508 = vlaneseq
          %v4509 = vshrl.u32 %v4508, 7
          %v4510 = vsub.s32 %v4507, %v4509
          %v4511 = vrot.slane %v4504, %v4510
          %v4512 = vcombine.low %v4487, %v4495
          %v4513 = vcombine.high %v4487, %v4495
          %v4515 = vunpack.c.l.s4 1934713408
          %v4516 = vunpack.c.0.s8 %v4515
          %v4517 = vlaneseq
          %v4518 = vshrl.u32 %v4517, 7
          %v4519 = vsub.s32 %v4516, %v4518
          %v4520 = vrot.slane %v4512, %v4519
          %v4522 = vunpack.c.l.s4 1934713408
          %v4523 = vunpack.c.0.s8 %v4522
          %v4524 = vlaneseq
          %v4525 = vshrl.u32 %v4524, 7
          %v4526 = vsub.s32 %v4523, %v4525
          %v4527 = vrot.slane %v4513, %v4526
          %v4528 = vcombine.low %v4503, %v4511
          %v4529 = vcombine.high %v4503, %v4511
          %v4531 = vunpack.c.l.s4 1934713408
          %v4532 = vunpack.c.0.s8 %v4531
          %v4533 = vlaneseq
          %v4534 = vshrl.u32 %v4533, 7
          %v4535 = vsub.s32 %v4532, %v4534
          %v4536 = vrot.slane %v4528, %v4535
          %v4538 = vunpack.c.l.s4 1934713408
          %v4539 = vunpack.c.0.s8 %v4538
          %v4540 = vlaneseq
          %v4541 = vshrl.u32 %v4540, 7
          %v4542 = vsub.s32 %v4539, %v4541
          %v4543 = vrot.slane %v4529, %v4542
          %v4544 = vcombine.low %v4520, %v4536
          %v4545 = vcombine.high %v4520, %v4536
          %v4546 = vcombine.low %v4527, %v4543
          %v4547 = vcombine.high %v4527, %v4543
          %v4548 = vcombine.low %v3500, %v3507
          %v4550 = vunpack.c.l.s4 1983009808
          %v4551 = vunpack.c.0.s8 %v4550
          %v4552 = vlaneseq
          %v4553 = vshrl.u32 %v4552, 7
          %v4554 = vsub.s32 %v4551, %v4553
          %v4555 = vrot.slane %v4548, %v4554
          %v4556 = vcombine.low %v3524, %v3525
          %v4558 = vunpack.c.l.s4 1983009808
          %v4559 = vunpack.c.0.s8 %v4558
          %v4560 = vlaneseq
          %v4561 = vshrl.u32 %v4560, 7
          %v4562 = vsub.s32 %v4559, %v4561
          %v4563 = vrot.slane %v4556, %v4562
          %v4564 = vcombine.low %v3516, %v3523
          %v4566 = vunpack.c.l.s4 1983009808
          %v4567 = vunpack.c.0.s8 %v4566
          %v4568 = vlaneseq
          %v4569 = vshrl.u32 %v4568, 7
          %v4570 = vsub.s32 %v4567, %v4569
          %v4571 = vrot.slane %v4564, %v4570
          %v4572 = vcombine.low %v3526, %v3527
          %v4574 = vunpack.c.l.s4 1983009808
          %v4575 = vunpack.c.0.s8 %v4574
          %v4576 = vlaneseq
          %v4577 = vshrl.u32 %v4576, 7
          %v4578 = vsub.s32 %v4575, %v4577
          %v4579 = vrot.slane %v4572, %v4578
          %v4580 = vcombine.low %v4555, %v4563
          %v4581 = vcombine.high %v4555, %v4563
          %v4583 = vunpack.c.l.s4 1934713408
          %v4584 = vunpack.c.0.s8 %v4583
          %v4585 = vlaneseq
          %v4586 = vshrl.u32 %v4585, 7
          %v4587 = vsub.s32 %v4584, %v4586
          %v4588 = vrot.slane %v4580, %v4587
          %v4590 = vunpack.c.l.s4 1934713408
          %v4591 = vunpack.c.0.s8 %v4590
          %v4592 = vlaneseq
          %v4593 = vshrl.u32 %v4592, 7
          %v4594 = vsub.s32 %v4591, %v4593
          %v4595 = vrot.slane %v4581, %v4594
          %v4596 = vcombine.low %v4571, %v4579
          %v4597 = vcombine.high %v4571, %v4579
          %v4599 = vunpack.c.l.s4 1934713408
          %v4600 = vunpack.c.0.s8 %v4599
          %v4601 = vlaneseq
          %v4602 = vshrl.u32 %v4601, 7
          %v4603 = vsub.s32 %v4600, %v4602
          %v4604 = vrot.slane %v4596, %v4603
          %v4606 = vunpack.c.l.s4 1934713408
          %v4607 = vunpack.c.0.s8 %v4606
          %v4608 = vlaneseq
          %v4609 = vshrl.u32 %v4608, 7
          %v4610 = vsub.s32 %v4607, %v4609
          %v4611 = vrot.slane %v4597, %v4610
          %v4612 = vcombine.low %v4588, %v4604
          %v4613 = vcombine.high %v4588, %v4604
          %v4614 = vcombine.low %v4595, %v4611
          %v4615 = vcombine.high %v4595, %v4611
          %v4616 = vcombine.low %v3568, %v3575
          %v4618 = vunpack.c.l.s4 1983009808
          %v4619 = vunpack.c.0.s8 %v4618
          %v4620 = vlaneseq
          %v4621 = vshrl.u32 %v4620, 7
          %v4622 = vsub.s32 %v4619, %v4621
          %v4623 = vrot.slane %v4616, %v4622
          %v4624 = vcombine.low %v3592, %v3593
          %v4626 = vunpack.c.l.s4 1983009808
          %v4627 = vunpack.c.0.s8 %v4626
          %v4628 = vlaneseq
          %v4629 = vshrl.u32 %v4628, 7
          %v4630 = vsub.s32 %v4627, %v4629
          %v4631 = vrot.slane %v4624, %v4630
          %v4632 = vcombine.low %v3584, %v3591
          %v4634 = vunpack.c.l.s4 1983009808
          %v4635 = vunpack.c.0.s8 %v4634
          %v4636 = vlaneseq
          %v4637 = vshrl.u32 %v4636, 7
          %v4638 = vsub.s32 %v4635, %v4637
          %v4639 = vrot.slane %v4632, %v4638
          %v4640 = vcombine.low %v3594, %v3595
          %v4642 = vunpack.c.l.s4 1983009808
          %v4643 = vunpack.c.0.s8 %v4642
          %v4644 = vlaneseq
          %v4645 = vshrl.u32 %v4644, 7
          %v4646 = vsub.s32 %v4643, %v4645
          %v4647 = vrot.slane %v4640, %v4646
          %v4648 = vcombine.low %v4623, %v4631
          %v4649 = vcombine.high %v4623, %v4631
          %v4651 = vunpack.c.l.s4 1934713408
          %v4652 = vunpack.c.0.s8 %v4651
          %v4653 = vlaneseq
          %v4654 = vshrl.u32 %v4653, 7
          %v4655 = vsub.s32 %v4652, %v4654
          %v4656 = vrot.slane %v4648, %v4655
          %v4658 = vunpack.c.l.s4 1934713408
          %v4659 = vunpack.c.0.s8 %v4658
          %v4660 = vlaneseq
          %v4661 = vshrl.u32 %v4660, 7
          %v4662 = vsub.s32 %v4659, %v4661
          %v4663 = vrot.slane %v4649, %v4662
          %v4664 = vcombine.low %v4639, %v4647
          %v4665 = vcombine.high %v4639, %v4647
          %v4667 = vunpack.c.l.s4 1934713408
          %v4668 = vunpack.c.0.s8 %v4667
          %v4669 = vlaneseq
          %v4670 = vshrl.u32 %v4669, 7
          %v4671 = vsub.s32 %v4668, %v4670
          %v4672 = vrot.slane %v4664, %v4671
          %v4674 = vunpack.c.l.s4 1934713408
          %v4675 = vunpack.c.0.s8 %v4674
          %v4676 = vlaneseq
          %v4677 = vshrl.u32 %v4676, 7
          %v4678 = vsub.s32 %v4675, %v4677
          %v4679 = vrot.slane %v4665, %v4678
          %v4680 = vcombine.low %v4656, %v4672
          %v4681 = vcombine.high %v4656, %v4672
          %v4682 = vcombine.low %v4663, %v4679
          %v4683 = vcombine.high %v4663, %v4679
          %v4684 = vcombine.low %v3636, %v3643
          %v4686 = vunpack.c.l.s4 1983009808
          %v4687 = vunpack.c.0.s8 %v4686
          %v4688 = vlaneseq
          %v4689 = vshrl.u32 %v4688, 7
          %v4690 = vsub.s32 %v4687, %v4689
          %v4691 = vrot.slane %v4684, %v4690
          %v4692 = vcombine.low %v3660, %v3661
          %v4694 = vunpack.c.l.s4 1983009808
          %v4695 = vunpack.c.0.s8 %v4694
          %v4696 = vlaneseq
          %v4697 = vshrl.u32 %v4696, 7
          %v4698 = vsub.s32 %v4695, %v4697
          %v4699 = vrot.slane %v4692, %v4698
          %v4700 = vcombine.low %v3652, %v3659
          %v4702 = vunpack.c.l.s4 1983009808
          %v4703 = vunpack.c.0.s8 %v4702
          %v4704 = vlaneseq
          %v4705 = vshrl.u32 %v4704, 7
          %v4706 = vsub.s32 %v4703, %v4705
          %v4707 = vrot.slane %v4700, %v4706
          %v4708 = vcombine.low %v3662, %v3663
          %v4710 = vunpack.c.l.s4 1983009808
          %v4711 = vunpack.c.0.s8 %v4710
          %v4712 = vlaneseq
          %v4713 = vshrl.u32 %v4712, 7
          %v4714 = vsub.s32 %v4711, %v4713
          %v4715 = vrot.slane %v4708, %v4714
          %v4716 = vcombine.low %v4691, %v4699
          %v4717 = vcombine.high %v4691, %v4699
          %v4719 = vunpack.c.l.s4 1934713408
          %v4720 = vunpack.c.0.s8 %v4719
          %v4721 = vlaneseq
          %v4722 = vshrl.u32 %v4721, 7
          %v4723 = vsub.s32 %v4720, %v4722
          %v4724 = vrot.slane %v4716, %v4723
          %v4726 = vunpack.c.l.s4 1934713408
          %v4727 = vunpack.c.0.s8 %v4726
          %v4728 = vlaneseq
          %v4729 = vshrl.u32 %v4728, 7
          %v4730 = vsub.s32 %v4727, %v4729
          %v4731 = vrot.slane %v4717, %v4730
          %v4732 = vcombine.low %v4707, %v4715
          %v4733 = vcombine.high %v4707, %v4715
          %v4735 = vunpack.c.l.s4 1934713408
          %v4736 = vunpack.c.0.s8 %v4735
          %v4737 = vlaneseq
          %v4738 = vshrl.u32 %v4737, 7
          %v4739 = vsub.s32 %v4736, %v4738
          %v4740 = vrot.slane %v4732, %v4739
          %v4742 = vunpack.c.l.s4 1934713408
          %v4743 = vunpack.c.0.s8 %v4742
          %v4744 = vlaneseq
          %v4745 = vshrl.u32 %v4744, 7
          %v4746 = vsub.s32 %v4743, %v4745
          %v4747 = vrot.slane %v4733, %v4746
          %v4748 = vcombine.low %v4724, %v4740
          %v4749 = vcombine.high %v4724, %v4740
          %v4750 = vcombine.low %v4731, %v4747
          %v4751 = vcombine.high %v4731, %v4747
          %v4752 = vcombine.low %v3704, %v3711
          %v4754 = vunpack.c.l.s4 1983009808
          %v4755 = vunpack.c.0.s8 %v4754
          %v4756 = vlaneseq
          %v4757 = vshrl.u32 %v4756, 7
          %v4758 = vsub.s32 %v4755, %v4757
          %v4759 = vrot.slane %v4752, %v4758
          %v4760 = vcombine.low %v3728, %v3729
          %v4762 = vunpack.c.l.s4 1983009808
          %v4763 = vunpack.c.0.s8 %v4762
          %v4764 = vlaneseq
          %v4765 = vshrl.u32 %v4764, 7
          %v4766 = vsub.s32 %v4763, %v4765
          %v4767 = vrot.slane %v4760, %v4766
          %v4768 = vcombine.low %v3720, %v3727
          %v4770 = vunpack.c.l.s4 1983009808
          %v4771 = vunpack.c.0.s8 %v4770
          %v4772 = vlaneseq
          %v4773 = vshrl.u32 %v4772, 7
          %v4774 = vsub.s32 %v4771, %v4773
          %v4775 = vrot.slane %v4768, %v4774
          %v4776 = vcombine.low %v3730, %v3731
          %v4778 = vunpack.c.l.s4 1983009808
          %v4779 = vunpack.c.0.s8 %v4778
          %v4780 = vlaneseq
          %v4781 = vshrl.u32 %v4780, 7
          %v4782 = vsub.s32 %v4779, %v4781
          %v4783 = vrot.slane %v4776, %v4782
          %v4784 = vcombine.low %v4759, %v4767
          %v4785 = vcombine.high %v4759, %v4767
          %v4787 = vunpack.c.l.s4 1934713408
          %v4788 = vunpack.c.0.s8 %v4787
          %v4789 = vlaneseq
          %v4790 = vshrl.u32 %v4789, 7
          %v4791 = vsub.s32 %v4788, %v4790
          %v4792 = vrot.slane %v4784, %v4791
          %v4794 = vunpack.c.l.s4 1934713408
          %v4795 = vunpack.c.0.s8 %v4794
          %v4796 = vlaneseq
          %v4797 = vshrl.u32 %v4796, 7
          %v4798 = vsub.s32 %v4795, %v4797
          %v4799 = vrot.slane %v4785, %v4798
          %v4800 = vcombine.low %v4775, %v4783
          %v4801 = vcombine.high %v4775, %v4783
          %v4803 = vunpack.c.l.s4 1934713408
          %v4804 = vunpack.c.0.s8 %v4803
          %v4805 = vlaneseq
          %v4806 = vshrl.u32 %v4805, 7
          %v4807 = vsub.s32 %v4804, %v4806
          %v4808 = vrot.slane %v4800, %v4807
          %v4810 = vunpack.c.l.s4 1934713408
          %v4811 = vunpack.c.0.s8 %v4810
          %v4812 = vlaneseq
          %v4813 = vshrl.u32 %v4812, 7
          %v4814 = vsub.s32 %v4811, %v4813
          %v4815 = vrot.slane %v4801, %v4814
          %v4816 = vcombine.low %v4792, %v4808
          %v4817 = vcombine.high %v4792, %v4808
          %v4818 = vcombine.low %v4799, %v4815
          %v4819 = vcombine.high %v4799, %v4815
          %v4820 = vcombine.low %v3772, %v3779
          %v4822 = vunpack.c.l.s4 1983009808
          %v4823 = vunpack.c.0.s8 %v4822
          %v4824 = vlaneseq
          %v4825 = vshrl.u32 %v4824, 7
          %v4826 = vsub.s32 %v4823, %v4825
          %v4827 = vrot.slane %v4820, %v4826
          %v4828 = vcombine.low %v3796, %v3797
          %v4830 = vunpack.c.l.s4 1983009808
          %v4831 = vunpack.c.0.s8 %v4830
          %v4832 = vlaneseq
          %v4833 = vshrl.u32 %v4832, 7
          %v4834 = vsub.s32 %v4831, %v4833
          %v4835 = vrot.slane %v4828, %v4834
          %v4836 = vcombine.low %v3788, %v3795
          %v4838 = vunpack.c.l.s4 1983009808
          %v4839 = vunpack.c.0.s8 %v4838
          %v4840 = vlaneseq
          %v4841 = vshrl.u32 %v4840, 7
          %v4842 = vsub.s32 %v4839, %v4841
          %v4843 = vrot.slane %v4836, %v4842
          %v4844 = vcombine.low %v3798, %v3799
          %v4846 = vunpack.c.l.s4 1983009808
          %v4847 = vunpack.c.0.s8 %v4846
          %v4848 = vlaneseq
          %v4849 = vshrl.u32 %v4848, 7
          %v4850 = vsub.s32 %v4847, %v4849
          %v4851 = vrot.slane %v4844, %v4850
          %v4852 = vcombine.low %v4827, %v4835
          %v4853 = vcombine.high %v4827, %v4835
          %v4855 = vunpack.c.l.s4 1934713408
          %v4856 = vunpack.c.0.s8 %v4855
          %v4857 = vlaneseq
          %v4858 = vshrl.u32 %v4857, 7
          %v4859 = vsub.s32 %v4856, %v4858
          %v4860 = vrot.slane %v4852, %v4859
          %v4862 = vunpack.c.l.s4 1934713408
          %v4863 = vunpack.c.0.s8 %v4862
          %v4864 = vlaneseq
          %v4865 = vshrl.u32 %v4864, 7
          %v4866 = vsub.s32 %v4863, %v4865
          %v4867 = vrot.slane %v4853, %v4866
          %v4868 = vcombine.low %v4843, %v4851
          %v4869 = vcombine.high %v4843, %v4851
          %v4871 = vunpack.c.l.s4 1934713408
          %v4872 = vunpack.c.0.s8 %v4871
          %v4873 = vlaneseq
          %v4874 = vshrl.u32 %v4873, 7
          %v4875 = vsub.s32 %v4872, %v4874
          %v4876 = vrot.slane %v4868, %v4875
          %v4878 = vunpack.c.l.s4 1934713408
          %v4879 = vunpack.c.0.s8 %v4878
          %v4880 = vlaneseq
          %v4881 = vshrl.u32 %v4880, 7
          %v4882 = vsub.s32 %v4879, %v4881
          %v4883 = vrot.slane %v4869, %v4882
          %v4884 = vcombine.low %v4860, %v4876
          %v4885 = vcombine.high %v4860, %v4876
          %v4886 = vcombine.low %v4867, %v4883
          %v4887 = vcombine.high %v4867, %v4883
          %v4888 = vcombine.low %v3840, %v3847
          %v4890 = vunpack.c.l.s4 1983009808
          %v4891 = vunpack.c.0.s8 %v4890
          %v4892 = vlaneseq
          %v4893 = vshrl.u32 %v4892, 7
          %v4894 = vsub.s32 %v4891, %v4893
          %v4895 = vrot.slane %v4888, %v4894
          %v4896 = vcombine.low %v3864, %v3865
          %v4898 = vunpack.c.l.s4 1983009808
          %v4899 = vunpack.c.0.s8 %v4898
          %v4900 = vlaneseq
          %v4901 = vshrl.u32 %v4900, 7
          %v4902 = vsub.s32 %v4899, %v4901
          %v4903 = vrot.slane %v4896, %v4902
          %v4904 = vcombine.low %v3856, %v3863
          %v4906 = vunpack.c.l.s4 1983009808
          %v4907 = vunpack.c.0.s8 %v4906
          %v4908 = vlaneseq
          %v4909 = vshrl.u32 %v4908, 7
          %v4910 = vsub.s32 %v4907, %v4909
          %v4911 = vrot.slane %v4904, %v4910
          %v4912 = vcombine.low %v3866, %v3867
          %v4914 = vunpack.c.l.s4 1983009808
          %v4915 = vunpack.c.0.s8 %v4914
          %v4916 = vlaneseq
          %v4917 = vshrl.u32 %v4916, 7
          %v4918 = vsub.s32 %v4915, %v4917
          %v4919 = vrot.slane %v4912, %v4918
          %v4920 = vcombine.low %v4895, %v4903
          %v4921 = vcombine.high %v4895, %v4903
          %v4923 = vunpack.c.l.s4 1934713408
          %v4924 = vunpack.c.0.s8 %v4923
          %v4925 = vlaneseq
          %v4926 = vshrl.u32 %v4925, 7
          %v4927 = vsub.s32 %v4924, %v4926
          %v4928 = vrot.slane %v4920, %v4927
          %v4930 = vunpack.c.l.s4 1934713408
          %v4931 = vunpack.c.0.s8 %v4930
          %v4932 = vlaneseq
          %v4933 = vshrl.u32 %v4932, 7
          %v4934 = vsub.s32 %v4931, %v4933
          %v4935 = vrot.slane %v4921, %v4934
          %v4936 = vcombine.low %v4911, %v4919
          %v4937 = vcombine.high %v4911, %v4919
          %v4939 = vunpack.c.l.s4 1934713408
          %v4940 = vunpack.c.0.s8 %v4939
          %v4941 = vlaneseq
          %v4942 = vshrl.u32 %v4941, 7
          %v4943 = vsub.s32 %v4940, %v4942
          %v4944 = vrot.slane %v4936, %v4943
          %v4946 = vunpack.c.l.s4 1934713408
          %v4947 = vunpack.c.0.s8 %v4946
          %v4948 = vlaneseq
          %v4949 = vshrl.u32 %v4948, 7
          %v4950 = vsub.s32 %v4947, %v4949
          %v4951 = vrot.slane %v4937, %v4950
          %v4952 = vcombine.low %v4928, %v4944
          %v4953 = vcombine.high %v4928, %v4944
          %v4954 = vcombine.low %v4935, %v4951
          %v4955 = vcombine.high %v4935, %v4951
          %v4956 = vcombine.low %v3908, %v3915
          %v4958 = vunpack.c.l.s4 1983009808
          %v4959 = vunpack.c.0.s8 %v4958
          %v4960 = vlaneseq
          %v4961 = vshrl.u32 %v4960, 7
          %v4962 = vsub.s32 %v4959, %v4961
          %v4963 = vrot.slane %v4956, %v4962
          %v4964 = vcombine.low %v3932, %v3933
          %v4966 = vunpack.c.l.s4 1983009808
          %v4967 = vunpack.c.0.s8 %v4966
          %v4968 = vlaneseq
          %v4969 = vshrl.u32 %v4968, 7
          %v4970 = vsub.s32 %v4967, %v4969
          %v4971 = vrot.slane %v4964, %v4970
          %v4972 = vcombine.low %v3924, %v3931
          %v4974 = vunpack.c.l.s4 1983009808
          %v4975 = vunpack.c.0.s8 %v4974
          %v4976 = vlaneseq
          %v4977 = vshrl.u32 %v4976, 7
          %v4978 = vsub.s32 %v4975, %v4977
          %v4979 = vrot.slane %v4972, %v4978
          %v4980 = vcombine.low %v3934, %v3935
          %v4982 = vunpack.c.l.s4 1983009808
          %v4983 = vunpack.c.0.s8 %v4982
          %v4984 = vlaneseq
          %v4985 = vshrl.u32 %v4984, 7
          %v4986 = vsub.s32 %v4983, %v4985
          %v4987 = vrot.slane %v4980, %v4986
          %v4988 = vcombine.low %v4963, %v4971
          %v4989 = vcombine.high %v4963, %v4971
          %v4991 = vunpack.c.l.s4 1934713408
          %v4992 = vunpack.c.0.s8 %v4991
          %v4993 = vlaneseq
          %v4994 = vshrl.u32 %v4993, 7
          %v4995 = vsub.s32 %v4992, %v4994
          %v4996 = vrot.slane %v4988, %v4995
          %v4998 = vunpack.c.l.s4 1934713408
          %v4999 = vunpack.c.0.s8 %v4998
          %v5000 = vlaneseq
          %v5001 = vshrl.u32 %v5000, 7
          %v5002 = vsub.s32 %v4999, %v5001
          %v5003 = vrot.slane %v4989, %v5002
          %v5004 = vcombine.low %v4979, %v4987
          %v5005 = vcombine.high %v4979, %v4987
          %v5007 = vunpack.c.l.s4 1934713408
          %v5008 = vunpack.c.0.s8 %v5007
          %v5009 = vlaneseq
          %v5010 = vshrl.u32 %v5009, 7
          %v5011 = vsub.s32 %v5008, %v5010
          %v5012 = vrot.slane %v5004, %v5011
          %v5014 = vunpack.c.l.s4 1934713408
          %v5015 = vunpack.c.0.s8 %v5014
          %v5016 = vlaneseq
          %v5017 = vshrl.u32 %v5016, 7
          %v5018 = vsub.s32 %v5015, %v5017
          %v5019 = vrot.slane %v5005, %v5018
          %v5020 = vcombine.low %v4996, %v5012
          %v5021 = vcombine.high %v4996, %v5012
          %v5022 = vcombine.low %v5003, %v5019
          %v5023 = vcombine.high %v5003, %v5019
          %v5024 = vcombine.low %v3976, %v3983
          %v5026 = vunpack.c.l.s4 1983009808
          %v5027 = vunpack.c.0.s8 %v5026
          %v5028 = vlaneseq
          %v5029 = vshrl.u32 %v5028, 7
          %v5030 = vsub.s32 %v5027, %v5029
          %v5031 = vrot.slane %v5024, %v5030
          %v5032 = vcombine.low %v4000, %v4001
          %v5034 = vunpack.c.l.s4 1983009808
          %v5035 = vunpack.c.0.s8 %v5034
          %v5036 = vlaneseq
          %v5037 = vshrl.u32 %v5036, 7
          %v5038 = vsub.s32 %v5035, %v5037
          %v5039 = vrot.slane %v5032, %v5038
          %v5040 = vcombine.low %v3992, %v3999
          %v5042 = vunpack.c.l.s4 1983009808
          %v5043 = vunpack.c.0.s8 %v5042
          %v5044 = vlaneseq
          %v5045 = vshrl.u32 %v5044, 7
          %v5046 = vsub.s32 %v5043, %v5045
          %v5047 = vrot.slane %v5040, %v5046
          %v5048 = vcombine.low %v4002, %v4003
          %v5050 = vunpack.c.l.s4 1983009808
          %v5051 = vunpack.c.0.s8 %v5050
          %v5052 = vlaneseq
          %v5053 = vshrl.u32 %v5052, 7
          %v5054 = vsub.s32 %v5051, %v5053
          %v5055 = vrot.slane %v5048, %v5054
          %v5056 = vcombine.low %v5031, %v5039
          %v5057 = vcombine.high %v5031, %v5039
          %v5059 = vunpack.c.l.s4 1934713408
          %v5060 = vunpack.c.0.s8 %v5059
          %v5061 = vlaneseq
          %v5062 = vshrl.u32 %v5061, 7
          %v5063 = vsub.s32 %v5060, %v5062
          %v5064 = vrot.slane %v5056, %v5063
          %v5066 = vunpack.c.l.s4 1934713408
          %v5067 = vunpack.c.0.s8 %v5066
          %v5068 = vlaneseq
          %v5069 = vshrl.u32 %v5068, 7
          %v5070 = vsub.s32 %v5067, %v5069
          %v5071 = vrot.slane %v5057, %v5070
          %v5072 = vcombine.low %v5047, %v5055
          %v5073 = vcombine.high %v5047, %v5055
          %v5075 = vunpack.c.l.s4 1934713408
          %v5076 = vunpack.c.0.s8 %v5075
          %v5077 = vlaneseq
          %v5078 = vshrl.u32 %v5077, 7
          %v5079 = vsub.s32 %v5076, %v5078
          %v5080 = vrot.slane %v5072, %v5079
          %v5082 = vunpack.c.l.s4 1934713408
          %v5083 = vunpack.c.0.s8 %v5082
          %v5084 = vlaneseq
          %v5085 = vshrl.u32 %v5084, 7
          %v5086 = vsub.s32 %v5083, %v5085
          %v5087 = vrot.slane %v5073, %v5086
          %v5088 = vcombine.low %v5064, %v5080
          %v5089 = vcombine.high %v5064, %v5080
          %v5090 = vcombine.low %v5071, %v5087
          %v5091 = vcombine.high %v5071, %v5087
          %v5092 = vcombine.low %v4044, %v4051
          %v5094 = vunpack.c.l.s4 1983009808
          %v5095 = vunpack.c.0.s8 %v5094
          %v5096 = vlaneseq
          %v5097 = vshrl.u32 %v5096, 7
          %v5098 = vsub.s32 %v5095, %v5097
          %v5099 = vrot.slane %v5092, %v5098
          %v5100 = vcombine.low %v4068, %v4069
          %v5102 = vunpack.c.l.s4 1983009808
          %v5103 = vunpack.c.0.s8 %v5102
          %v5104 = vlaneseq
          %v5105 = vshrl.u32 %v5104, 7
          %v5106 = vsub.s32 %v5103, %v5105
          %v5107 = vrot.slane %v5100, %v5106
          %v5108 = vcombine.low %v4060, %v4067
          %v5110 = vunpack.c.l.s4 1983009808
          %v5111 = vunpack.c.0.s8 %v5110
          %v5112 = vlaneseq
          %v5113 = vshrl.u32 %v5112, 7
          %v5114 = vsub.s32 %v5111, %v5113
          %v5115 = vrot.slane %v5108, %v5114
          %v5116 = vcombine.low %v4070, %v4071
          %v5118 = vunpack.c.l.s4 1983009808
          %v5119 = vunpack.c.0.s8 %v5118
          %v5120 = vlaneseq
          %v5121 = vshrl.u32 %v5120, 7
          %v5122 = vsub.s32 %v5119, %v5121
          %v5123 = vrot.slane %v5116, %v5122
          %v5124 = vcombine.low %v5099, %v5107
          %v5125 = vcombine.high %v5099, %v5107
          %v5127 = vunpack.c.l.s4 1934713408
          %v5128 = vunpack.c.0.s8 %v5127
          %v5129 = vlaneseq
          %v5130 = vshrl.u32 %v5129, 7
          %v5131 = vsub.s32 %v5128, %v5130
          %v5132 = vrot.slane %v5124, %v5131
          %v5134 = vunpack.c.l.s4 1934713408
          %v5135 = vunpack.c.0.s8 %v5134
          %v5136 = vlaneseq
          %v5137 = vshrl.u32 %v5136, 7
          %v5138 = vsub.s32 %v5135, %v5137
          %v5139 = vrot.slane %v5125, %v5138
          %v5140 = vcombine.low %v5115, %v5123
          %v5141 = vcombine.high %v5115, %v5123
          %v5143 = vunpack.c.l.s4 1934713408
          %v5144 = vunpack.c.0.s8 %v5143
          %v5145 = vlaneseq
          %v5146 = vshrl.u32 %v5145, 7
          %v5147 = vsub.s32 %v5144, %v5146
          %v5148 = vrot.slane %v5140, %v5147
          %v5150 = vunpack.c.l.s4 1934713408
          %v5151 = vunpack.c.0.s8 %v5150
          %v5152 = vlaneseq
          %v5153 = vshrl.u32 %v5152, 7
          %v5154 = vsub.s32 %v5151, %v5153
          %v5155 = vrot.slane %v5141, %v5154
          %v5156 = vcombine.low %v5132, %v5148
          %v5157 = vcombine.high %v5132, %v5148
          %v5158 = vcombine.low %v5139, %v5155
          %v5159 = vcombine.high %v5139, %v5155
          %v5160 = vcombine.low %v4112, %v4119
          %v5162 = vunpack.c.l.s4 1983009808
          %v5163 = vunpack.c.0.s8 %v5162
          %v5164 = vlaneseq
          %v5165 = vshrl.u32 %v5164, 7
          %v5166 = vsub.s32 %v5163, %v5165
          %v5167 = vrot.slane %v5160, %v5166
          %v5168 = vcombine.low %v4136, %v4137
          %v5170 = vunpack.c.l.s4 1983009808
          %v5171 = vunpack.c.0.s8 %v5170
          %v5172 = vlaneseq
          %v5173 = vshrl.u32 %v5172, 7
          %v5174 = vsub.s32 %v5171, %v5173
          %v5175 = vrot.slane %v5168, %v5174
          %v5176 = vcombine.low %v4128, %v4135
          %v5178 = vunpack.c.l.s4 1983009808
          %v5179 = vunpack.c.0.s8 %v5178
          %v5180 = vlaneseq
          %v5181 = vshrl.u32 %v5180, 7
          %v5182 = vsub.s32 %v5179, %v5181
          %v5183 = vrot.slane %v5176, %v5182
          %v5184 = vcombine.low %v4138, %v4139
          %v5186 = vunpack.c.l.s4 1983009808
          %v5187 = vunpack.c.0.s8 %v5186
          %v5188 = vlaneseq
          %v5189 = vshrl.u32 %v5188, 7
          %v5190 = vsub.s32 %v5187, %v5189
          %v5191 = vrot.slane %v5184, %v5190
          %v5192 = vcombine.low %v5167, %v5175
          %v5193 = vcombine.high %v5167, %v5175
          %v5195 = vunpack.c.l.s4 1934713408
          %v5196 = vunpack.c.0.s8 %v5195
          %v5197 = vlaneseq
          %v5198 = vshrl.u32 %v5197, 7
          %v5199 = vsub.s32 %v5196, %v5198
          %v5200 = vrot.slane %v5192, %v5199
          %v5202 = vunpack.c.l.s4 1934713408
          %v5203 = vunpack.c.0.s8 %v5202
          %v5204 = vlaneseq
          %v5205 = vshrl.u32 %v5204, 7
          %v5206 = vsub.s32 %v5203, %v5205
          %v5207 = vrot.slane %v5193, %v5206
          %v5208 = vcombine.low %v5183, %v5191
          %v5209 = vcombine.high %v5183, %v5191
          %v5211 = vunpack.c.l.s4 1934713408
          %v5212 = vunpack.c.0.s8 %v5211
          %v5213 = vlaneseq
          %v5214 = vshrl.u32 %v5213, 7
          %v5215 = vsub.s32 %v5212, %v5214
          %v5216 = vrot.slane %v5208, %v5215
          %v5218 = vunpack.c.l.s4 1934713408
          %v5219 = vunpack.c.0.s8 %v5218
          %v5220 = vlaneseq
          %v5221 = vshrl.u32 %v5220, 7
          %v5222 = vsub.s32 %v5219, %v5221
          %v5223 = vrot.slane %v5209, %v5222
          %v5224 = vcombine.low %v5200, %v5216
          %v5225 = vcombine.high %v5200, %v5216
          %v5226 = vcombine.low %v5207, %v5223
          %v5227 = vcombine.high %v5207, %v5223
          %v5228 = vcombine.low %v4180, %v4187
          %v5230 = vunpack.c.l.s4 1983009808
          %v5231 = vunpack.c.0.s8 %v5230
          %v5232 = vlaneseq
          %v5233 = vshrl.u32 %v5232, 7
          %v5234 = vsub.s32 %v5231, %v5233
          %v5235 = vrot.slane %v5228, %v5234
          %v5236 = vcombine.low %v4204, %v4205
          %v5238 = vunpack.c.l.s4 1983009808
          %v5239 = vunpack.c.0.s8 %v5238
          %v5240 = vlaneseq
          %v5241 = vshrl.u32 %v5240, 7
          %v5242 = vsub.s32 %v5239, %v5241
          %v5243 = vrot.slane %v5236, %v5242
          %v5244 = vcombine.low %v4196, %v4203
          %v5246 = vunpack.c.l.s4 1983009808
          %v5247 = vunpack.c.0.s8 %v5246
          %v5248 = vlaneseq
          %v5249 = vshrl.u32 %v5248, 7
          %v5250 = vsub.s32 %v5247, %v5249
          %v5251 = vrot.slane %v5244, %v5250
          %v5252 = vcombine.low %v4206, %v4207
          %v5254 = vunpack.c.l.s4 1983009808
          %v5255 = vunpack.c.0.s8 %v5254
          %v5256 = vlaneseq
          %v5257 = vshrl.u32 %v5256, 7
          %v5258 = vsub.s32 %v5255, %v5257
          %v5259 = vrot.slane %v5252, %v5258
          %v5260 = vcombine.low %v5235, %v5243
          %v5261 = vcombine.high %v5235, %v5243
          %v5263 = vunpack.c.l.s4 1934713408
          %v5264 = vunpack.c.0.s8 %v5263
          %v5265 = vlaneseq
          %v5266 = vshrl.u32 %v5265, 7
          %v5267 = vsub.s32 %v5264, %v5266
          %v5268 = vrot.slane %v5260, %v5267
          %v5270 = vunpack.c.l.s4 1934713408
          %v5271 = vunpack.c.0.s8 %v5270
          %v5272 = vlaneseq
          %v5273 = vshrl.u32 %v5272, 7
          %v5274 = vsub.s32 %v5271, %v5273
          %v5275 = vrot.slane %v5261, %v5274
          %v5276 = vcombine.low %v5251, %v5259
          %v5277 = vcombine.high %v5251, %v5259
          %v5279 = vunpack.c.l.s4 1934713408
          %v5280 = vunpack.c.0.s8 %v5279
          %v5281 = vlaneseq
          %v5282 = vshrl.u32 %v5281, 7
          %v5283 = vsub.s32 %v5280, %v5282
          %v5284 = vrot.slane %v5276, %v5283
          %v5286 = vunpack.c.l.s4 1934713408
          %v5287 = vunpack.c.0.s8 %v5286
          %v5288 = vlaneseq
          %v5289 = vshrl.u32 %v5288, 7
          %v5290 = vsub.s32 %v5287, %v5289
          %v5291 = vrot.slane %v5277, %v5290
          %v5292 = vcombine.low %v5268, %v5284
          %v5293 = vcombine.high %v5268, %v5284
          %v5294 = vcombine.low %v5275, %v5291
          %v5295 = vcombine.high %v5275, %v5291
          %v5296 = vcombine.low %v4248, %v4255
          %v5298 = vunpack.c.l.s4 1983009808
          %v5299 = vunpack.c.0.s8 %v5298
          %v5300 = vlaneseq
          %v5301 = vshrl.u32 %v5300, 7
          %v5302 = vsub.s32 %v5299, %v5301
          %v5303 = vrot.slane %v5296, %v5302
          %v5304 = vcombine.low %v4272, %v4273
          %v5306 = vunpack.c.l.s4 1983009808
          %v5307 = vunpack.c.0.s8 %v5306
          %v5308 = vlaneseq
          %v5309 = vshrl.u32 %v5308, 7
          %v5310 = vsub.s32 %v5307, %v5309
          %v5311 = vrot.slane %v5304, %v5310
          %v5312 = vcombine.low %v4264, %v4271
          %v5314 = vunpack.c.l.s4 1983009808
          %v5315 = vunpack.c.0.s8 %v5314
          %v5316 = vlaneseq
          %v5317 = vshrl.u32 %v5316, 7
          %v5318 = vsub.s32 %v5315, %v5317
          %v5319 = vrot.slane %v5312, %v5318
          %v5320 = vcombine.low %v4274, %v4275
          %v5322 = vunpack.c.l.s4 1983009808
          %v5323 = vunpack.c.0.s8 %v5322
          %v5324 = vlaneseq
          %v5325 = vshrl.u32 %v5324, 7
          %v5326 = vsub.s32 %v5323, %v5325
          %v5327 = vrot.slane %v5320, %v5326
          %v5328 = vcombine.low %v5303, %v5311
          %v5329 = vcombine.high %v5303, %v5311
          %v5331 = vunpack.c.l.s4 1934713408
          %v5332 = vunpack.c.0.s8 %v5331
          %v5333 = vlaneseq
          %v5334 = vshrl.u32 %v5333, 7
          %v5335 = vsub.s32 %v5332, %v5334
          %v5336 = vrot.slane %v5328, %v5335
          %v5338 = vunpack.c.l.s4 1934713408
          %v5339 = vunpack.c.0.s8 %v5338
          %v5340 = vlaneseq
          %v5341 = vshrl.u32 %v5340, 7
          %v5342 = vsub.s32 %v5339, %v5341
          %v5343 = vrot.slane %v5329, %v5342
          %v5344 = vcombine.low %v5319, %v5327
          %v5345 = vcombine.high %v5319, %v5327
          %v5347 = vunpack.c.l.s4 1934713408
          %v5348 = vunpack.c.0.s8 %v5347
          %v5349 = vlaneseq
          %v5350 = vshrl.u32 %v5349, 7
          %v5351 = vsub.s32 %v5348, %v5350
          %v5352 = vrot.slane %v5344, %v5351
          %v5354 = vunpack.c.l.s4 1934713408
          %v5355 = vunpack.c.0.s8 %v5354
          %v5356 = vlaneseq
          %v5357 = vshrl.u32 %v5356, 7
          %v5358 = vsub.s32 %v5355, %v5357
          %v5359 = vrot.slane %v5345, %v5358
          %v5360 = vcombine.low %v5336, %v5352
          %v5361 = vcombine.high %v5336, %v5352
          %v5362 = vcombine.low %v5343, %v5359
          %v5363 = vcombine.high %v5343, %v5359
          %v5364 = vcombine.low %v4316, %v4323
          %v5366 = vunpack.c.l.s4 1983009808
          %v5367 = vunpack.c.0.s8 %v5366
          %v5368 = vlaneseq
          %v5369 = vshrl.u32 %v5368, 7
          %v5370 = vsub.s32 %v5367, %v5369
          %v5371 = vrot.slane %v5364, %v5370
          %v5372 = vcombine.low %v4340, %v4341
          %v5374 = vunpack.c.l.s4 1983009808
          %v5375 = vunpack.c.0.s8 %v5374
          %v5376 = vlaneseq
          %v5377 = vshrl.u32 %v5376, 7
          %v5378 = vsub.s32 %v5375, %v5377
          %v5379 = vrot.slane %v5372, %v5378
          %v5380 = vcombine.low %v4332, %v4339
          %v5382 = vunpack.c.l.s4 1983009808
          %v5383 = vunpack.c.0.s8 %v5382
          %v5384 = vlaneseq
          %v5385 = vshrl.u32 %v5384, 7
          %v5386 = vsub.s32 %v5383, %v5385
          %v5387 = vrot.slane %v5380, %v5386
          %v5388 = vcombine.low %v4342, %v4343
          %v5390 = vunpack.c.l.s4 1983009808
          %v5391 = vunpack.c.0.s8 %v5390
          %v5392 = vlaneseq
          %v5393 = vshrl.u32 %v5392, 7
          %v5394 = vsub.s32 %v5391, %v5393
          %v5395 = vrot.slane %v5388, %v5394
          %v5396 = vcombine.low %v5371, %v5379
          %v5397 = vcombine.high %v5371, %v5379
          %v5399 = vunpack.c.l.s4 1934713408
          %v5400 = vunpack.c.0.s8 %v5399
          %v5401 = vlaneseq
          %v5402 = vshrl.u32 %v5401, 7
          %v5403 = vsub.s32 %v5400, %v5402
          %v5404 = vrot.slane %v5396, %v5403
          %v5406 = vunpack.c.l.s4 1934713408
          %v5407 = vunpack.c.0.s8 %v5406
          %v5408 = vlaneseq
          %v5409 = vshrl.u32 %v5408, 7
          %v5410 = vsub.s32 %v5407, %v5409
          %v5411 = vrot.slane %v5397, %v5410
          %v5412 = vcombine.low %v5387, %v5395
          %v5413 = vcombine.high %v5387, %v5395
          %v5415 = vunpack.c.l.s4 1934713408
          %v5416 = vunpack.c.0.s8 %v5415
          %v5417 = vlaneseq
          %v5418 = vshrl.u32 %v5417, 7
          %v5419 = vsub.s32 %v5416, %v5418
          %v5420 = vrot.slane %v5412, %v5419
          %v5422 = vunpack.c.l.s4 1934713408
          %v5423 = vunpack.c.0.s8 %v5422
          %v5424 = vlaneseq
          %v5425 = vshrl.u32 %v5424, 7
          %v5426 = vsub.s32 %v5423, %v5425
          %v5427 = vrot.slane %v5413, %v5426
          %v5428 = vcombine.low %v5404, %v5420
          %v5429 = vcombine.high %v5404, %v5420
          %v5430 = vcombine.low %v5411, %v5427
          %v5431 = vcombine.high %v5411, %v5427
          %5432 = vst.msk [vmem:[#allocation3] sm:$0xff] %vm3031, %v4408
          %5433 = vst.msk [vmem:[#allocation3 + $0x8] sm:$0xff] %vm3031, %v4476
          %5434 = vst.msk [vmem:[#allocation3 + $0x10] sm:$0xff] %vm3031, %v4544
          %5435 = vst.msk [vmem:[#allocation3 + $0x18] sm:$0xff] %vm3031, %v4612
          %5436 = vst.msk [vmem:[#allocation3 + $0x20] sm:$0xff] %vm3031, %v4680
          %5437 = vst.msk [vmem:[#allocation3 + $0x28] sm:$0xff] %vm3031, %v4748
          %5438 = vst.msk [vmem:[#allocation3 + $0x30] sm:$0xff] %vm3031, %v4816
          %5439 = vst.msk [vmem:[#allocation3 + $0x38] sm:$0xff] %vm3031, %v4884
          %5440 = vst.msk [vmem:[#allocation3 + $0x40] sm:$0xff] %vm3031, %v4952
          %5441 = vst.msk [vmem:[#allocation3 + $0x48] sm:$0xff] %vm3031, %v5020
          %5442 = vst.msk [vmem:[#allocation3 + $0x50] sm:$0xff] %vm3031, %v5088
          %5443 = vst.msk [vmem:[#allocation3 + $0x58] sm:$0xff] %vm3031, %v5156
          %5444 = vst.msk [vmem:[#allocation3 + $0x60] sm:$0xff] %vm3031, %v5224
          %5445 = vst.msk [vmem:[#allocation3 + $0x68] sm:$0xff] %vm3031, %v5292
          %5446 = vst.msk [vmem:[#allocation3 + $0x70] sm:$0xff] %vm3031, %v5360
          %5447 = vst.msk [vmem:[#allocation3 + $0x78] sm:$0xff] %vm3031, %v5428
          %5448 = vst.msk [vmem:[#allocation3 + $0x80] sm:$0xff] %vm3031, %v4409
          %5449 = vst.msk [vmem:[#allocation3 + $0x88] sm:$0xff] %vm3031, %v4477
          %5450 = vst.msk [vmem:[#allocation3 + $0x90] sm:$0xff] %vm3031, %v4545
          %5451 = vst.msk [vmem:[#allocation3 + $0x98] sm:$0xff] %vm3031, %v4613
          %5452 = vst.msk [vmem:[#allocation3 + $0xa0] sm:$0xff] %vm3031, %v4681
          %5453 = vst.msk [vmem:[#allocation3 + $0xa8] sm:$0xff] %vm3031, %v4749
          %5454 = vst.msk [vmem:[#allocation3 + $0xb0] sm:$0xff] %vm3031, %v4817
          %5455 = vst.msk [vmem:[#allocation3 + $0xb8] sm:$0xff] %vm3031, %v4885
          %5456 = vst.msk [vmem:[#allocation3 + $0xc0] sm:$0xff] %vm3031, %v4953
          %5457 = vst.msk [vmem:[#allocation3 + $0xc8] sm:$0xff] %vm3031, %v5021
          %5458 = vst.msk [vmem:[#allocation3 + $0xd0] sm:$0xff] %vm3031, %v5089
          %5459 = vst.msk [vmem:[#allocation3 + $0xd8] sm:$0xff] %vm3031, %v5157
          %5460 = vst.msk [vmem:[#allocation3 + $0xe0] sm:$0xff] %vm3031, %v5225
          %5461 = vst.msk [vmem:[#allocation3 + $0xe8] sm:$0xff] %vm3031, %v5293
          %5462 = vst.msk [vmem:[#allocation3 + $0xf0] sm:$0xff] %vm3031, %v5361
          %5463 = vst.msk [vmem:[#allocation3 + $0xf8] sm:$0xff] %vm3031, %v5429
          %5464 = vst.msk [vmem:[#allocation3 + $0x100] sm:$0xff] %vm3031, %v4410
          %5465 = vst.msk [vmem:[#allocation3 + $0x108] sm:$0xff] %vm3031, %v4478
          %5466 = vst.msk [vmem:[#allocation3 + $0x110] sm:$0xff] %vm3031, %v4546
          %5467 = vst.msk [vmem:[#allocation3 + $0x118] sm:$0xff] %vm3031, %v4614
          %5468 = vst.msk [vmem:[#allocation3 + $0x120] sm:$0xff] %vm3031, %v4682
          %5469 = vst.msk [vmem:[#allocation3 + $0x128] sm:$0xff] %vm3031, %v4750
          %5470 = vst.msk [vmem:[#allocation3 + $0x130] sm:$0xff] %vm3031, %v4818
          %5471 = vst.msk [vmem:[#allocation3 + $0x138] sm:$0xff] %vm3031, %v4886
          %5472 = vst.msk [vmem:[#allocation3 + $0x140] sm:$0xff] %vm3031, %v4954
          %5473 = vst.msk [vmem:[#allocation3 + $0x148] sm:$0xff] %vm3031, %v5022
          %5474 = vst.msk [vmem:[#allocation3 + $0x150] sm:$0xff] %vm3031, %v5090
          %5475 = vst.msk [vmem:[#allocation3 + $0x158] sm:$0xff] %vm3031, %v5158
          %5476 = vst.msk [vmem:[#allocation3 + $0x160] sm:$0xff] %vm3031, %v5226
          %5477 = vst.msk [vmem:[#allocation3 + $0x168] sm:$0xff] %vm3031, %v5294
          %5478 = vst.msk [vmem:[#allocation3 + $0x170] sm:$0xff] %vm3031, %v5362
          %5479 = vst.msk [vmem:[#allocation3 + $0x178] sm:$0xff] %vm3031, %v5430
          %5480 = vst.msk [vmem:[#allocation3 + $0x180] sm:$0xff] %vm3031, %v4411
          %5481 = vst.msk [vmem:[#allocation3 + $0x188] sm:$0xff] %vm3031, %v4479
          %5482 = vst.msk [vmem:[#allocation3 + $0x190] sm:$0xff] %vm3031, %v4547
          %5483 = vst.msk [vmem:[#allocation3 + $0x198] sm:$0xff] %vm3031, %v4615
          %5484 = vst.msk [vmem:[#allocation3 + $0x1a0] sm:$0xff] %vm3031, %v4683
          %5485 = vst.msk [vmem:[#allocation3 + $0x1a8] sm:$0xff] %vm3031, %v4751
          %5486 = vst.msk [vmem:[#allocation3 + $0x1b0] sm:$0xff] %vm3031, %v4819
          %5487 = vst.msk [vmem:[#allocation3 + $0x1b8] sm:$0xff] %vm3031, %v4887
          %5488 = vst.msk [vmem:[#allocation3 + $0x1c0] sm:$0xff] %vm3031, %v4955
          %5489 = vst.msk [vmem:[#allocation3 + $0x1c8] sm:$0xff] %vm3031, %v5023
          %5490 = vst.msk [vmem:[#allocation3 + $0x1d0] sm:$0xff] %vm3031, %v5091
          %5491 = vst.msk [vmem:[#allocation3 + $0x1d8] sm:$0xff] %vm3031, %v5159
          %5492 = vst.msk [vmem:[#allocation3 + $0x1e0] sm:$0xff] %vm3031, %v5227
          %5493 = vst.msk [vmem:[#allocation3 + $0x1e8] sm:$0xff] %vm3031, %v5295
          %5494 = vst.msk [vmem:[#allocation3 + $0x1f0] sm:$0xff] %vm3031, %v5363
          %5495 = vst.msk [vmem:[#allocation3 + $0x1f8] sm:$0xff] %vm3031, %v5431
        $region52: #{tpu_custom_call.1} parent=47 // pred_fallthru
          _
        %v5496 = vld [vmem:[%s320] sm:$0xff]
        %v5497 = vld [vmem:[%s320 + $0x8] sm:$0xff]
        %v5498 = vld [vmem:[%s2] sm:$0xff]
        %v5499 = vld [vmem:[%s2 + $0x8] sm:$0xff]
        %v5500 = vld [vmem:[%s2 + $0x10] sm:$0xff]
        %v5501 = vld [vmem:[%s2 + $0x18] sm:$0xff]
        %vm5502 = vcmask 261120
        %v5504 = vsel %vm5502, %v5496, 0
        %v5507 = vsel %vm5502, %v5497, 0
        %5509 = vmatprep.subr.mxu0 0.0
        %5510 = vmatpush1.msra.mxu0 0.0
        %5511 = vmatprep.subr.mxu0 0.0
        %5512 = vmatpush1.msra.mxu0 0.0
        %5513 = vmatprep.subr.mxu0 0.0
        %5514 = vmatpush1.msra.mxu0 0.0
        %5515 = vmatprep.subr.mxu0 0.0
        %5516 = vmatpush1.msra.mxu0 0.0
        %5517 = vmatprep.subr.mxu0 0.0
        %5518 = vmatpush1.msra.mxu0 0.0
        %5519 = vmatprep.subr.mxu0 0.0
        %5520 = vmatpush1.msra.mxu0 0.0
        %5521 = vmatprep.subr.mxu0 0.0
        %5522 = vmatpush1.msra.mxu0 0.0
        %5523 = vmatprep.subr.mxu0 0.0
        %5524 = vmatpush1.msra.mxu0 0.0
        %5525 = vmatprep.subr.mxu0 0.0
        %5526 = vmatpush1.msra.mxu0 0.0
        %5527 = vmatprep.subr.mxu0 0.0
        %5528 = vmatpush1.msra.mxu0 0.0
        %5529 = vmatprep.subr.mxu0 0.0
        %5530 = vmatpush1.msra.mxu0 0.0
        %5531 = vmatprep.subr.mxu0 0.0
        %5532 = vmatpush1.msra.mxu0 0.0
        %5533 = vmatprep.subr.mxu0 0.0
        %5534 = vmatpush1.msra.mxu0 %v5501
        %5535 = vmatprep.subr.mxu0 0.0
        %5536 = vmatpush1.msra.mxu0 %v5500
        %5537 = vmatprep.subr.mxu0 0.0
        %5538 = vmatpush1.msra.mxu0 %v5499
        %5539 = vmatprep.subr.mxu0 0.0
        %5540 = vmatpush1.msra.mxu0 %v5498
        %5541 = vmatprep.subr.mxu0 0.0
        %5542 = vmatpush2.msra.mxu0 0.0
        %5543 = vmatprep.subr.mxu0 0.0
        %5544 = vmatpush2.msra.mxu0 0.0
        %5545 = vmatprep.subr.mxu0 0.0
        %5546 = vmatpush2.msra.mxu0 0.0
        %5547 = vmatprep.subr.mxu0 0.0
        %5548 = vmatpush2.msra.mxu0 0.0
        %5549 = vmatprep.subr.mxu0 0.0
        %5550 = vmatpush2.msra.mxu0 0.0
        %5551 = vmatprep.subr.mxu0 0.0
        %5552 = vmatpush2.msra.mxu0 0.0
        %5553 = vmatprep.subr.mxu0 0.0
        %5554 = vmatpush2.msra.mxu0 0.0
        %5555 = vmatprep.subr.mxu0 0.0
        %5556 = vmatpush2.msra.mxu0 0.0
        %5557 = vmatprep.subr.mxu0 0.0
        %5558 = vmatpush2.msra.mxu0 0.0
        %5559 = vmatprep.subr.mxu0 0.0
        %5560 = vmatpush2.msra.mxu0 0.0
        %5561 = vmatprep.subr.mxu0 0.0
        %5562 = vmatpush2.msra.mxu0 0.0
        %5563 = vmatprep.subr.mxu0 0.0
        %5564 = vmatpush2.msra.mxu0 0.0
        %5565 = vmatprep.subr.mxu0 0.0
        %5566 = vmatpush2.msra.mxu0 0.0
        %5567 = vmatprep.subr.mxu0 0.0
        %5568 = vmatpush2.msra.mxu0 0.0
        %5569 = vmatprep.subr.mxu0 0.0
        %5570 = vmatpush2.msra.mxu0 0.0
        %5571 = vmatprep.subr.mxu0 0.0
        %5572 = vmatpush2.msra.mxu0 0.0
        %5573 = vmatprep.mubr.f32.mxu0 0.0
        %5574 = vmatmul.mubr.f32.gmra.mxu0 %v5504
        %v5575 = vpop.f32.mrf.mxu0
        %v5576 = vadd.f32 0.0, %v5575
        %v5577 = vpop.f32.mrf.mxu0
        %5578 = vmatprep.mubr.f32.mxu0 0.0
        %5579 = vmatmul.mubr.f32.gmra.mxu0 %v5507
        %v5580 = vpop.f32.mrf.mxu0
        %v5581 = vadd.f32 0.0, %v5580
        %v5582 = vpop.f32.mrf.mxu0
        %5583 = vdwg.mxu0
        %5586 = vrot.lane.b32.xlu0 %v5576, 112
        %v5587 = vpop.permute.xlu0 %5586
        %5588 = vrot.lane.b32.xlu0 %v5581, 112
        %v5589 = vpop.permute.xlu0 %5588
        %5592 = vrot.lane.b32.xlu0 %v5576, 96
        %v5593 = vpop.permute.xlu0 %5592
        %5594 = vrot.lane.b32.xlu0 %v5581, 96
        %v5595 = vpop.permute.xlu0 %5594
        %5598 = vrot.lane.b32.xlu0 %v5576, 80
        %v5599 = vpop.permute.xlu0 %5598
        %5600 = vrot.lane.b32.xlu0 %v5581, 80
        %v5601 = vpop.permute.xlu0 %5600
        %v5604 = vcombine.low %v5576, %v5593
        %v5605 = vcombine.high %v5576, %v5593
        %v5607 = vunpack.c.l.s4 1983009808
        %v5608 = vunpack.c.0.s8 %v5607
        %v5609 = vlaneseq
        %v5610 = vshrl.u32 %v5609, 7
        %v5611 = vsub.s32 %v5608, %v5610
        %v5612 = vrot.slane %v5604, %v5611
        %v5614 = vunpack.c.l.s4 1983009808
        %v5615 = vunpack.c.0.s8 %v5614
        %v5616 = vlaneseq
        %v5617 = vshrl.u32 %v5616, 7
        %v5618 = vsub.s32 %v5615, %v5617
        %v5619 = vrot.slane %v5605, %v5618
        %v5620 = vcombine.low %v5587, %v5599
        %v5621 = vcombine.high %v5587, %v5599
        %v5623 = vunpack.c.l.s4 1983009808
        %v5624 = vunpack.c.0.s8 %v5623
        %v5625 = vlaneseq
        %v5626 = vshrl.u32 %v5625, 7
        %v5627 = vsub.s32 %v5624, %v5626
        %v5628 = vrot.slane %v5620, %v5627
        %v5630 = vunpack.c.l.s4 1983009808
        %v5631 = vunpack.c.0.s8 %v5630
        %v5632 = vlaneseq
        %v5633 = vshrl.u32 %v5632, 7
        %v5634 = vsub.s32 %v5631, %v5633
        %v5635 = vrot.slane %v5621, %v5634
        %v5636 = vcombine.low %v5612, %v5628
        %v5637 = vcombine.high %v5612, %v5628
        %v5639 = vunpack.c.l.s4 1934713408
        %v5640 = vunpack.c.0.s8 %v5639
        %v5641 = vlaneseq
        %v5642 = vshrl.u32 %v5641, 7
        %v5643 = vsub.s32 %v5640, %v5642
        %v5644 = vrot.slane %v5636, %v5643
        %v5646 = vunpack.c.l.s4 1934713408
        %v5647 = vunpack.c.0.s8 %v5646
        %v5648 = vlaneseq
        %v5649 = vshrl.u32 %v5648, 7
        %v5650 = vsub.s32 %v5647, %v5649
        %v5651 = vrot.slane %v5637, %v5650
        %v5652 = vcombine.low %v5619, %v5635
        %v5653 = vcombine.high %v5619, %v5635
        %v5655 = vunpack.c.l.s4 1934713408
        %v5656 = vunpack.c.0.s8 %v5655
        %v5657 = vlaneseq
        %v5658 = vshrl.u32 %v5657, 7
        %v5659 = vsub.s32 %v5656, %v5658
        %v5660 = vrot.slane %v5652, %v5659
        %v5662 = vunpack.c.l.s4 1934713408
        %v5663 = vunpack.c.0.s8 %v5662
        %v5664 = vlaneseq
        %v5665 = vshrl.u32 %v5664, 7
        %v5666 = vsub.s32 %v5663, %v5665
        %v5667 = vrot.slane %v5653, %v5666
        %v5668 = vcombine.high %v5644, 0.0
        %v5669 = vcombine.high %v5651, 0.0
        %v5670 = vcombine.high %v5660, 0.0
        %v5671 = vcombine.high %v5667, 0.0
        %v5672 = vcombine.low %v5581, %v5595
        %v5673 = vcombine.high %v5581, %v5595
        %v5675 = vunpack.c.l.s4 1983009808
        %v5676 = vunpack.c.0.s8 %v5675
        %v5677 = vlaneseq
        %v5678 = vshrl.u32 %v5677, 7
        %v5679 = vsub.s32 %v5676, %v5678
        %v5680 = vrot.slane %v5672, %v5679
        %v5682 = vunpack.c.l.s4 1983009808
        %v5683 = vunpack.c.0.s8 %v5682
        %v5684 = vlaneseq
        %v5685 = vshrl.u32 %v5684, 7
        %v5686 = vsub.s32 %v5683, %v5685
        %v5687 = vrot.slane %v5673, %v5686
        %v5688 = vcombine.low %v5589, %v5601
        %v5689 = vcombine.high %v5589, %v5601
        %v5691 = vunpack.c.l.s4 1983009808
        %v5692 = vunpack.c.0.s8 %v5691
        %v5693 = vlaneseq
        %v5694 = vshrl.u32 %v5693, 7
        %v5695 = vsub.s32 %v5692, %v5694
        %v5696 = vrot.slane %v5688, %v5695
        %v5698 = vunpack.c.l.s4 1983009808
        %v5699 = vunpack.c.0.s8 %v5698
        %v5700 = vlaneseq
        %v5701 = vshrl.u32 %v5700, 7
        %v5702 = vsub.s32 %v5699, %v5701
        %v5703 = vrot.slane %v5689, %v5702
        %v5704 = vcombine.low %v5680, %v5696
        %v5705 = vcombine.high %v5680, %v5696
        %v5707 = vunpack.c.l.s4 1934713408
        %v5708 = vunpack.c.0.s8 %v5707
        %v5709 = vlaneseq
        %v5710 = vshrl.u32 %v5709, 7
        %v5711 = vsub.s32 %v5708, %v5710
        %v5712 = vrot.slane %v5704, %v5711
        %v5714 = vunpack.c.l.s4 1934713408
        %v5715 = vunpack.c.0.s8 %v5714
        %v5716 = vlaneseq
        %v5717 = vshrl.u32 %v5716, 7
        %v5718 = vsub.s32 %v5715, %v5717
        %v5719 = vrot.slane %v5705, %v5718
        %v5720 = vcombine.low %v5687, %v5703
        %v5721 = vcombine.high %v5687, %v5703
        %v5723 = vunpack.c.l.s4 1934713408
        %v5724 = vunpack.c.0.s8 %v5723
        %v5725 = vlaneseq
        %v5726 = vshrl.u32 %v5725, 7
        %v5727 = vsub.s32 %v5724, %v5726
        %v5728 = vrot.slane %v5720, %v5727
        %v5730 = vunpack.c.l.s4 1934713408
        %v5731 = vunpack.c.0.s8 %v5730
        %v5732 = vlaneseq
        %v5733 = vshrl.u32 %v5732, 7
        %v5734 = vsub.s32 %v5731, %v5733
        %v5735 = vrot.slane %v5721, %v5734
        %v5736 = vcombine.high %v5712, 0.0
        %v5737 = vcombine.high %v5719, 0.0
        %v5738 = vcombine.high %v5728, 0.0
        %v5739 = vcombine.high %v5735, 0.0
        %v5740 = vcombine.low %v5644, %v5651
        %v5742 = vunpack.c.l.s4 1983009808
        %v5743 = vunpack.c.0.s8 %v5742
        %v5744 = vlaneseq
        %v5745 = vshrl.u32 %v5744, 7
        %v5746 = vsub.s32 %v5743, %v5745
        %v5747 = vrot.slane %v5740, %v5746
        %v5748 = vcombine.low %v5668, %v5669
        %v5750 = vunpack.c.l.s4 1983009808
        %v5751 = vunpack.c.0.s8 %v5750
        %v5752 = vlaneseq
        %v5753 = vshrl.u32 %v5752, 7
        %v5754 = vsub.s32 %v5751, %v5753
        %v5755 = vrot.slane %v5748, %v5754
        %v5756 = vcombine.low %v5660, %v5667
        %v5758 = vunpack.c.l.s4 1983009808
        %v5759 = vunpack.c.0.s8 %v5758
        %v5760 = vlaneseq
        %v5761 = vshrl.u32 %v5760, 7
        %v5762 = vsub.s32 %v5759, %v5761
        %v5763 = vrot.slane %v5756, %v5762
        %v5764 = vcombine.low %v5670, %v5671
        %v5766 = vunpack.c.l.s4 1983009808
        %v5767 = vunpack.c.0.s8 %v5766
        %v5768 = vlaneseq
        %v5769 = vshrl.u32 %v5768, 7
        %v5770 = vsub.s32 %v5767, %v5769
        %v5771 = vrot.slane %v5764, %v5770
        %v5772 = vcombine.low %v5747, %v5755
        %v5773 = vcombine.high %v5747, %v5755
        %v5775 = vunpack.c.l.s4 1934713408
        %v5776 = vunpack.c.0.s8 %v5775
        %v5777 = vlaneseq
        %v5778 = vshrl.u32 %v5777, 7
        %v5779 = vsub.s32 %v5776, %v5778
        %v5780 = vrot.slane %v5772, %v5779
        %v5782 = vunpack.c.l.s4 1934713408
        %v5783 = vunpack.c.0.s8 %v5782
        %v5784 = vlaneseq
        %v5785 = vshrl.u32 %v5784, 7
        %v5786 = vsub.s32 %v5783, %v5785
        %v5787 = vrot.slane %v5773, %v5786
        %v5788 = vcombine.low %v5763, %v5771
        %v5789 = vcombine.high %v5763, %v5771
        %v5791 = vunpack.c.l.s4 1934713408
        %v5792 = vunpack.c.0.s8 %v5791
        %v5793 = vlaneseq
        %v5794 = vshrl.u32 %v5793, 7
        %v5795 = vsub.s32 %v5792, %v5794
        %v5796 = vrot.slane %v5788, %v5795
        %v5798 = vunpack.c.l.s4 1934713408
        %v5799 = vunpack.c.0.s8 %v5798
        %v5800 = vlaneseq
        %v5801 = vshrl.u32 %v5800, 7
        %v5802 = vsub.s32 %v5799, %v5801
        %v5803 = vrot.slane %v5789, %v5802
        %v5804 = vcombine.low %v5780, %v5796
        %v5805 = vcombine.high %v5780, %v5796
        %v5806 = vcombine.low %v5787, %v5803
        %v5807 = vcombine.high %v5787, %v5803
        %v5808 = vcombine.low %v5712, %v5719
        %v5810 = vunpack.c.l.s4 1983009808
        %v5811 = vunpack.c.0.s8 %v5810
        %v5812 = vlaneseq
        %v5813 = vshrl.u32 %v5812, 7
        %v5814 = vsub.s32 %v5811, %v5813
        %v5815 = vrot.slane %v5808, %v5814
        %v5816 = vcombine.low %v5736, %v5737
        %v5818 = vunpack.c.l.s4 1983009808
        %v5819 = vunpack.c.0.s8 %v5818
        %v5820 = vlaneseq
        %v5821 = vshrl.u32 %v5820, 7
        %v5822 = vsub.s32 %v5819, %v5821
        %v5823 = vrot.slane %v5816, %v5822
        %v5824 = vcombine.low %v5728, %v5735
        %v5826 = vunpack.c.l.s4 1983009808
        %v5827 = vunpack.c.0.s8 %v5826
        %v5828 = vlaneseq
        %v5829 = vshrl.u32 %v5828, 7
        %v5830 = vsub.s32 %v5827, %v5829
        %v5831 = vrot.slane %v5824, %v5830
        %v5832 = vcombine.low %v5738, %v5739
        %v5834 = vunpack.c.l.s4 1983009808
        %v5835 = vunpack.c.0.s8 %v5834
        %v5836 = vlaneseq
        %v5837 = vshrl.u32 %v5836, 7
        %v5838 = vsub.s32 %v5835, %v5837
        %v5839 = vrot.slane %v5832, %v5838
        %v5840 = vcombine.low %v5815, %v5823
        %v5841 = vcombine.high %v5815, %v5823
        %v5843 = vunpack.c.l.s4 1934713408
        %v5844 = vunpack.c.0.s8 %v5843
        %v5845 = vlaneseq
        %v5846 = vshrl.u32 %v5845, 7
        %v5847 = vsub.s32 %v5844, %v5846
        %v5848 = vrot.slane %v5840, %v5847
        %v5850 = vunpack.c.l.s4 1934713408
        %v5851 = vunpack.c.0.s8 %v5850
        %v5852 = vlaneseq
        %v5853 = vshrl.u32 %v5852, 7
        %v5854 = vsub.s32 %v5851, %v5853
        %v5855 = vrot.slane %v5841, %v5854
        %v5856 = vcombine.low %v5831, %v5839
        %v5857 = vcombine.high %v5831, %v5839
        %v5859 = vunpack.c.l.s4 1934713408
        %v5860 = vunpack.c.0.s8 %v5859
        %v5861 = vlaneseq
        %v5862 = vshrl.u32 %v5861, 7
        %v5863 = vsub.s32 %v5860, %v5862
        %v5864 = vrot.slane %v5856, %v5863
        %v5866 = vunpack.c.l.s4 1934713408
        %v5867 = vunpack.c.0.s8 %v5866
        %v5868 = vlaneseq
        %v5869 = vshrl.u32 %v5868, 7
        %v5870 = vsub.s32 %v5867, %v5869
        %v5871 = vrot.slane %v5857, %v5870
        %v5872 = vcombine.low %v5848, %v5864
        %v5873 = vcombine.high %v5848, %v5864
        %v5874 = vcombine.low %v5855, %v5871
        %v5875 = vcombine.high %v5855, %v5871
        %v5876 = vld [vmem:[#allocation2] sm:$0xff]
        %v5877 = vld [vmem:[#allocation2 + $0x8] sm:$0xff]
        %v5878 = vld [vmem:[#allocation2 + $0x10] sm:$0xff]
        %v5879 = vld [vmem:[#allocation2 + $0x18] sm:$0xff]
        %v5880 = vld [vmem:[#allocation2 + $0x20] sm:$0xff]
        %v5881 = vld [vmem:[#allocation2 + $0x28] sm:$0xff]
        %v5882 = vld [vmem:[#allocation2 + $0x30] sm:$0xff]
        %v5883 = vld [vmem:[#allocation2 + $0x38] sm:$0xff]
        %v5884 = vld [vmem:[#allocation2 + $0x40] sm:$0xff]
        %v5885 = vld [vmem:[#allocation2 + $0x48] sm:$0xff]
        %v5886 = vld [vmem:[#allocation2 + $0x50] sm:$0xff]
        %v5887 = vld [vmem:[#allocation2 + $0x58] sm:$0xff]
        %v5888 = vld [vmem:[#allocation2 + $0x60] sm:$0xff]
        %v5889 = vld [vmem:[#allocation2 + $0x68] sm:$0xff]
        %v5890 = vld [vmem:[#allocation2 + $0x70] sm:$0xff]
        %v5891 = vld [vmem:[#allocation2 + $0x78] sm:$0xff]
        %v5892 = vld [vmem:[#allocation2 + $0x80] sm:$0xff]
        %v5893 = vld [vmem:[#allocation2 + $0x88] sm:$0xff]
        %v5894 = vld [vmem:[#allocation2 + $0x90] sm:$0xff]
        %v5895 = vld [vmem:[#allocation2 + $0x98] sm:$0xff]
        %v5896 = vld [vmem:[#allocation2 + $0xa0] sm:$0xff]
        %v5897 = vld [vmem:[#allocation2 + $0xa8] sm:$0xff]
        %v5898 = vld [vmem:[#allocation2 + $0xb0] sm:$0xff]
        %v5899 = vld [vmem:[#allocation2 + $0xb8] sm:$0xff]
        %v5900 = vld [vmem:[#allocation2 + $0xc0] sm:$0xff]
        %v5901 = vld [vmem:[#allocation2 + $0xc8] sm:$0xff]
        %v5902 = vld [vmem:[#allocation2 + $0xd0] sm:$0xff]
        %v5903 = vld [vmem:[#allocation2 + $0xd8] sm:$0xff]
        %v5904 = vld [vmem:[#allocation2 + $0xe0] sm:$0xff]
        %v5905 = vld [vmem:[#allocation2 + $0xe8] sm:$0xff]
        %v5906 = vld [vmem:[#allocation2 + $0xf0] sm:$0xff]
        %v5907 = vld [vmem:[#allocation2 + $0xf8] sm:$0xff]
        %v5908 = vld [vmem:[#allocation2 + $0x100] sm:$0xff]
        %v5909 = vld [vmem:[#allocation2 + $0x108] sm:$0xff]
        %v5910 = vld [vmem:[#allocation2 + $0x110] sm:$0xff]
        %v5911 = vld [vmem:[#allocation2 + $0x118] sm:$0xff]
        %v5912 = vld [vmem:[#allocation2 + $0x120] sm:$0xff]
        %v5913 = vld [vmem:[#allocation2 + $0x128] sm:$0xff]
        %v5914 = vld [vmem:[#allocation2 + $0x130] sm:$0xff]
        %v5915 = vld [vmem:[#allocation2 + $0x138] sm:$0xff]
        %v5916 = vld [vmem:[#allocation2 + $0x140] sm:$0xff]
        %v5917 = vld [vmem:[#allocation2 + $0x148] sm:$0xff]
        %v5918 = vld [vmem:[#allocation2 + $0x150] sm:$0xff]
        %v5919 = vld [vmem:[#allocation2 + $0x158] sm:$0xff]
        %v5920 = vld [vmem:[#allocation2 + $0x160] sm:$0xff]
        %v5921 = vld [vmem:[#allocation2 + $0x168] sm:$0xff]
        %v5922 = vld [vmem:[#allocation2 + $0x170] sm:$0xff]
        %v5923 = vld [vmem:[#allocation2 + $0x178] sm:$0xff]
        %v5924 = vld [vmem:[#allocation2 + $0x180] sm:$0xff]
        %v5925 = vld [vmem:[#allocation2 + $0x188] sm:$0xff]
        %v5926 = vld [vmem:[#allocation2 + $0x190] sm:$0xff]
        %v5927 = vld [vmem:[#allocation2 + $0x198] sm:$0xff]
        %v5928 = vld [vmem:[#allocation2 + $0x1a0] sm:$0xff]
        %v5929 = vld [vmem:[#allocation2 + $0x1a8] sm:$0xff]
        %v5930 = vld [vmem:[#allocation2 + $0x1b0] sm:$0xff]
        %v5931 = vld [vmem:[#allocation2 + $0x1b8] sm:$0xff]
        %v5932 = vld [vmem:[#allocation2 + $0x1c0] sm:$0xff]
        %v5933 = vld [vmem:[#allocation2 + $0x1c8] sm:$0xff]
        %v5934 = vld [vmem:[#allocation2 + $0x1d0] sm:$0xff]
        %v5935 = vld [vmem:[#allocation2 + $0x1d8] sm:$0xff]
        %v5936 = vld [vmem:[#allocation2 + $0x1e0] sm:$0xff]
        %v5937 = vld [vmem:[#allocation2 + $0x1e8] sm:$0xff]
        %v5938 = vld [vmem:[#allocation2 + $0x1f0] sm:$0xff]
        %v5939 = vld [vmem:[#allocation2 + $0x1f8] sm:$0xff]
        %vm5940 = vcmask 130048
        %v5942 = vsel %vm5940, %v5804, 0
        %v5945 = vsel %vm5940, %v5872, 0
        %v5948 = vsel %vm5940, %v5876, 0
        %v5951 = vsel %vm5940, %v5877, 0
        %v5954 = vsel %vm5940, %v5878, 0
        %v5957 = vsel %vm5940, %v5879, 0
        %v5960 = vsel %vm5940, %v5880, 0
        %v5963 = vsel %vm5940, %v5881, 0
        %v5966 = vsel %vm5940, %v5882, 0
        %v5969 = vsel %vm5940, %v5883, 0
        %v5972 = vsel %vm5940, %v5884, 0
        %v5975 = vsel %vm5940, %v5885, 0
        %v5978 = vsel %vm5940, %v5886, 0
        %v5981 = vsel %vm5940, %v5887, 0
        %v5984 = vsel %vm5940, %v5888, 0
        %v5987 = vsel %vm5940, %v5889, 0
        %v5990 = vsel %vm5940, %v5890, 0
        %v5993 = vsel %vm5940, %v5891, 0
        %5995 = vmatprep.subr.mxu0 0.0
        %5996 = vmatpush1.xpose.msra.mxu0 %v5993
        %5997 = vmatprep.subr.mxu0 0.0
        %5998 = vmatpush1.xpose.msra.mxu0 %v5990
        %5999 = vmatprep.subr.mxu0 0.0
        %6000 = vmatpush1.xpose.msra.mxu0 %v5987
        %6001 = vmatprep.subr.mxu0 0.0
        %6002 = vmatpush1.xpose.msra.mxu0 %v5984
        %6003 = vmatprep.subr.mxu0 0.0
        %6004 = vmatpush1.xpose.msra.mxu0 %v5981
        %6005 = vmatprep.subr.mxu0 0.0
        %6006 = vmatpush1.xpose.msra.mxu0 %v5978
        %6007 = vmatprep.subr.mxu0 0.0
        %6008 = vmatpush1.xpose.msra.mxu0 %v5975
        %6009 = vmatprep.subr.mxu0 0.0
        %6010 = vmatpush1.xpose.msra.mxu0 %v5972
        %6011 = vmatprep.subr.mxu0 0.0
        %6012 = vmatpush1.xpose.msra.mxu0 %v5969
        %6013 = vmatprep.subr.mxu0 0.0
        %6014 = vmatpush1.xpose.msra.mxu0 %v5966
        %6015 = vmatprep.subr.mxu0 0.0
        %6016 = vmatpush1.xpose.msra.mxu0 %v5963
        %6017 = vmatprep.subr.mxu0 0.0
        %6018 = vmatpush1.xpose.msra.mxu0 %v5960
        %6019 = vmatprep.subr.mxu0 0.0
        %6020 = vmatpush1.xpose.msra.mxu0 %v5957
        %6021 = vmatprep.subr.mxu0 0.0
        %6022 = vmatpush1.xpose.msra.mxu0 %v5954
        %6023 = vmatprep.subr.mxu0 0.0
        %6024 = vmatpush1.xpose.msra.mxu0 %v5951
        %6025 = vmatprep.subr.mxu0 0.0
        %6026 = vmatpush1.xpose.msra.mxu0 %v5948
        %6027 = vmatprep.subr.mxu0 0.0
        %6028 = vmatpush2.xpose.msra.mxu0 0.0
        %6029 = vmatprep.subr.mxu0 0.0
        %6030 = vmatpush2.xpose.msra.mxu0 0.0
        %6031 = vmatprep.subr.mxu0 0.0
        %6032 = vmatpush2.xpose.msra.mxu0 0.0
        %6033 = vmatprep.subr.mxu0 0.0
        %6034 = vmatpush2.xpose.msra.mxu0 0.0
        %6035 = vmatprep.subr.mxu0 0.0
        %6036 = vmatpush2.xpose.msra.mxu0 0.0
        %6037 = vmatprep.subr.mxu0 0.0
        %6038 = vmatpush2.xpose.msra.mxu0 0.0
        %6039 = vmatprep.subr.mxu0 0.0
        %6040 = vmatpush2.xpose.msra.mxu0 0.0
        %6041 = vmatprep.subr.mxu0 0.0
        %6042 = vmatpush2.xpose.msra.mxu0 0.0
        %6043 = vmatprep.subr.mxu0 0.0
        %6044 = vmatpush2.xpose.msra.mxu0 0.0
        %6045 = vmatprep.subr.mxu0 0.0
        %6046 = vmatpush2.xpose.msra.mxu0 0.0
        %6047 = vmatprep.subr.mxu0 0.0
        %6048 = vmatpush2.xpose.msra.mxu0 0.0
        %6049 = vmatprep.subr.mxu0 0.0
        %6050 = vmatpush2.xpose.msra.mxu0 0.0
        %6051 = vmatprep.subr.mxu0 0.0
        %6052 = vmatpush2.xpose.msra.mxu0 0.0
        %6053 = vmatprep.subr.mxu0 0.0
        %6054 = vmatpush2.xpose.msra.mxu0 0.0
        %6055 = vmatprep.subr.mxu0 0.0
        %6056 = vmatpush2.xpose.msra.mxu0 0.0
        %6057 = vmatprep.subr.mxu0 0.0
        %6058 = vmatpush2.xpose.msra.mxu0 0.0
        %6059 = vmatprep.mubr.f32.mxu0 0.0
        %6060 = vmatmul.mubr.f32.gmra.mxu0 %v5942
        %v6061 = vpop.f32.mrf.mxu0
        %v6062 = vadd.f32 0.0, %v6061
        %v6063 = vpop.f32.mrf.mxu0
        %6064 = vmatprep.mubr.f32.mxu0 0.0
        %6065 = vmatmul.mubr.f32.gmra.mxu0 %v5945
        %v6066 = vpop.f32.mrf.mxu0
        %v6067 = vadd.f32 0.0, %v6066
        %v6068 = vpop.f32.mrf.mxu0
        %6069 = vdwg.mxu0
        %v6071 = vsel %vm5940, %v5805, 0
        %v6074 = vsel %vm5940, %v5873, 0
        %v6077 = vsel %vm5940, %v5892, 0
        %v6080 = vsel %vm5940, %v5893, 0
        %v6083 = vsel %vm5940, %v5894, 0
        %v6086 = vsel %vm5940, %v5895, 0
        %v6089 = vsel %vm5940, %v5896, 0
        %v6092 = vsel %vm5940, %v5897, 0
        %v6095 = vsel %vm5940, %v5898, 0
        %v6098 = vsel %vm5940, %v5899, 0
        %v6101 = vsel %vm5940, %v5900, 0
        %v6104 = vsel %vm5940, %v5901, 0
        %v6107 = vsel %vm5940, %v5902, 0
        %v6110 = vsel %vm5940, %v5903, 0
        %v6113 = vsel %vm5940, %v5904, 0
        %v6116 = vsel %vm5940, %v5905, 0
        %v6119 = vsel %vm5940, %v5906, 0
        %v6122 = vsel %vm5940, %v5907, 0
        %6124 = vmatprep.subr.mxu0 0.0
        %6125 = vmatpush1.xpose.msra.mxu0 %v6122
        %6126 = vmatprep.subr.mxu0 0.0
        %6127 = vmatpush1.xpose.msra.mxu0 %v6119
        %6128 = vmatprep.subr.mxu0 0.0
        %6129 = vmatpush1.xpose.msra.mxu0 %v6116
        %6130 = vmatprep.subr.mxu0 0.0
        %6131 = vmatpush1.xpose.msra.mxu0 %v6113
        %6132 = vmatprep.subr.mxu0 0.0
        %6133 = vmatpush1.xpose.msra.mxu0 %v6110
        %6134 = vmatprep.subr.mxu0 0.0
        %6135 = vmatpush1.xpose.msra.mxu0 %v6107
        %6136 = vmatprep.subr.mxu0 0.0
        %6137 = vmatpush1.xpose.msra.mxu0 %v6104
        %6138 = vmatprep.subr.mxu0 0.0
        %6139 = vmatpush1.xpose.msra.mxu0 %v6101
        %6140 = vmatprep.subr.mxu0 0.0
        %6141 = vmatpush1.xpose.msra.mxu0 %v6098
        %6142 = vmatprep.subr.mxu0 0.0
        %6143 = vmatpush1.xpose.msra.mxu0 %v6095
        %6144 = vmatprep.subr.mxu0 0.0
        %6145 = vmatpush1.xpose.msra.mxu0 %v6092
        %6146 = vmatprep.subr.mxu0 0.0
        %6147 = vmatpush1.xpose.msra.mxu0 %v6089
        %6148 = vmatprep.subr.mxu0 0.0
        %6149 = vmatpush1.xpose.msra.mxu0 %v6086
        %6150 = vmatprep.subr.mxu0 0.0
        %6151 = vmatpush1.xpose.msra.mxu0 %v6083
        %6152 = vmatprep.subr.mxu0 0.0
        %6153 = vmatpush1.xpose.msra.mxu0 %v6080
        %6154 = vmatprep.subr.mxu0 0.0
        %6155 = vmatpush1.xpose.msra.mxu0 %v6077
        %6156 = vmatprep.subr.mxu0 0.0
        %6157 = vmatpush2.xpose.msra.mxu0 0.0
        %6158 = vmatprep.subr.mxu0 0.0
        %6159 = vmatpush2.xpose.msra.mxu0 0.0
        %6160 = vmatprep.subr.mxu0 0.0
        %6161 = vmatpush2.xpose.msra.mxu0 0.0
        %6162 = vmatprep.subr.mxu0 0.0
        %6163 = vmatpush2.xpose.msra.mxu0 0.0
        %6164 = vmatprep.subr.mxu0 0.0
        %6165 = vmatpush2.xpose.msra.mxu0 0.0
        %6166 = vmatprep.subr.mxu0 0.0
        %6167 = vmatpush2.xpose.msra.mxu0 0.0
        %6168 = vmatprep.subr.mxu0 0.0
        %6169 = vmatpush2.xpose.msra.mxu0 0.0
        %6170 = vmatprep.subr.mxu0 0.0
        %6171 = vmatpush2.xpose.msra.mxu0 0.0
        %6172 = vmatprep.subr.mxu0 0.0
        %6173 = vmatpush2.xpose.msra.mxu0 0.0
        %6174 = vmatprep.subr.mxu0 0.0
        %6175 = vmatpush2.xpose.msra.mxu0 0.0
        %6176 = vmatprep.subr.mxu0 0.0
        %6177 = vmatpush2.xpose.msra.mxu0 0.0
        %6178 = vmatprep.subr.mxu0 0.0
        %6179 = vmatpush2.xpose.msra.mxu0 0.0
        %6180 = vmatprep.subr.mxu0 0.0
        %6181 = vmatpush2.xpose.msra.mxu0 0.0
        %6182 = vmatprep.subr.mxu0 0.0
        %6183 = vmatpush2.xpose.msra.mxu0 0.0
        %6184 = vmatprep.subr.mxu0 0.0
        %6185 = vmatpush2.xpose.msra.mxu0 0.0
        %6186 = vmatprep.subr.mxu0 0.0
        %6187 = vmatpush2.xpose.msra.mxu0 0.0
        %6188 = vmatprep.mubr.f32.mxu0 0.0
        %6189 = vmatmul.mubr.f32.gmra.mxu0 %v6071
        %v6190 = vpop.f32.mrf.mxu0
        %v6191 = vadd.f32 0.0, %v6190
        %v6192 = vpop.f32.mrf.mxu0
        %6193 = vmatprep.mubr.f32.mxu0 0.0
        %6194 = vmatmul.mubr.f32.gmra.mxu0 %v6074
        %v6195 = vpop.f32.mrf.mxu0
        %v6196 = vadd.f32 0.0, %v6195
        %v6197 = vpop.f32.mrf.mxu0
        %6198 = vdwg.mxu0
        %v6200 = vsel %vm5940, %v5806, 0
        %v6203 = vsel %vm5940, %v5874, 0
        %v6206 = vsel %vm5940, %v5908, 0
        %v6209 = vsel %vm5940, %v5909, 0
        %v6212 = vsel %vm5940, %v5910, 0
        %v6215 = vsel %vm5940, %v5911, 0
        %v6218 = vsel %vm5940, %v5912, 0
        %v6221 = vsel %vm5940, %v5913, 0
        %v6224 = vsel %vm5940, %v5914, 0
        %v6227 = vsel %vm5940, %v5915, 0
        %v6230 = vsel %vm5940, %v5916, 0
        %v6233 = vsel %vm5940, %v5917, 0
        %v6236 = vsel %vm5940, %v5918, 0
        %v6239 = vsel %vm5940, %v5919, 0
        %v6242 = vsel %vm5940, %v5920, 0
        %v6245 = vsel %vm5940, %v5921, 0
        %v6248 = vsel %vm5940, %v5922, 0
        %v6251 = vsel %vm5940, %v5923, 0
        %6253 = vmatprep.subr.mxu0 0.0
        %6254 = vmatpush1.xpose.msra.mxu0 %v6251
        %6255 = vmatprep.subr.mxu0 0.0
        %6256 = vmatpush1.xpose.msra.mxu0 %v6248
        %6257 = vmatprep.subr.mxu0 0.0
        %6258 = vmatpush1.xpose.msra.mxu0 %v6245
        %6259 = vmatprep.subr.mxu0 0.0
        %6260 = vmatpush1.xpose.msra.mxu0 %v6242
        %6261 = vmatprep.subr.mxu0 0.0
        %6262 = vmatpush1.xpose.msra.mxu0 %v6239
        %6263 = vmatprep.subr.mxu0 0.0
        %6264 = vmatpush1.xpose.msra.mxu0 %v6236
        %6265 = vmatprep.subr.mxu0 0.0
        %6266 = vmatpush1.xpose.msra.mxu0 %v6233
        %6267 = vmatprep.subr.mxu0 0.0
        %6268 = vmatpush1.xpose.msra.mxu0 %v6230
        %6269 = vmatprep.subr.mxu0 0.0
        %6270 = vmatpush1.xpose.msra.mxu0 %v6227
        %6271 = vmatprep.subr.mxu0 0.0
        %6272 = vmatpush1.xpose.msra.mxu0 %v6224
        %6273 = vmatprep.subr.mxu0 0.0
        %6274 = vmatpush1.xpose.msra.mxu0 %v6221
        %6275 = vmatprep.subr.mxu0 0.0
        %6276 = vmatpush1.xpose.msra.mxu0 %v6218
        %6277 = vmatprep.subr.mxu0 0.0
        %6278 = vmatpush1.xpose.msra.mxu0 %v6215
        %6279 = vmatprep.subr.mxu0 0.0
        %6280 = vmatpush1.xpose.msra.mxu0 %v6212
        %6281 = vmatprep.subr.mxu0 0.0
        %6282 = vmatpush1.xpose.msra.mxu0 %v6209
        %6283 = vmatprep.subr.mxu0 0.0
        %6284 = vmatpush1.xpose.msra.mxu0 %v6206
        %6285 = vmatprep.subr.mxu0 0.0
        %6286 = vmatpush2.xpose.msra.mxu0 0.0
        %6287 = vmatprep.subr.mxu0 0.0
        %6288 = vmatpush2.xpose.msra.mxu0 0.0
        %6289 = vmatprep.subr.mxu0 0.0
        %6290 = vmatpush2.xpose.msra.mxu0 0.0
        %6291 = vmatprep.subr.mxu0 0.0
        %6292 = vmatpush2.xpose.msra.mxu0 0.0
        %6293 = vmatprep.subr.mxu0 0.0
        %6294 = vmatpush2.xpose.msra.mxu0 0.0
        %6295 = vmatprep.subr.mxu0 0.0
        %6296 = vmatpush2.xpose.msra.mxu0 0.0
        %6297 = vmatprep.subr.mxu0 0.0
        %6298 = vmatpush2.xpose.msra.mxu0 0.0
        %6299 = vmatprep.subr.mxu0 0.0
        %6300 = vmatpush2.xpose.msra.mxu0 0.0
        %6301 = vmatprep.subr.mxu0 0.0
        %6302 = vmatpush2.xpose.msra.mxu0 0.0
        %6303 = vmatprep.subr.mxu0 0.0
        %6304 = vmatpush2.xpose.msra.mxu0 0.0
        %6305 = vmatprep.subr.mxu0 0.0
        %6306 = vmatpush2.xpose.msra.mxu0 0.0
        %6307 = vmatprep.subr.mxu0 0.0
        %6308 = vmatpush2.xpose.msra.mxu0 0.0
        %6309 = vmatprep.subr.mxu0 0.0
        %6310 = vmatpush2.xpose.msra.mxu0 0.0
        %6311 = vmatprep.subr.mxu0 0.0
        %6312 = vmatpush2.xpose.msra.mxu0 0.0
        %6313 = vmatprep.subr.mxu0 0.0
        %6314 = vmatpush2.xpose.msra.mxu0 0.0
        %6315 = vmatprep.subr.mxu0 0.0
        %6316 = vmatpush2.xpose.msra.mxu0 0.0
        %6317 = vmatprep.mubr.f32.mxu0 0.0
        %6318 = vmatmul.mubr.f32.gmra.mxu0 %v6200
        %v6319 = vpop.f32.mrf.mxu0
        %v6320 = vadd.f32 0.0, %v6319
        %v6321 = vpop.f32.mrf.mxu0
        %6322 = vmatprep.mubr.f32.mxu0 0.0
        %6323 = vmatmul.mubr.f32.gmra.mxu0 %v6203
        %v6324 = vpop.f32.mrf.mxu0
        %v6325 = vadd.f32 0.0, %v6324
        %v6326 = vpop.f32.mrf.mxu0
        %6327 = vdwg.mxu0
        %v6329 = vsel %vm5940, %v5807, 0
        %v6332 = vsel %vm5940, %v5875, 0
        %v6335 = vsel %vm5940, %v5924, 0
        %v6338 = vsel %vm5940, %v5925, 0
        %v6341 = vsel %vm5940, %v5926, 0
        %v6344 = vsel %vm5940, %v5927, 0
        %v6347 = vsel %vm5940, %v5928, 0
        %v6350 = vsel %vm5940, %v5929, 0
        %v6353 = vsel %vm5940, %v5930, 0
        %v6356 = vsel %vm5940, %v5931, 0
        %v6359 = vsel %vm5940, %v5932, 0
        %v6362 = vsel %vm5940, %v5933, 0
        %v6365 = vsel %vm5940, %v5934, 0
        %v6368 = vsel %vm5940, %v5935, 0
        %v6371 = vsel %vm5940, %v5936, 0
        %v6374 = vsel %vm5940, %v5937, 0
        %v6377 = vsel %vm5940, %v5938, 0
        %v6380 = vsel %vm5940, %v5939, 0
        %6382 = vmatprep.subr.mxu0 0.0
        %6383 = vmatpush1.xpose.msra.mxu0 %v6380
        %6384 = vmatprep.subr.mxu0 0.0
        %6385 = vmatpush1.xpose.msra.mxu0 %v6377
        %6386 = vmatprep.subr.mxu0 0.0
        %6387 = vmatpush1.xpose.msra.mxu0 %v6374
        %6388 = vmatprep.subr.mxu0 0.0
        %6389 = vmatpush1.xpose.msra.mxu0 %v6371
        %6390 = vmatprep.subr.mxu0 0.0
        %6391 = vmatpush1.xpose.msra.mxu0 %v6368
        %6392 = vmatprep.subr.mxu0 0.0
        %6393 = vmatpush1.xpose.msra.mxu0 %v6365
        %6394 = vmatprep.subr.mxu0 0.0
        %6395 = vmatpush1.xpose.msra.mxu0 %v6362
        %6396 = vmatprep.subr.mxu0 0.0
        %6397 = vmatpush1.xpose.msra.mxu0 %v6359
        %6398 = vmatprep.subr.mxu0 0.0
        %6399 = vmatpush1.xpose.msra.mxu0 %v6356
        %6400 = vmatprep.subr.mxu0 0.0
        %6401 = vmatpush1.xpose.msra.mxu0 %v6353
        %6402 = vmatprep.subr.mxu0 0.0
        %6403 = vmatpush1.xpose.msra.mxu0 %v6350
        %6404 = vmatprep.subr.mxu0 0.0
        %6405 = vmatpush1.xpose.msra.mxu0 %v6347
        %6406 = vmatprep.subr.mxu0 0.0
        %6407 = vmatpush1.xpose.msra.mxu0 %v6344
        %6408 = vmatprep.subr.mxu0 0.0
        %6409 = vmatpush1.xpose.msra.mxu0 %v6341
        %6410 = vmatprep.subr.mxu0 0.0
        %6411 = vmatpush1.xpose.msra.mxu0 %v6338
        %6412 = vmatprep.subr.mxu0 0.0
        %6413 = vmatpush1.xpose.msra.mxu0 %v6335
        %6414 = vmatprep.subr.mxu0 0.0
        %6415 = vmatpush2.xpose.msra.mxu0 0.0
        %6416 = vmatprep.subr.mxu0 0.0
        %6417 = vmatpush2.xpose.msra.mxu0 0.0
        %6418 = vmatprep.subr.mxu0 0.0
        %6419 = vmatpush2.xpose.msra.mxu0 0.0
        %6420 = vmatprep.subr.mxu0 0.0
        %6421 = vmatpush2.xpose.msra.mxu0 0.0
        %6422 = vmatprep.subr.mxu0 0.0
        %6423 = vmatpush2.xpose.msra.mxu0 0.0
        %6424 = vmatprep.subr.mxu0 0.0
        %6425 = vmatpush2.xpose.msra.mxu0 0.0
        %6426 = vmatprep.subr.mxu0 0.0
        %6427 = vmatpush2.xpose.msra.mxu0 0.0
        %6428 = vmatprep.subr.mxu0 0.0
        %6429 = vmatpush2.xpose.msra.mxu0 0.0
        %6430 = vmatprep.subr.mxu0 0.0
        %6431 = vmatpush2.xpose.msra.mxu0 0.0
        %6432 = vmatprep.subr.mxu0 0.0
        %6433 = vmatpush2.xpose.msra.mxu0 0.0
        %6434 = vmatprep.subr.mxu0 0.0
        %6435 = vmatpush2.xpose.msra.mxu0 0.0
        %6436 = vmatprep.subr.mxu0 0.0
        %6437 = vmatpush2.xpose.msra.mxu0 0.0
        %6438 = vmatprep.subr.mxu0 0.0
        %6439 = vmatpush2.xpose.msra.mxu0 0.0
        %6440 = vmatprep.subr.mxu0 0.0
        %6441 = vmatpush2.xpose.msra.mxu0 0.0
        %6442 = vmatprep.subr.mxu0 0.0
        %6443 = vmatpush2.xpose.msra.mxu0 0.0
        %6444 = vmatprep.subr.mxu0 0.0
        %6445 = vmatpush2.xpose.msra.mxu0 0.0
        %6446 = vmatprep.mubr.f32.mxu0 0.0
        %6447 = vmatmul.mubr.f32.gmra.mxu0 %v6329
        %v6448 = vpop.f32.mrf.mxu0
        %v6449 = vadd.f32 0.0, %v6448
        %v6450 = vpop.f32.mrf.mxu0
        %6451 = vmatprep.mubr.f32.mxu0 0.0
        %6452 = vmatmul.mubr.f32.gmra.mxu0 %v6332
        %v6453 = vpop.f32.mrf.mxu0
        %v6454 = vadd.f32 0.0, %v6453
        %v6455 = vpop.f32.mrf.mxu0
        %6456 = vdwg.mxu0
        %v6457 = vlaneseq
        %v6458 = vand.u32 %v6457, 127
        %vm6459 = vcmp.lt.s32.totalorder %v6458, 8
        %v6460 = vsel %vm6459, %v6062, -1e+30
        %v6461 = vsel %vm6459, %v6067, -1e+30
        %v6462 = vsel %vm6459, %v6191, -1e+30
        %v6463 = vsel %vm6459, %v6196, -1e+30
        %v6464 = vsel %vm6459, %v6320, -1e+30
        %v6465 = vsel %vm6459, %v6325, -1e+30
        %v6466 = vsel %vm6459, %v6449, -1e+30
        %v6467 = vsel %vm6459, %v6454, -1e+30
        %6468 = vmax.xlane.f32.xlu0 %v6460
        %v6469 = vpop.xlane.xlu0 %6468
        %6470 = vmax.xlane.f32.xlu0 %v6461
        %v6471 = vpop.xlane.xlu0 %6470
        %6472 = vmax.xlane.f32.xlu0 %v6462
        %v6473 = vpop.xlane.xlu0 %6472
        %6474 = vmax.xlane.f32.xlu0 %v6463
        %v6475 = vpop.xlane.xlu0 %6474
        %6476 = vmax.xlane.f32.xlu0 %v6464
        %v6477 = vpop.xlane.xlu0 %6476
        %6478 = vmax.xlane.f32.xlu0 %v6465
        %v6479 = vpop.xlane.xlu0 %6478
        %6480 = vmax.xlane.f32.xlu0 %v6466
        %v6481 = vpop.xlane.xlu0 %6480
        %6482 = vmax.xlane.f32.xlu0 %v6467
        %v6483 = vpop.xlane.xlu0 %6482
        %v6484 = vsub.f32 %v6460, %v6469
        %v6485 = vsub.f32 %v6461, %v6471
        %v6486 = vsub.f32 %v6462, %v6473
        %v6487 = vsub.f32 %v6463, %v6475
        %v6488 = vsub.f32 %v6464, %v6477
        %v6489 = vsub.f32 %v6465, %v6479
        %v6490 = vsub.f32 %v6466, %v6481
        %v6491 = vsub.f32 %v6467, %v6483
        %v6492 = vmul.f32 %v6484, 1.442695
        %v6493 = vpow.pop %v6492
        %v6494 = vmul.f32 %v6485, 1.442695
        %v6495 = vpow.pop %v6494
        %v6496 = vmul.f32 %v6486, 1.442695
        %v6497 = vpow.pop %v6496
        %v6498 = vmul.f32 %v6487, 1.442695
        %v6499 = vpow.pop %v6498
        %v6500 = vmul.f32 %v6488, 1.442695
        %v6501 = vpow.pop %v6500
        %v6502 = vmul.f32 %v6489, 1.442695
        %v6503 = vpow.pop %v6502
        %v6504 = vmul.f32 %v6490, 1.442695
        %v6505 = vpow.pop %v6504
        %v6506 = vmul.f32 %v6491, 1.442695
        %v6507 = vpow.pop %v6506
        %6508 = vadd.xlane.f32.xlu0 %v6493
        %v6509 = vpop.xlane.xlu0 %6508
        %6510 = vadd.xlane.f32.xlu0 %v6495
        %v6511 = vpop.xlane.xlu0 %6510
        %6512 = vadd.xlane.f32.xlu0 %v6497
        %v6513 = vpop.xlane.xlu0 %6512
        %6514 = vadd.xlane.f32.xlu0 %v6499
        %v6515 = vpop.xlane.xlu0 %6514
        %6516 = vadd.xlane.f32.xlu0 %v6501
        %v6517 = vpop.xlane.xlu0 %6516
        %6518 = vadd.xlane.f32.xlu0 %v6503
        %v6519 = vpop.xlane.xlu0 %6518
        %6520 = vadd.xlane.f32.xlu0 %v6505
        %v6521 = vpop.xlane.xlu0 %6520
        %6522 = vadd.xlane.f32.xlu0 %v6507
        %v6523 = vpop.xlane.xlu0 %6522
        %v6524 = vrcp.pop %v6509
        %v6525 = vrcp.pop %v6511
        %v6526 = vrcp.pop %v6513
        %v6527 = vrcp.pop %v6515
        %v6528 = vrcp.pop %v6517
        %v6529 = vrcp.pop %v6519
        %v6530 = vrcp.pop %v6521
        %v6531 = vrcp.pop %v6523
        %v6532 = vmul.f32 %v6493, %v6524
        %v6533 = vmul.f32 %v6495, %v6525
        %v6534 = vmul.f32 %v6497, %v6526
        %v6535 = vmul.f32 %v6499, %v6527
        %v6536 = vmul.f32 %v6501, %v6528
        %v6537 = vmul.f32 %v6503, %v6529
        %v6538 = vmul.f32 %v6505, %v6530
        %v6539 = vmul.f32 %v6507, %v6531
        %v6540 = vld [vmem:[#allocation3] sm:$0xff]
        %v6541 = vld [vmem:[#allocation3 + $0x8] sm:$0xff]
        %v6542 = vld [vmem:[#allocation3 + $0x10] sm:$0xff]
        %v6543 = vld [vmem:[#allocation3 + $0x18] sm:$0xff]
        %v6544 = vld [vmem:[#allocation3 + $0x20] sm:$0xff]
        %v6545 = vld [vmem:[#allocation3 + $0x28] sm:$0xff]
        %v6546 = vld [vmem:[#allocation3 + $0x30] sm:$0xff]
        %v6547 = vld [vmem:[#allocation3 + $0x38] sm:$0xff]
        %v6548 = vld [vmem:[#allocation3 + $0x40] sm:$0xff]
        %v6549 = vld [vmem:[#allocation3 + $0x48] sm:$0xff]
        %v6550 = vld [vmem:[#allocation3 + $0x50] sm:$0xff]
        %v6551 = vld [vmem:[#allocation3 + $0x58] sm:$0xff]
        %v6552 = vld [vmem:[#allocation3 + $0x60] sm:$0xff]
        %v6553 = vld [vmem:[#allocation3 + $0x68] sm:$0xff]
        %v6554 = vld [vmem:[#allocation3 + $0x70] sm:$0xff]
        %v6555 = vld [vmem:[#allocation3 + $0x78] sm:$0xff]
        %v6556 = vld [vmem:[#allocation3 + $0x80] sm:$0xff]
        %v6557 = vld [vmem:[#allocation3 + $0x88] sm:$0xff]
        %v6558 = vld [vmem:[#allocation3 + $0x90] sm:$0xff]
        %v6559 = vld [vmem:[#allocation3 + $0x98] sm:$0xff]
        %v6560 = vld [vmem:[#allocation3 + $0xa0] sm:$0xff]
        %v6561 = vld [vmem:[#allocation3 + $0xa8] sm:$0xff]
        %v6562 = vld [vmem:[#allocation3 + $0xb0] sm:$0xff]
        %v6563 = vld [vmem:[#allocation3 + $0xb8] sm:$0xff]
        %v6564 = vld [vmem:[#allocation3 + $0xc0] sm:$0xff]
        %v6565 = vld [vmem:[#allocation3 + $0xc8] sm:$0xff]
        %v6566 = vld [vmem:[#allocation3 + $0xd0] sm:$0xff]
        %v6567 = vld [vmem:[#allocation3 + $0xd8] sm:$0xff]
        %v6568 = vld [vmem:[#allocation3 + $0xe0] sm:$0xff]
        %v6569 = vld [vmem:[#allocation3 + $0xe8] sm:$0xff]
        %v6570 = vld [vmem:[#allocation3 + $0xf0] sm:$0xff]
        %v6571 = vld [vmem:[#allocation3 + $0xf8] sm:$0xff]
        %v6572 = vld [vmem:[#allocation3 + $0x100] sm:$0xff]
        %v6573 = vld [vmem:[#allocation3 + $0x108] sm:$0xff]
        %v6574 = vld [vmem:[#allocation3 + $0x110] sm:$0xff]
        %v6575 = vld [vmem:[#allocation3 + $0x118] sm:$0xff]
        %v6576 = vld [vmem:[#allocation3 + $0x120] sm:$0xff]
        %v6577 = vld [vmem:[#allocation3 + $0x128] sm:$0xff]
        %v6578 = vld [vmem:[#allocation3 + $0x130] sm:$0xff]
        %v6579 = vld [vmem:[#allocation3 + $0x138] sm:$0xff]
        %v6580 = vld [vmem:[#allocation3 + $0x140] sm:$0xff]
        %v6581 = vld [vmem:[#allocation3 + $0x148] sm:$0xff]
        %v6582 = vld [vmem:[#allocation3 + $0x150] sm:$0xff]
        %v6583 = vld [vmem:[#allocation3 + $0x158] sm:$0xff]
        %v6584 = vld [vmem:[#allocation3 + $0x160] sm:$0xff]
        %v6585 = vld [vmem:[#allocation3 + $0x168] sm:$0xff]
        %v6586 = vld [vmem:[#allocation3 + $0x170] sm:$0xff]
        %v6587 = vld [vmem:[#allocation3 + $0x178] sm:$0xff]
        %v6588 = vld [vmem:[#allocation3 + $0x180] sm:$0xff]
        %v6589 = vld [vmem:[#allocation3 + $0x188] sm:$0xff]
        %v6590 = vld [vmem:[#allocation3 + $0x190] sm:$0xff]
        %v6591 = vld [vmem:[#allocation3 + $0x198] sm:$0xff]
        %v6592 = vld [vmem:[#allocation3 + $0x1a0] sm:$0xff]
        %v6593 = vld [vmem:[#allocation3 + $0x1a8] sm:$0xff]
        %v6594 = vld [vmem:[#allocation3 + $0x1b0] sm:$0xff]
        %v6595 = vld [vmem:[#allocation3 + $0x1b8] sm:$0xff]
        %v6596 = vld [vmem:[#allocation3 + $0x1c0] sm:$0xff]
        %v6597 = vld [vmem:[#allocation3 + $0x1c8] sm:$0xff]
        %v6598 = vld [vmem:[#allocation3 + $0x1d0] sm:$0xff]
        %v6599 = vld [vmem:[#allocation3 + $0x1d8] sm:$0xff]
        %v6600 = vld [vmem:[#allocation3 + $0x1e0] sm:$0xff]
        %v6601 = vld [vmem:[#allocation3 + $0x1e8] sm:$0xff]
        %v6602 = vld [vmem:[#allocation3 + $0x1f0] sm:$0xff]
        %v6603 = vld [vmem:[#allocation3 + $0x1f8] sm:$0xff]
        %6604 = vmatprep.subr.mxu0 0.0
        %6605 = vmatpush1.msra.mxu0 %v6555
        %6606 = vmatprep.subr.mxu0 0.0
        %6607 = vmatpush1.msra.mxu0 %v6554
        %6608 = vmatprep.subr.mxu0 0.0
        %6609 = vmatpush1.msra.mxu0 %v6553
        %6610 = vmatprep.subr.mxu0 0.0
        %6611 = vmatpush1.msra.mxu0 %v6552
        %6612 = vmatprep.subr.mxu0 0.0
        %6613 = vmatpush1.msra.mxu0 %v6551
        %6614 = vmatprep.subr.mxu0 0.0
        %6615 = vmatpush1.msra.mxu0 %v6550
        %6616 = vmatprep.subr.mxu0 0.0
        %6617 = vmatpush1.msra.mxu0 %v6549
        %6618 = vmatprep.subr.mxu0 0.0
        %6619 = vmatpush1.msra.mxu0 %v6548
        %6620 = vmatprep.subr.mxu0 0.0
        %6621 = vmatpush1.msra.mxu0 %v6547
        %6622 = vmatprep.subr.mxu0 0.0
        %6623 = vmatpush1.msra.mxu0 %v6546
        %6624 = vmatprep.subr.mxu0 0.0
        %6625 = vmatpush1.msra.mxu0 %v6545
        %6626 = vmatprep.subr.mxu0 0.0
        %6627 = vmatpush1.msra.mxu0 %v6544
        %6628 = vmatprep.subr.mxu0 0.0
        %6629 = vmatpush1.msra.mxu0 %v6543
        %6630 = vmatprep.subr.mxu0 0.0
        %6631 = vmatpush1.msra.mxu0 %v6542
        %6632 = vmatprep.subr.mxu0 0.0
        %6633 = vmatpush1.msra.mxu0 %v6541
        %6634 = vmatprep.subr.mxu0 0.0
        %6635 = vmatpush1.msra.mxu0 %v6540
        %6636 = vmatprep.subr.mxu0 0.0
        %6637 = vmatpush2.msra.mxu0 0.0
        %6638 = vmatprep.subr.mxu0 0.0
        %6639 = vmatpush2.msra.mxu0 0.0
        %6640 = vmatprep.subr.mxu0 0.0
        %6641 = vmatpush2.msra.mxu0 0.0
        %6642 = vmatprep.subr.mxu0 0.0
        %6643 = vmatpush2.msra.mxu0 0.0
        %6644 = vmatprep.subr.mxu0 0.0
        %6645 = vmatpush2.msra.mxu0 0.0
        %6646 = vmatprep.subr.mxu0 0.0
        %6647 = vmatpush2.msra.mxu0 0.0
        %6648 = vmatprep.subr.mxu0 0.0
        %6649 = vmatpush2.msra.mxu0 0.0
        %6650 = vmatprep.subr.mxu0 0.0
        %6651 = vmatpush2.msra.mxu0 0.0
        %6652 = vmatprep.subr.mxu0 0.0
        %6653 = vmatpush2.msra.mxu0 0.0
        %6654 = vmatprep.subr.mxu0 0.0
        %6655 = vmatpush2.msra.mxu0 0.0
        %6656 = vmatprep.subr.mxu0 0.0
        %6657 = vmatpush2.msra.mxu0 0.0
        %6658 = vmatprep.subr.mxu0 0.0
        %6659 = vmatpush2.msra.mxu0 0.0
        %6660 = vmatprep.subr.mxu0 0.0
        %6661 = vmatpush2.msra.mxu0 0.0
        %6662 = vmatprep.subr.mxu0 0.0
        %6663 = vmatpush2.msra.mxu0 0.0
        %6664 = vmatprep.subr.mxu0 0.0
        %6665 = vmatpush2.msra.mxu0 0.0
        %6666 = vmatprep.subr.mxu0 0.0
        %6667 = vmatpush2.msra.mxu0 0.0
        %6668 = vmatprep.mubr.f32.mxu0 0.0
        %6669 = vmatmul.mubr.f32.gmra.mxu0 %v6532
        %v6670 = vpop.f32.mrf.mxu0
        %v6671 = vadd.f32 0.0, %v6670
        %v6672 = vpop.f32.mrf.mxu0
        %6673 = vmatprep.mubr.f32.mxu0 0.0
        %6674 = vmatmul.mubr.f32.gmra.mxu0 %v6533
        %v6675 = vpop.f32.mrf.mxu0
        %v6676 = vadd.f32 0.0, %v6675
        %v6677 = vpop.f32.mrf.mxu0
        %6678 = vdwg.mxu0
        %6679 = vmatprep.subr.mxu0 0.0
        %6680 = vmatpush1.msra.mxu0 %v6571
        %6681 = vmatprep.subr.mxu0 0.0
        %6682 = vmatpush1.msra.mxu0 %v6570
        %6683 = vmatprep.subr.mxu0 0.0
        %6684 = vmatpush1.msra.mxu0 %v6569
        %6685 = vmatprep.subr.mxu0 0.0
        %6686 = vmatpush1.msra.mxu0 %v6568
        %6687 = vmatprep.subr.mxu0 0.0
        %6688 = vmatpush1.msra.mxu0 %v6567
        %6689 = vmatprep.subr.mxu0 0.0
        %6690 = vmatpush1.msra.mxu0 %v6566
        %6691 = vmatprep.subr.mxu0 0.0
        %6692 = vmatpush1.msra.mxu0 %v6565
        %6693 = vmatprep.subr.mxu0 0.0
        %6694 = vmatpush1.msra.mxu0 %v6564
        %6695 = vmatprep.subr.mxu0 0.0
        %6696 = vmatpush1.msra.mxu0 %v6563
        %6697 = vmatprep.subr.mxu0 0.0
        %6698 = vmatpush1.msra.mxu0 %v6562
        %6699 = vmatprep.subr.mxu0 0.0
        %6700 = vmatpush1.msra.mxu0 %v6561
        %6701 = vmatprep.subr.mxu0 0.0
        %6702 = vmatpush1.msra.mxu0 %v6560
        %6703 = vmatprep.subr.mxu0 0.0
        %6704 = vmatpush1.msra.mxu0 %v6559
        %6705 = vmatprep.subr.mxu0 0.0
        %6706 = vmatpush1.msra.mxu0 %v6558
        %6707 = vmatprep.subr.mxu0 0.0
        %6708 = vmatpush1.msra.mxu0 %v6557
        %6709 = vmatprep.subr.mxu0 0.0
        %6710 = vmatpush1.msra.mxu0 %v6556
        %6711 = vmatprep.subr.mxu0 0.0
        %6712 = vmatpush2.msra.mxu0 0.0
        %6713 = vmatprep.subr.mxu0 0.0
        %6714 = vmatpush2.msra.mxu0 0.0
        %6715 = vmatprep.subr.mxu0 0.0
        %6716 = vmatpush2.msra.mxu0 0.0
        %6717 = vmatprep.subr.mxu0 0.0
        %6718 = vmatpush2.msra.mxu0 0.0
        %6719 = vmatprep.subr.mxu0 0.0
        %6720 = vmatpush2.msra.mxu0 0.0
        %6721 = vmatprep.subr.mxu0 0.0
        %6722 = vmatpush2.msra.mxu0 0.0
        %6723 = vmatprep.subr.mxu0 0.0
        %6724 = vmatpush2.msra.mxu0 0.0
        %6725 = vmatprep.subr.mxu0 0.0
        %6726 = vmatpush2.msra.mxu0 0.0
        %6727 = vmatprep.subr.mxu0 0.0
        %6728 = vmatpush2.msra.mxu0 0.0
        %6729 = vmatprep.subr.mxu0 0.0
        %6730 = vmatpush2.msra.mxu0 0.0
        %6731 = vmatprep.subr.mxu0 0.0
        %6732 = vmatpush2.msra.mxu0 0.0
        %6733 = vmatprep.subr.mxu0 0.0
        %6734 = vmatpush2.msra.mxu0 0.0
        %6735 = vmatprep.subr.mxu0 0.0
        %6736 = vmatpush2.msra.mxu0 0.0
        %6737 = vmatprep.subr.mxu0 0.0
        %6738 = vmatpush2.msra.mxu0 0.0
        %6739 = vmatprep.subr.mxu0 0.0
        %6740 = vmatpush2.msra.mxu0 0.0
        %6741 = vmatprep.subr.mxu0 0.0
        %6742 = vmatpush2.msra.mxu0 0.0
        %6743 = vmatprep.mubr.f32.mxu0 0.0
        %6744 = vmatmul.mubr.f32.gmra.mxu0 %v6534
        %v6745 = vpop.f32.mrf.mxu0
        %v6746 = vadd.f32 0.0, %v6745
        %v6747 = vpop.f32.mrf.mxu0
        %6748 = vmatprep.mubr.f32.mxu0 0.0
        %6749 = vmatmul.mubr.f32.gmra.mxu0 %v6535
        %v6750 = vpop.f32.mrf.mxu0
        %v6751 = vadd.f32 0.0, %v6750
        %v6752 = vpop.f32.mrf.mxu0
        %6753 = vdwg.mxu0
        %6754 = vmatprep.subr.mxu0 0.0
        %6755 = vmatpush1.msra.mxu0 %v6587
        %6756 = vmatprep.subr.mxu0 0.0
        %6757 = vmatpush1.msra.mxu0 %v6586
        %6758 = vmatprep.subr.mxu0 0.0
        %6759 = vmatpush1.msra.mxu0 %v6585
        %6760 = vmatprep.subr.mxu0 0.0
        %6761 = vmatpush1.msra.mxu0 %v6584
        %6762 = vmatprep.subr.mxu0 0.0
        %6763 = vmatpush1.msra.mxu0 %v6583
        %6764 = vmatprep.subr.mxu0 0.0
        %6765 = vmatpush1.msra.mxu0 %v6582
        %6766 = vmatprep.subr.mxu0 0.0
        %6767 = vmatpush1.msra.mxu0 %v6581
        %6768 = vmatprep.subr.mxu0 0.0
        %6769 = vmatpush1.msra.mxu0 %v6580
        %6770 = vmatprep.subr.mxu0 0.0
        %6771 = vmatpush1.msra.mxu0 %v6579
        %6772 = vmatprep.subr.mxu0 0.0
        %6773 = vmatpush1.msra.mxu0 %v6578
        %6774 = vmatprep.subr.mxu0 0.0
        %6775 = vmatpush1.msra.mxu0 %v6577
        %6776 = vmatprep.subr.mxu0 0.0
        %6777 = vmatpush1.msra.mxu0 %v6576
        %6778 = vmatprep.subr.mxu0 0.0
        %6779 = vmatpush1.msra.mxu0 %v6575
        %6780 = vmatprep.subr.mxu0 0.0
        %6781 = vmatpush1.msra.mxu0 %v6574
        %6782 = vmatprep.subr.mxu0 0.0
        %6783 = vmatpush1.msra.mxu0 %v6573
        %6784 = vmatprep.subr.mxu0 0.0
        %6785 = vmatpush1.msra.mxu0 %v6572
        %6786 = vmatprep.subr.mxu0 0.0
        %6787 = vmatpush2.msra.mxu0 0.0
        %6788 = vmatprep.subr.mxu0 0.0
        %6789 = vmatpush2.msra.mxu0 0.0
        %6790 = vmatprep.subr.mxu0 0.0
        %6791 = vmatpush2.msra.mxu0 0.0
        %6792 = vmatprep.subr.mxu0 0.0
        %6793 = vmatpush2.msra.mxu0 0.0
        %6794 = vmatprep.subr.mxu0 0.0
        %6795 = vmatpush2.msra.mxu0 0.0
        %6796 = vmatprep.subr.mxu0 0.0
        %6797 = vmatpush2.msra.mxu0 0.0
        %6798 = vmatprep.subr.mxu0 0.0
        %6799 = vmatpush2.msra.mxu0 0.0
        %6800 = vmatprep.subr.mxu0 0.0
        %6801 = vmatpush2.msra.mxu0 0.0
        %6802 = vmatprep.subr.mxu0 0.0
        %6803 = vmatpush2.msra.mxu0 0.0
        %6804 = vmatprep.subr.mxu0 0.0
        %6805 = vmatpush2.msra.mxu0 0.0
        %6806 = vmatprep.subr.mxu0 0.0
        %6807 = vmatpush2.msra.mxu0 0.0
        %6808 = vmatprep.subr.mxu0 0.0
        %6809 = vmatpush2.msra.mxu0 0.0
        %6810 = vmatprep.subr.mxu0 0.0
        %6811 = vmatpush2.msra.mxu0 0.0
        %6812 = vmatprep.subr.mxu0 0.0
        %6813 = vmatpush2.msra.mxu0 0.0
        %6814 = vmatprep.subr.mxu0 0.0
        %6815 = vmatpush2.msra.mxu0 0.0
        %6816 = vmatprep.subr.mxu0 0.0
        %6817 = vmatpush2.msra.mxu0 0.0
        %6818 = vmatprep.mubr.f32.mxu0 0.0
        %6819 = vmatmul.mubr.f32.gmra.mxu0 %v6536
        %v6820 = vpop.f32.mrf.mxu0
        %v6821 = vadd.f32 0.0, %v6820
        %v6822 = vpop.f32.mrf.mxu0
        %6823 = vmatprep.mubr.f32.mxu0 0.0
        %6824 = vmatmul.mubr.f32.gmra.mxu0 %v6537
        %v6825 = vpop.f32.mrf.mxu0
        %v6826 = vadd.f32 0.0, %v6825
        %v6827 = vpop.f32.mrf.mxu0
        %6828 = vdwg.mxu0
        %6829 = vmatprep.subr.mxu0 0.0
        %6830 = vmatpush1.msra.mxu0 %v6603
        %6831 = vmatprep.subr.mxu0 0.0
        %6832 = vmatpush1.msra.mxu0 %v6602
        %6833 = vmatprep.subr.mxu0 0.0
        %6834 = vmatpush1.msra.mxu0 %v6601
        %6835 = vmatprep.subr.mxu0 0.0
        %6836 = vmatpush1.msra.mxu0 %v6600
        %6837 = vmatprep.subr.mxu0 0.0
        %6838 = vmatpush1.msra.mxu0 %v6599
        %6839 = vmatprep.subr.mxu0 0.0
        %6840 = vmatpush1.msra.mxu0 %v6598
        %6841 = vmatprep.subr.mxu0 0.0
        %6842 = vmatpush1.msra.mxu0 %v6597
        %6843 = vmatprep.subr.mxu0 0.0
        %6844 = vmatpush1.msra.mxu0 %v6596
        %6845 = vmatprep.subr.mxu0 0.0
        %6846 = vmatpush1.msra.mxu0 %v6595
        %6847 = vmatprep.subr.mxu0 0.0
        %6848 = vmatpush1.msra.mxu0 %v6594
        %6849 = vmatprep.subr.mxu0 0.0
        %6850 = vmatpush1.msra.mxu0 %v6593
        %6851 = vmatprep.subr.mxu0 0.0
        %6852 = vmatpush1.msra.mxu0 %v6592
        %6853 = vmatprep.subr.mxu0 0.0
        %6854 = vmatpush1.msra.mxu0 %v6591
        %6855 = vmatprep.subr.mxu0 0.0
        %6856 = vmatpush1.msra.mxu0 %v6590
        %6857 = vmatprep.subr.mxu0 0.0
        %6858 = vmatpush1.msra.mxu0 %v6589
        %6859 = vmatprep.subr.mxu0 0.0
        %6860 = vmatpush1.msra.mxu0 %v6588
        %6861 = vmatprep.subr.mxu0 0.0
        %6862 = vmatpush2.msra.mxu0 0.0
        %6863 = vmatprep.subr.mxu0 0.0
        %6864 = vmatpush2.msra.mxu0 0.0
        %6865 = vmatprep.subr.mxu0 0.0
        %6866 = vmatpush2.msra.mxu0 0.0
        %6867 = vmatprep.subr.mxu0 0.0
        %6868 = vmatpush2.msra.mxu0 0.0
        %6869 = vmatprep.subr.mxu0 0.0
        %6870 = vmatpush2.msra.mxu0 0.0
        %6871 = vmatprep.subr.mxu0 0.0
        %6872 = vmatpush2.msra.mxu0 0.0
        %6873 = vmatprep.subr.mxu0 0.0
        %6874 = vmatpush2.msra.mxu0 0.0
        %6875 = vmatprep.subr.mxu0 0.0
        %6876 = vmatpush2.msra.mxu0 0.0
        %6877 = vmatprep.subr.mxu0 0.0
        %6878 = vmatpush2.msra.mxu0 0.0
        %6879 = vmatprep.subr.mxu0 0.0
        %6880 = vmatpush2.msra.mxu0 0.0
        %6881 = vmatprep.subr.mxu0 0.0
        %6882 = vmatpush2.msra.mxu0 0.0
        %6883 = vmatprep.subr.mxu0 0.0
        %6884 = vmatpush2.msra.mxu0 0.0
        %6885 = vmatprep.subr.mxu0 0.0
        %6886 = vmatpush2.msra.mxu0 0.0
        %6887 = vmatprep.subr.mxu0 0.0
        %6888 = vmatpush2.msra.mxu0 0.0
        %6889 = vmatprep.subr.mxu0 0.0
        %6890 = vmatpush2.msra.mxu0 0.0
        %6891 = vmatprep.subr.mxu0 0.0
        %6892 = vmatpush2.msra.mxu0 0.0
        %6893 = vmatprep.mubr.f32.mxu0 0.0
        %6894 = vmatmul.mubr.f32.gmra.mxu0 %v6538
        %v6895 = vpop.f32.mrf.mxu0
        %v6896 = vadd.f32 0.0, %v6895
        %v6897 = vpop.f32.mrf.mxu0
        %6898 = vmatprep.mubr.f32.mxu0 0.0
        %6899 = vmatmul.mubr.f32.gmra.mxu0 %v6539
        %v6900 = vpop.f32.mrf.mxu0
        %v6901 = vadd.f32 0.0, %v6900
        %v6902 = vpop.f32.mrf.mxu0
        %6903 = vdwg.mxu0
        %v6904 = vld [vmem:[%s5] sm:$0xff]
        %v6905 = vld [vmem:[%s5 + $0x8] sm:$0xff]
        %v6906 = vld [vmem:[%s5 + $0x10] sm:$0xff]
        %v6907 = vld [vmem:[%s5 + $0x18] sm:$0xff]
        %v6908 = vld [vmem:[%s5 + $0x20] sm:$0xff]
        %v6909 = vld [vmem:[%s5 + $0x28] sm:$0xff]
        %v6910 = vld [vmem:[%s5 + $0x30] sm:$0xff]
        %v6911 = vld [vmem:[%s5 + $0x38] sm:$0xff]
        %v6913 = vsel %vm5940, %v6671, 0
        %v6916 = vsel %vm5940, %v6676, 0
        %6918 = vmatprep.subr.mxu0 0.0
        %6919 = vmatpush1.msra.mxu0 0.0
        %6920 = vmatprep.subr.mxu0 0.0
        %6921 = vmatpush1.msra.mxu0 0.0
        %6922 = vmatprep.subr.mxu0 0.0
        %6923 = vmatpush1.msra.mxu0 0.0
        %6924 = vmatprep.subr.mxu0 0.0
        %6925 = vmatpush1.msra.mxu0 0.0
        %6926 = vmatprep.subr.mxu0 0.0
        %6927 = vmatpush1.msra.mxu0 0.0
        %6928 = vmatprep.subr.mxu0 0.0
        %6929 = vmatpush1.msra.mxu0 0.0
        %6930 = vmatprep.subr.mxu0 0.0
        %6931 = vmatpush1.msra.mxu0 0.0
        %6932 = vmatprep.subr.mxu0 0.0
        %6933 = vmatpush1.msra.mxu0 0.0
        %6934 = vmatprep.subr.mxu0 0.0
        %6935 = vmatpush1.msra.mxu0 0.0
        %6936 = vmatprep.subr.mxu0 0.0
        %6937 = vmatpush1.msra.mxu0 0.0
        %6938 = vmatprep.subr.mxu0 0.0
        %6939 = vmatpush1.msra.mxu0 0.0
        %6940 = vmatprep.subr.mxu0 0.0
        %6941 = vmatpush1.msra.mxu0 0.0
        %6942 = vmatprep.subr.mxu0 0.0
        %6943 = vmatpush1.msra.mxu0 0.0
        %6944 = vmatprep.subr.mxu0 0.0
        %6945 = vmatpush1.msra.mxu0 0.0
        %6946 = vmatprep.subr.mxu0 0.0
        %6947 = vmatpush1.msra.mxu0 %v6905
        %6948 = vmatprep.subr.mxu0 0.0
        %6949 = vmatpush1.msra.mxu0 %v6904
        %6950 = vmatprep.subr.mxu0 0.0
        %6951 = vmatpush2.msra.mxu0 0.0
        %6952 = vmatprep.subr.mxu0 0.0
        %6953 = vmatpush2.msra.mxu0 0.0
        %6954 = vmatprep.subr.mxu0 0.0
        %6955 = vmatpush2.msra.mxu0 0.0
        %6956 = vmatprep.subr.mxu0 0.0
        %6957 = vmatpush2.msra.mxu0 0.0
        %6958 = vmatprep.subr.mxu0 0.0
        %6959 = vmatpush2.msra.mxu0 0.0
        %6960 = vmatprep.subr.mxu0 0.0
        %6961 = vmatpush2.msra.mxu0 0.0
        %6962 = vmatprep.subr.mxu0 0.0
        %6963 = vmatpush2.msra.mxu0 0.0
        %6964 = vmatprep.subr.mxu0 0.0
        %6965 = vmatpush2.msra.mxu0 0.0
        %6966 = vmatprep.subr.mxu0 0.0
        %6967 = vmatpush2.msra.mxu0 0.0
        %6968 = vmatprep.subr.mxu0 0.0
        %6969 = vmatpush2.msra.mxu0 0.0
        %6970 = vmatprep.subr.mxu0 0.0
        %6971 = vmatpush2.msra.mxu0 0.0
        %6972 = vmatprep.subr.mxu0 0.0
        %6973 = vmatpush2.msra.mxu0 0.0
        %6974 = vmatprep.subr.mxu0 0.0
        %6975 = vmatpush2.msra.mxu0 0.0
        %6976 = vmatprep.subr.mxu0 0.0
        %6977 = vmatpush2.msra.mxu0 0.0
        %6978 = vmatprep.subr.mxu0 0.0
        %6979 = vmatpush2.msra.mxu0 0.0
        %6980 = vmatprep.subr.mxu0 0.0
        %6981 = vmatpush2.msra.mxu0 0.0
        %6982 = vmatprep.mubr.f32.mxu0 0.0
        %6983 = vmatmul.mubr.f32.gmra.mxu0 %v6913
        %v6984 = vpop.f32.mrf.mxu0
        %v6985 = vadd.f32 0.0, %v6984
        %v6986 = vpop.f32.mrf.mxu0
        %6987 = vmatprep.mubr.f32.mxu0 0.0
        %6988 = vmatmul.mubr.f32.gmra.mxu0 %v6916
        %v6989 = vpop.f32.mrf.mxu0
        %v6990 = vadd.f32 0.0, %v6989
        %v6991 = vpop.f32.mrf.mxu0
        %6992 = vdwg.mxu0
        %v6994 = vsel %vm5940, %v6746, 0
        %v6997 = vsel %vm5940, %v6751, 0
        %6999 = vmatprep.subr.mxu0 0.0
        %7000 = vmatpush1.msra.mxu0 0.0
        %7001 = vmatprep.subr.mxu0 0.0
        %7002 = vmatpush1.msra.mxu0 0.0
        %7003 = vmatprep.subr.mxu0 0.0
        %7004 = vmatpush1.msra.mxu0 0.0
        %7005 = vmatprep.subr.mxu0 0.0
        %7006 = vmatpush1.msra.mxu0 0.0
        %7007 = vmatprep.subr.mxu0 0.0
        %7008 = vmatpush1.msra.mxu0 0.0
        %7009 = vmatprep.subr.mxu0 0.0
        %7010 = vmatpush1.msra.mxu0 0.0
        %7011 = vmatprep.subr.mxu0 0.0
        %7012 = vmatpush1.msra.mxu0 0.0
        %7013 = vmatprep.subr.mxu0 0.0
        %7014 = vmatpush1.msra.mxu0 0.0
        %7015 = vmatprep.subr.mxu0 0.0
        %7016 = vmatpush1.msra.mxu0 0.0
        %7017 = vmatprep.subr.mxu0 0.0
        %7018 = vmatpush1.msra.mxu0 0.0
        %7019 = vmatprep.subr.mxu0 0.0
        %7020 = vmatpush1.msra.mxu0 0.0
        %7021 = vmatprep.subr.mxu0 0.0
        %7022 = vmatpush1.msra.mxu0 0.0
        %7023 = vmatprep.subr.mxu0 0.0
        %7024 = vmatpush1.msra.mxu0 0.0
        %7025 = vmatprep.subr.mxu0 0.0
        %7026 = vmatpush1.msra.mxu0 0.0
        %7027 = vmatprep.subr.mxu0 0.0
        %7028 = vmatpush1.msra.mxu0 %v6907
        %7029 = vmatprep.subr.mxu0 0.0
        %7030 = vmatpush1.msra.mxu0 %v6906
        %7031 = vmatprep.subr.mxu0 0.0
        %7032 = vmatpush2.msra.mxu0 0.0
        %7033 = vmatprep.subr.mxu0 0.0
        %7034 = vmatpush2.msra.mxu0 0.0
        %7035 = vmatprep.subr.mxu0 0.0
        %7036 = vmatpush2.msra.mxu0 0.0
        %7037 = vmatprep.subr.mxu0 0.0
        %7038 = vmatpush2.msra.mxu0 0.0
        %7039 = vmatprep.subr.mxu0 0.0
        %7040 = vmatpush2.msra.mxu0 0.0
        %7041 = vmatprep.subr.mxu0 0.0
        %7042 = vmatpush2.msra.mxu0 0.0
        %7043 = vmatprep.subr.mxu0 0.0
        %7044 = vmatpush2.msra.mxu0 0.0
        %7045 = vmatprep.subr.mxu0 0.0
        %7046 = vmatpush2.msra.mxu0 0.0
        %7047 = vmatprep.subr.mxu0 0.0
        %7048 = vmatpush2.msra.mxu0 0.0
        %7049 = vmatprep.subr.mxu0 0.0
        %7050 = vmatpush2.msra.mxu0 0.0
        %7051 = vmatprep.subr.mxu0 0.0
        %7052 = vmatpush2.msra.mxu0 0.0
        %7053 = vmatprep.subr.mxu0 0.0
        %7054 = vmatpush2.msra.mxu0 0.0
        %7055 = vmatprep.subr.mxu0 0.0
        %7056 = vmatpush2.msra.mxu0 0.0
        %7057 = vmatprep.subr.mxu0 0.0
        %7058 = vmatpush2.msra.mxu0 0.0
        %7059 = vmatprep.subr.mxu0 0.0
        %7060 = vmatpush2.msra.mxu0 0.0
        %7061 = vmatprep.subr.mxu0 0.0
        %7062 = vmatpush2.msra.mxu0 0.0
        %7063 = vmatprep.mubr.f32.mxu0 0.0
        %7064 = vmatmul.mubr.f32.gmra.mxu0 %v6994
        %v7065 = vpop.f32.mrf.mxu0
        %v7066 = vadd.f32 0.0, %v7065
        %v7067 = vpop.f32.mrf.mxu0
        %7068 = vmatprep.mubr.f32.mxu0 0.0
        %7069 = vmatmul.mubr.f32.gmra.mxu0 %v6997
        %v7070 = vpop.f32.mrf.mxu0
        %v7071 = vadd.f32 0.0, %v7070
        %v7072 = vpop.f32.mrf.mxu0
        %7073 = vdwg.mxu0
        %v7075 = vsel %vm5940, %v6821, 0
        %v7078 = vsel %vm5940, %v6826, 0
        %7080 = vmatprep.subr.mxu0 0.0
        %7081 = vmatpush1.msra.mxu0 0.0
        %7082 = vmatprep.subr.mxu0 0.0
        %7083 = vmatpush1.msra.mxu0 0.0
        %7084 = vmatprep.subr.mxu0 0.0
        %7085 = vmatpush1.msra.mxu0 0.0
        %7086 = vmatprep.subr.mxu0 0.0
        %7087 = vmatpush1.msra.mxu0 0.0
        %7088 = vmatprep.subr.mxu0 0.0
        %7089 = vmatpush1.msra.mxu0 0.0
        %7090 = vmatprep.subr.mxu0 0.0
        %7091 = vmatpush1.msra.mxu0 0.0
        %7092 = vmatprep.subr.mxu0 0.0
        %7093 = vmatpush1.msra.mxu0 0.0
        %7094 = vmatprep.subr.mxu0 0.0
        %7095 = vmatpush1.msra.mxu0 0.0
        %7096 = vmatprep.subr.mxu0 0.0
        %7097 = vmatpush1.msra.mxu0 0.0
        %7098 = vmatprep.subr.mxu0 0.0
        %7099 = vmatpush1.msra.mxu0 0.0
        %7100 = vmatprep.subr.mxu0 0.0
        %7101 = vmatpush1.msra.mxu0 0.0
        %7102 = vmatprep.subr.mxu0 0.0
        %7103 = vmatpush1.msra.mxu0 0.0
        %7104 = vmatprep.subr.mxu0 0.0
        %7105 = vmatpush1.msra.mxu0 0.0
        %7106 = vmatprep.subr.mxu0 0.0
        %7107 = vmatpush1.msra.mxu0 0.0
        %7108 = vmatprep.subr.mxu0 0.0
        %7109 = vmatpush1.msra.mxu0 %v6909
        %7110 = vmatprep.subr.mxu0 0.0
        %7111 = vmatpush1.msra.mxu0 %v6908
        %7112 = vmatprep.subr.mxu0 0.0
        %7113 = vmatpush2.msra.mxu0 0.0
        %7114 = vmatprep.subr.mxu0 0.0
        %7115 = vmatpush2.msra.mxu0 0.0
        %7116 = vmatprep.subr.mxu0 0.0
        %7117 = vmatpush2.msra.mxu0 0.0
        %7118 = vmatprep.subr.mxu0 0.0
        %7119 = vmatpush2.msra.mxu0 0.0
        %7120 = vmatprep.subr.mxu0 0.0
        %7121 = vmatpush2.msra.mxu0 0.0
        %7122 = vmatprep.subr.mxu0 0.0
        %7123 = vmatpush2.msra.mxu0 0.0
        %7124 = vmatprep.subr.mxu0 0.0
        %7125 = vmatpush2.msra.mxu0 0.0
        %7126 = vmatprep.subr.mxu0 0.0
        %7127 = vmatpush2.msra.mxu0 0.0
        %7128 = vmatprep.subr.mxu0 0.0
        %7129 = vmatpush2.msra.mxu0 0.0
        %7130 = vmatprep.subr.mxu0 0.0
        %7131 = vmatpush2.msra.mxu0 0.0
        %7132 = vmatprep.subr.mxu0 0.0
        %7133 = vmatpush2.msra.mxu0 0.0
        %7134 = vmatprep.subr.mxu0 0.0
        %7135 = vmatpush2.msra.mxu0 0.0
        %7136 = vmatprep.subr.mxu0 0.0
        %7137 = vmatpush2.msra.mxu0 0.0
        %7138 = vmatprep.subr.mxu0 0.0
        %7139 = vmatpush2.msra.mxu0 0.0
        %7140 = vmatprep.subr.mxu0 0.0
        %7141 = vmatpush2.msra.mxu0 0.0
        %7142 = vmatprep.subr.mxu0 0.0
        %7143 = vmatpush2.msra.mxu0 0.0
        %7144 = vmatprep.mubr.f32.mxu0 0.0
        %7145 = vmatmul.mubr.f32.gmra.mxu0 %v7075
        %v7146 = vpop.f32.mrf.mxu0
        %v7147 = vadd.f32 0.0, %v7146
        %v7148 = vpop.f32.mrf.mxu0
        %7149 = vmatprep.mubr.f32.mxu0 0.0
        %7150 = vmatmul.mubr.f32.gmra.mxu0 %v7078
        %v7151 = vpop.f32.mrf.mxu0
        %v7152 = vadd.f32 0.0, %v7151
        %v7153 = vpop.f32.mrf.mxu0
        %7154 = vdwg.mxu0
        %v7156 = vsel %vm5940, %v6896, 0
        %v7159 = vsel %vm5940, %v6901, 0
        %7161 = vmatprep.subr.mxu0 0.0
        %7162 = vmatpush1.msra.mxu0 0.0
        %7163 = vmatprep.subr.mxu0 0.0
        %7164 = vmatpush1.msra.mxu0 0.0
        %7165 = vmatprep.subr.mxu0 0.0
        %7166 = vmatpush1.msra.mxu0 0.0
        %7167 = vmatprep.subr.mxu0 0.0
        %7168 = vmatpush1.msra.mxu0 0.0
        %7169 = vmatprep.subr.mxu0 0.0
        %7170 = vmatpush1.msra.mxu0 0.0
        %7171 = vmatprep.subr.mxu0 0.0
        %7172 = vmatpush1.msra.mxu0 0.0
        %7173 = vmatprep.subr.mxu0 0.0
        %7174 = vmatpush1.msra.mxu0 0.0
        %7175 = vmatprep.subr.mxu0 0.0
        %7176 = vmatpush1.msra.mxu0 0.0
        %7177 = vmatprep.subr.mxu0 0.0
        %7178 = vmatpush1.msra.mxu0 0.0
        %7179 = vmatprep.subr.mxu0 0.0
        %7180 = vmatpush1.msra.mxu0 0.0
        %7181 = vmatprep.subr.mxu0 0.0
        %7182 = vmatpush1.msra.mxu0 0.0
        %7183 = vmatprep.subr.mxu0 0.0
        %7184 = vmatpush1.msra.mxu0 0.0
        %7185 = vmatprep.subr.mxu0 0.0
        %7186 = vmatpush1.msra.mxu0 0.0
        %7187 = vmatprep.subr.mxu0 0.0
        %7188 = vmatpush1.msra.mxu0 0.0
        %7189 = vmatprep.subr.mxu0 0.0
        %7190 = vmatpush1.msra.mxu0 %v6911
        %7191 = vmatprep.subr.mxu0 0.0
        %7192 = vmatpush1.msra.mxu0 %v6910
        %7193 = vmatprep.subr.mxu0 0.0
        %7194 = vmatpush2.msra.mxu0 0.0
        %7195 = vmatprep.subr.mxu0 0.0
        %7196 = vmatpush2.msra.mxu0 0.0
        %7197 = vmatprep.subr.mxu0 0.0
        %7198 = vmatpush2.msra.mxu0 0.0
        %7199 = vmatprep.subr.mxu0 0.0
        %7200 = vmatpush2.msra.mxu0 0.0
        %7201 = vmatprep.subr.mxu0 0.0
        %7202 = vmatpush2.msra.mxu0 0.0
        %7203 = vmatprep.subr.mxu0 0.0
        %7204 = vmatpush2.msra.mxu0 0.0
        %7205 = vmatprep.subr.mxu0 0.0
        %7206 = vmatpush2.msra.mxu0 0.0
        %7207 = vmatprep.subr.mxu0 0.0
        %7208 = vmatpush2.msra.mxu0 0.0
        %7209 = vmatprep.subr.mxu0 0.0
        %7210 = vmatpush2.msra.mxu0 0.0
        %7211 = vmatprep.subr.mxu0 0.0
        %7212 = vmatpush2.msra.mxu0 0.0
        %7213 = vmatprep.subr.mxu0 0.0
        %7214 = vmatpush2.msra.mxu0 0.0
        %7215 = vmatprep.subr.mxu0 0.0
        %7216 = vmatpush2.msra.mxu0 0.0
        %7217 = vmatprep.subr.mxu0 0.0
        %7218 = vmatpush2.msra.mxu0 0.0
        %7219 = vmatprep.subr.mxu0 0.0
        %7220 = vmatpush2.msra.mxu0 0.0
        %7221 = vmatprep.subr.mxu0 0.0
        %7222 = vmatpush2.msra.mxu0 0.0
        %7223 = vmatprep.subr.mxu0 0.0
        %7224 = vmatpush2.msra.mxu0 0.0
        %7225 = vmatprep.mubr.f32.mxu0 0.0
        %7226 = vmatmul.mubr.f32.gmra.mxu0 %v7156
        %v7227 = vpop.f32.mrf.mxu0
        %v7228 = vadd.f32 0.0, %v7227
        %v7229 = vpop.f32.mrf.mxu0
        %7230 = vmatprep.mubr.f32.mxu0 0.0
        %7231 = vmatmul.mubr.f32.gmra.mxu0 %v7159
        %v7232 = vpop.f32.mrf.mxu0
        %v7233 = vadd.f32 0.0, %v7232
        %v7234 = vpop.f32.mrf.mxu0
        %7235 = vdwg.mxu0
        %v7236 = vsel %vm5502, %v6985, 0.0
        %v7237 = vsel %vm5502, %v7066, 0.0
        %v7238 = vadd.f32 %v7236, %v7237
        %v7239 = vsel %vm5502, %v7147, 0.0
        %v7240 = vadd.f32 %v7238, %v7239
        %v7241 = vsel %vm5502, %v7228, 0.0
        %v7242 = vadd.f32 %v7240, %v7241
        %v7243 = vsel %vm5502, %v6990, 0.0
        %v7244 = vsel %vm5502, %v7071, 0.0
        %v7245 = vadd.f32 %v7243, %v7244
        %v7246 = vsel %vm5502, %v7152, 0.0
        %v7247 = vadd.f32 %v7245, %v7246
        %v7248 = vsel %vm5502, %v7233, 0.0
        %v7249 = vadd.f32 %v7247, %v7248
        %v7250 = vld [vmem:[%s6] sm:$0x1]
        %v7252 = vlaneseq
        %v7253 = vshrl.u32 %v7252, 7
        %v7254 = vsub.s32 0, %v7253
        %v7255 = vrot.slane %v7250, %v7254
        %v7257 = vadd.f32 %v7242, %v7255
        %v7258 = vadd.f32 %v7249, %v7255
        %7259 = vst.msk [vmem:[%s311] sm:$0xff] %vm5502, %v7257
        %7260 = vst.msk [vmem:[%s311 + $0x8] sm:$0xff] %vm5502, %v7258
        %s7261 = sand.u32 %s202, 1
        %s7262 = scalar_lea.sflag [#allocation5], %s7261
        %s7263 = sand.u32 %s202, 1
        %s7264 = smul.addr %s7263, 16
        %s7265 = scalar_lea.vmem [#allocation4], %s7264
        // Predicated region
        $region53: #{tpu_custom_call.1} parent=47 // pred_check
          %p7266 = pneg %p212
        $region54: #{tpu_custom_call.1} parent=47 // pred_check_branch
          %7268 = sbr.rel (%p7266) target = $region56
        $region55: #{tpu_custom_call.1} parent=47 // pred_region
          %s7269 = smul.u32 2, %s26
          %s7271 = ssub.s32 256, 256
          %7272 = vsyncadd %s7262, %s7271
          %s7273 = smul.addr %s25, 2
          %s7274 = sadd.s32 %s7269, %s7273
          %s7275 = smul.addr %s7274, 128
          %s7276 = scalar_lea.hbm %s7, %s7275
          %s7277 = sshll.u32 %s7265, 4
          %s7278 = int_to_ptr.vmem [resolvable:$true] %s7277
          %7283 = dma.vmem_to_hbm [thread:$0]  %s7278, 256, %s7276, %s7262, 128, 128, 8
        $region56: #{tpu_custom_call.1} parent=47 // pred_fallthru
          _
      $region48: #{tpu_custom_call.1} parent=5 // pred_fallthru
        _
      %p7284 = scmp.le.s32.totalorder 2, %s16
      // Predicated region
      $region57: #{tpu_custom_call.1} parent=5 // pred_check
        %p7285 = pneg %p7284
      $region58: #{tpu_custom_call.1} parent=5 // pred_check_branch
        %7287 = sbr.rel (%p7285) target = $region60
      $region59: #{tpu_custom_call.1} parent=5 // pred_region
        %s7288 = ssub.s32 %s16, 2
        // Predicated region
        $region61: #{tpu_custom_call.1} parent=59 // pred_check
          %p7289 = pneg %p218
        $region62: #{tpu_custom_call.1} parent=59 // pred_check_branch
          %7291 = sbr.rel (%p7289) target = $region64
        $region63: #{tpu_custom_call.1} parent=59 // pred_region
          %s7292 = sand.u32 %s203, 1
          %s7293 = scalar_lea.sflag [#allocation5], %s7292
          %s7294 = sand.u32 %s203, 1
          %s7295 = smul.addr %s7294, 16
          %s7296 = scalar_lea.vmem [#allocation4], %s7295
          %7297 = dma.done %s7293, 256
        $region64: #{tpu_custom_call.1} parent=59 // pred_fallthru
          _
      $region60: #{tpu_custom_call.1} parent=5 // pred_fallthru
        _
    $region6: #{tpu_custom_call.1} parent=1 // loop_footer
      %s20 = sadd.s32 1, %s16
    $region7: #{tpu_custom_call.1} parent=1 // loop_footer_branch
      %15 = sbr.rel target = $region3
    $region8: #{tpu_custom_call.1} parent=1 // loop_exit
      _
    %7298 = vsyncpa [#allocation5], 1
    %s7299 = scalar_lea.sflag [#allocation5], 1
    %7300 = vsyncpa %s7299, 1

</llo_original>
